<compile_context>
chip_gen: v6e
topology: v6e:2x2x1
jax: 0.10.0
libtpu: 0.0.40
codegen_flags: <defaults>
</compile_context>

<pallas_src>
import jax
import jax.numpy as jnp
from jax.experimental import pallas as pl
from jax.experimental.pallas import tpu as pltpu


# -----------------------------------------------------------------------------
# Kernel A: column-tiled (B, dim_feat) @ (dim_feat, 128*num_pc) in bf16.
# -----------------------------------------------------------------------------
def _ps_matmul_kernel(feat_ref, w_ref, o_ref):
    o_ref[...] = jnp.dot(feat_ref[...], w_ref[...],
                         preferred_element_type=jnp.float32)


def ps_matmul(feat_bf16, w_bf16, tn_target=4096):
    B, dim_feat = feat_bf16.shape
    cols = w_bf16.shape[1]                 # 128 * num_pc (always a multiple of 128)
    tn = min(tn_target, cols)
    while cols % tn:                       # largest 128-multiple divisor <= target
        tn -= 128
    return pl.pallas_call(
        _ps_matmul_kernel,
        out_shape=jax.ShapeDtypeStruct((B, cols), jnp.float32),
        grid=(cols // tn,),
        in_specs=[
            pl.BlockSpec((B, dim_feat), lambda j: (0, 0)),
            pl.BlockSpec((dim_feat, tn), lambda j: (0, j)),
        ],
        out_specs=pl.BlockSpec((B, tn), lambda j: (0, j)),
        compiler_params=pltpu.CompilerParams(
            dimension_semantics=("parallel",),
            vmem_limit_bytes=48 * 1024 * 1024,   # 2 x dim_feat*tn*2B weight buffers
        ),
    )(feat_bf16, w_bf16)


# -----------------------------------------------------------------------------
# Kernel B: fused mlp_1 / mlp_2 / mlp_3 / mlp_4 / tanh*0.5 chain in NCL layout.
#   Weights are (out_ch, in_ch) bf16; activations are (channels, P_chunk).
#   Hidden & shortcut paths of each MLP_Res share one fused matmul; all
#   post-residual biases are pre-folded outside the kernel.
# -----------------------------------------------------------------------------
MLP_PARAM_ORDER = (
    "w1_xc", "w1_2",
    "w2_c", "b2_c", "w2_2",
    "w3_xc", "w3_2",
    "w4_1", "b4_1", "w4_2", "b4_2",
)


def _seed_mlp_kernel(x1_ref, c1_ref, c3_ref,
                     w1_xc, w1_2,
                     w2_c, b2_c, w2_2,
                     w3_xc, w3_2,
                     w4_1, b4_1, w4_2, b4_2,
                     o_ref):
    x1 = x1_ref[0].astype(jnp.bfloat16)   # (128, TP)  ps output chunk (b_ps -> c1)
    c1 = c1_ref[0]                        # (256, 1)   feat path + biases of mlp_1
    c3 = c3_ref[0]                        # (256, 1)   feat path + biases of mlp_3 (+ b2_2)

    def mm(w_ref, a_bf16):                # bf16 x bf16 -> f32 accumulate
        return jnp.dot(w_ref[...], a_bf16, preferred_element_type=jnp.float32)

    def relu_bf16(z):
        return jnp.maximum(z, 0.0).astype(jnp.bfloat16)

    # mlp_1: MLP_Res(dim_feat+128, 128, 128); fused hidden(0:128)+shortcut(128:256).
    # (b1_2 folded into b2_c outside the kernel.)
    z1 = mm(w1_xc, x1) + c1                                        # (256, TP) f32
    y1 = (mm(w1_2, relu_bf16(z1[:128])) + z1[128:]).astype(jnp.bfloat16)

    # mlp_2: MLP_Res(128, 64, 128); fused hidden(0:64)+shortcut(64:192).
    # (b2_2 folded into c3 outside the kernel.)
    z2 = mm(w2_c, y1) + b2_c[...]                                  # (192, TP) f32
    y2 = (mm(w2_2, relu_bf16(z2[:64])) + z2[64:]).astype(jnp.bfloat16)

    # mlp_3: MLP_Res(dim_feat+128, 128, 128); fused hidden+shortcut.
    # (b3_2 folded into b4_1 outside the kernel.)
    z3 = mm(w3_xc, y2) + c3                                        # (256, TP) f32
    y3 = (mm(w3_2, relu_bf16(z3[:128])) + z3[128:]).astype(jnp.bfloat16)

    # mlp_4: Conv1d(128,64,1) -> ReLU -> Conv1d(64,3,1); tanh * 0.5.
    h4 = relu_bf16(mm(w4_1, y3) + b4_1[...])                       # (64, TP)
    o_ref[0] = jnp.tanh(mm(w4_2, h4) + b4_2[...]) * 0.5            # (3, TP) lane-dense


def _zero_map(ndim):
    return lambda b, p: (0,) * ndim


def seed_mlp(x1, c1, c3, kparams, num_pc):
    B = x1.shape[0]
    tp = 128 if num_pc % 128 == 0 else num_pc     # lane-axis chunk
    plist = [kparams[k] for k in MLP_PARAM_ORDER]
    pspecs = [pl.BlockSpec(p.shape, _zero_map(p.ndim)) for p in plist]
    return pl.pallas_call(
        _seed_mlp_kernel,
        out_shape=jax.ShapeDtypeStruct((B, 3, num_pc), jnp.float32),
        grid=(B, num_pc // tp),
        in_specs=[
            pl.BlockSpec((1, 128, tp), lambda b, p: (b, 0, p)),
            pl.BlockSpec((1, 256, 1), lambda b, p: (b, 0, 0)),
            pl.BlockSpec((1, 256, 1), lambda b, p: (b, 0, 0)),
        ] + pspecs,
        out_specs=pl.BlockSpec((1, 3, tp), lambda b, p: (b, 0, p)),
        compiler_params=pltpu.CompilerParams(
            dimension_semantics=("parallel", "parallel"),
            vmem_limit_bytes=32 * 1024 * 1024,
        ),
    )(x1, c1, c3, *plist)


# -----------------------------------------------------------------------------
# Full forward (glue + kernels).  feat_nc1: (B, dim_feat, 1) -> (B, 3, num_pc).
# -----------------------------------------------------------------------------
def seed_generator_forward(feat_nc1, params, num_pc):
    B, dim_feat, _ = feat_nc1.shape
    f = feat_nc1[:, :, 0]                                         # (B, dim_feat) f32

    # Kernel A: ConvTranspose1d as one bf16 matmul, column-tiled.
    x1_flat = ps_matmul(f.astype(jnp.bfloat16), params["w_ps"])   # (B, 128*num_pc) f32
    x1 = x1_flat.reshape(B, 128, num_pc)                          # channel-major -> NCL

    # Hoisted feat-path projections + bias folds (tiny, plain JAX, exact rewrites):
    #   c1  = W1_feat @ f + b1_c + W1_x @ b_ps        (ConvTranspose bias folded in)
    #   c3  = W3_feat @ f + b3_c + W3_x @ b2_2        (mlp_2 residual bias folded in)
    #   b2_c += W2_c @ b1_2 ; b4_1 += W4_1 @ b3_2
    c1 = f @ params["w1_fc"].T + (params["b1_c"] + params["w1_xc"] @ params["b_ps"]).T
    c3 = f @ params["w3_fc"].T + (params["b3_c"] + params["w3_xc"] @ params["b2_2"]).T
    c1 = c1[:, :, None]                                           # (B, 256, 1)
    c3 = c3[:, :, None]                                           # (B, 256, 1)

    bf = lambda w: w.astype(jnp.bfloat16)
    kparams = {
        "w1_xc": bf(params["w1_xc"]), "w1_2": bf(params["w1_2"]),
        "w2_c": bf(params["w2_c"]),
        "b2_c": params["b2_c"] + params["w2_c"] @ params["b1_2"],
        "w2_2": bf(params["w2_2"]),
        "w3_xc": bf(params["w3_xc"]), "w3_2": bf(params["w3_2"]),
        "w4_1": bf(params["w4_1"]),
        "b4_1": params["b4_1"] + params["w4_1"] @ params["b3_2"],
        "w4_2": bf(params["w4_2"]), "b4_2": params["b4_2"],
    }
    return seed_mlp(x1, c1, c3, kparams, num_pc)                  # (B, 3, num_pc)


# -----------------------------------------------------------------------------
# Deterministic synthetic parameters (shapes follow the PyTorch __init__),
# stored in the fused layout used by the kernels (f32 masters, w_ps bf16).
# -----------------------------------------------------------------------------
def init_params(key, dim_feat, num_pc):
    keys = iter(jax.random.split(key, 48))

    def w(shape, fan_in):
        return jax.random.normal(next(keys), shape, jnp.float32) / jnp.sqrt(fan_in)

    def b(shape):
        return 0.01 * jax.random.normal(next(keys), shape, jnp.float32)

    p = {}
    # ConvTranspose1d(dim_feat, 128, num_pc): torch weight (dim_feat, 128, num_pc),
    # C-order flattened over (out_ch, pos), cast to bf16 (dominant HBM stream).
    p["w_ps"] = w((dim_feat, 128 * num_pc), dim_feat).astype(jnp.bfloat16)
    p["b_ps"] = b((128, 1))

    fan1 = dim_feat + 128
    # mlp_1: hidden conv rows (0:128) stacked over shortcut conv rows (128:256),
    # x-part (acting on x1 channels) and feat-part split.
    p["w1_xc"] = jnp.concatenate([w((128, 128), fan1), w((128, 128), fan1)], axis=0)
    p["w1_fc"] = jnp.concatenate([w((128, dim_feat), fan1), w((128, dim_feat), fan1)], axis=0)
    p["b1_c"] = jnp.concatenate([b((128, 1)), b((128, 1))], axis=0)
    p["w1_2"] = w((128, 128), 128)
    p["b1_2"] = b((128, 1))

    # mlp_2 (in=128, hidden=64, out=128): hidden rows (0:64) over shortcut rows (64:192).
    p["w2_c"] = jnp.concatenate([w((64, 128), 128), w((128, 128), 128)], axis=0)
    p["b2_c"] = jnp.concatenate([b((64, 1)), b((128, 1))], axis=0)
    p["w2_2"] = w((128, 64), 64)
    p["b2_2"] = b((128, 1))

    # mlp_3 (same structure as mlp_1)
    p["w3_xc"] = jnp.concatenate([w((128, 128), fan1), w((128, 128), fan1)], axis=0)
    p["w3_fc"] = jnp.concatenate([w((128, dim_feat), fan1), w((128, dim_feat), fan1)], axis=0)
    p["b3_c"] = jnp.concatenate([b((128, 1)), b((128, 1))], axis=0)
    p["w3_2"] = w((128, 128), 128)
    p["b3_2"] = b((128, 1))

    # mlp_4: Conv1d(128,64,1) -> ReLU -> Conv1d(64,3,1)
    p["w4_1"] = w((64, 128), 128)
    p["b4_1"] = b((64, 1))
    p["w4_2"] = w((3, 64), 64)
    p["b4_2"] = b((3, 1))
    return p


# -----------------------------------------------------------------------------
# Pure-JAX reference (mirrors the PyTorch forward with explicit concat/repeat;
# f32 math except the bf16 ConvTranspose weight / feat cast used by kernel A).
# -----------------------------------------------------------------------------
def reference_forward(feat_nc1, params, num_pc):
    B, dim_feat, _ = feat_nc1.shape
    f = feat_nc1[:, :, 0]                                         # (B, D)
    f_bf = f.astype(jnp.bfloat16).astype(jnp.float32)
    Wps = params["w_ps"].astype(jnp.float32)                      # (D, 128*P)
    x1 = (f_bf @ Wps).reshape(B, 128, num_pc) + params["b_ps"][None]   # ConvTranspose1d
    frep = jnp.broadcast_to(f[:, :, None], (B, dim_feat, num_pc)) # feat.repeat((1,1,P))

    def conv1d(wt, x, bias):  # Conv1d(k=1): (out,in) on (B,in,P)
        return jnp.einsum('oi,bip->bop', wt, x) + bias[None]

    def mlp_res(x, w1, b1, w2, b2, ws, bs):
        sc = conv1d(ws, x, bs)
        return conv1d(w2, jnp.maximum(conv1d(w1, x, b1), 0.0), b2) + sc

    # mlp_1
    w1_h = jnp.concatenate([params["w1_xc"][:128], params["w1_fc"][:128]], axis=1)
    w1_s = jnp.concatenate([params["w1_xc"][128:], params["w1_fc"][128:]], axis=1)
    cat1 = jnp.concatenate([x1, frep], axis=1)
    y1 = mlp_res(cat1, w1_h, params["b1_c"][:128], params["w1_2"], params["b1_2"],
                 w1_s, params["b1_c"][128:])
    # mlp_2
    y2 = mlp_res(y1, params["w2_c"][:64], params["b2_c"][:64], params["w2_2"], params["b2_2"],
                 params["w2_c"][64:], params["b2_c"][64:])
    # mlp_3
    w3_h = jnp.concatenate([params["w3_xc"][:128], params["w3_fc"][:128]], axis=1)
    w3_s = jnp.concatenate([params["w3_xc"][128:], params["w3_fc"][128:]], axis=1)
    cat3 = jnp.concatenate([y2, frep], axis=1)
    y3 = mlp_res(cat3, w3_h, params["b3_c"][:128], params["w3_2"], params["b3_2"],
                 w3_s, params["b3_c"][128:])
    # mlp_4 + tanh * 0.5
    comp = conv1d(params["w4_2"],
                  jnp.maximum(conv1d(params["w4_1"], y3, params["b4_1"]), 0.0),
                  params["b4_2"])
    return jnp.tanh(comp) * 0.5                                   # (B, 3, num_pc)


if __name__ == "__main__":
    B, dim_feat, num_pc = 2, 128, 64   # small shapes; module defaults are 512 / 256
    key = jax.random.PRNGKey(0)
    k_feat, k_par = jax.random.split(key)
    feat = jax.random.normal(k_feat, (B, dim_feat, 1), jnp.float32)   # (b, dim_feat, 1)
    params = init_params(k_par, dim_feat, num_pc)

    fwd = jax.jit(seed_generator_forward, static_argnums=2)
    out = jax.block_until_ready(fwd(feat, params, num_pc))

    assert out.shape == (B, 3, num_pc), out.shape
    ref = reference_forward(feat, params, num_pc)
    max_err = float(jnp.max(jnp.abs(out - ref)))
    if not (max_err < 5e-2):   # outputs live in [-0.5, 0.5]; kernel B uses bf16 operands
        raise AssertionError(f"mismatch vs reference: max abs err = {max_err}")
    print("KERNEL_OK")
</pallas_src>

<mosaic_0001>
module attributes {stable_mosaic.version = 11 : i64} {
  func.func @_ps_matmul_kernel(%arg0: i32, %arg1: memref<2x128xbf16, #tpu.memory_space<vmem>>, %arg2: memref<128x4096xbf16, #tpu.memory_space<vmem>>, %arg3: memref<2x4096xf32, #tpu.memory_space<vmem>>) attributes {dimension_semantics = [#tpu.dimension_semantics<parallel>], iteration_bounds = array<i64: 2>, scalar_prefetch = 0 : i64, scratch_operands = 0 : i64, tpu.core_type = #tpu.core_type<tc>, window_params = [{pipeline_mode = #tpu.pipeline_mode<synchronous>, transform_indices = @transform_0, window_bounds = array<i64: 2, 128>}, {transform_indices = @transform_1, window_bounds = array<i64: 128, 4096>}, {transform_indices = @transform_2, window_bounds = array<i64: 2, 4096>}]} {
    %c0 = arith.constant 0 : index
    %c0_0 = arith.constant 0 : index
    %0 = vector.load %arg1[%c0, %c0_0] : memref<2x128xbf16, #tpu.memory_space<vmem>>, vector<2x128xbf16>
    %c0_1 = arith.constant 0 : index
    %c0_2 = arith.constant 0 : index
    %1 = vector.load %arg2[%c0_1, %c0_2] : memref<128x4096xbf16, #tpu.memory_space<vmem>>, vector<128x4096xbf16>
    %cst = arith.constant dense<0.000000e+00> : vector<2x4096xf32>
    %2 = tpu.matmul %0, %1, %cst {dimension_numbers = #tpu.dot_dimension_numbers<[1], [0], [0], [1], [0, 0, 1, 1], [], []>} : vector<2x128xbf16>, vector<128x4096xbf16>, vector<2x4096xf32> -> vector<2x4096xf32>
    %c0_3 = arith.constant 0 : index
    %c0_4 = arith.constant 0 : index
    %3 = vector.load %arg3[%c0_3, %c0_4] : memref<2x4096xf32, #tpu.memory_space<vmem>>, vector<2x4096xf32>
    tpu.vector_store %arg3[%c0_3, %c0_4], %2 {strides = array<i32>} : memref<2x4096xf32, #tpu.memory_space<vmem>>, vector<2x4096xf32>,
    return
  }
  func.func @transform_0(%arg0: i32) -> (i32, i32) {
    %c0_i32 = arith.constant 0 : i32
    %c0_i32_0 = arith.constant 0 : i32
    %c0_i32_1 = arith.constant 0 : i32
    return %c0_i32, %c0_i32_0 : i32, i32
  }
  func.func @transform_1(%arg0: i32) -> (i32, i32) {
    %c0_i32 = arith.constant 0 : i32
    %c0_i32_0 = arith.constant 0 : i32
    return %c0_i32, %arg0 : i32, i32
  }
  func.func @transform_2(%arg0: i32) -> (i32, i32) {
    %c0_i32 = arith.constant 0 : i32
    %c0_i32_0 = arith.constant 0 : i32
    return %c0_i32, %arg0 : i32, i32
  }
}

module attributes {stable_mosaic.version = 11 : i64} {
  func.func @_seed_mlp_kernel(%arg0: i32, %arg1: i32, %arg2: memref<1x128x64xf32, #tpu.memory_space<vmem>>, %arg3: memref<1x256x1xf32, #tpu.memory_space<vmem>>, %arg4: memref<1x256x1xf32, #tpu.memory_space<vmem>>, %arg5: memref<256x128xbf16, #tpu.memory_space<vmem>>, %arg6: memref<128x128xbf16, #tpu.memory_space<vmem>>, %arg7: memref<192x128xbf16, #tpu.memory_space<vmem>>, %arg8: memref<192x1xf32, #tpu.memory_space<vmem>>, %arg9: memref<128x64xbf16, #tpu.memory_space<vmem>>, %arg10: memref<256x128xbf16, #tpu.memory_space<vmem>>, %arg11: memref<128x128xbf16, #tpu.memory_space<vmem>>, %arg12: memref<64x128xbf16, #tpu.memory_space<vmem>>, %arg13: memref<64x1xf32, #tpu.memory_space<vmem>>, %arg14: memref<3x64xbf16, #tpu.memory_space<vmem>>, %arg15: memref<3x1xf32, #tpu.memory_space<vmem>>, %arg16: memref<1x3x64xf32, #tpu.memory_space<vmem>>) attributes {dimension_semantics = [#tpu.dimension_semantics<parallel>, #tpu.dimension_semantics<parallel>], iteration_bounds = array<i64: 2, 1>, scalar_prefetch = 0 : i64, scratch_operands = 0 : i64, tpu.core_type = #tpu.core_type<tc>, window_params = [{transform_indices = @transform_0, window_bounds = array<i64: 1, 128, 64>}, {transform_indices = @transform_1, window_bounds = array<i64: 1, 256, 1>}, {transform_indices = @transform_2, window_bounds = array<i64: 1, 256, 1>}, {pipeline_mode = #tpu.pipeline_mode<synchronous>, transform_indices = @transform_3, window_bounds = array<i64: 256, 128>}, {pipeline_mode = #tpu.pipeline_mode<synchronous>, transform_indices = @transform_4, window_bounds = array<i64: 128, 128>}, {pipeline_mode = #tpu.pipeline_mode<synchronous>, transform_indices = @transform_5, window_bounds = array<i64: 192, 128>}, {pipeline_mode = #tpu.pipeline_mode<synchronous>, transform_indices = @transform_6, window_bounds = array<i64: 192, 1>}, {pipeline_mode = #tpu.pipeline_mode<synchronous>, transform_indices = @transform_7, window_bounds = array<i64: 128, 64>}, {pipeline_mode = #tpu.pipeline_mode<synchronous>, transform_indices = @transform_8, window_bounds = array<i64: 256, 128>}, {pipeline_mode = #tpu.pipeline_mode<synchronous>, transform_indices = @transform_9, window_bounds = array<i64: 128, 128>}, {pipeline_mode = #tpu.pipeline_mode<synchronous>, transform_indices = @transform_10, window_bounds = array<i64: 64, 128>}, {pipeline_mode = #tpu.pipeline_mode<synchronous>, transform_indices = @transform_11, window_bounds = array<i64: 64, 1>}, {pipeline_mode = #tpu.pipeline_mode<synchronous>, transform_indices = @transform_12, window_bounds = array<i64: 3, 64>}, {pipeline_mode = #tpu.pipeline_mode<synchronous>, transform_indices = @transform_13, window_bounds = array<i64: 3, 1>}, {transform_indices = @transform_14, window_bounds = array<i64: 1, 3, 64>}]} {
    %c0 = arith.constant 0 : index
    %c0_0 = arith.constant 0 : index
    %c0_1 = arith.constant 0 : index
    %0 = vector.load %arg2[%c0, %c0_0, %c0_1] : memref<1x128x64xf32, #tpu.memory_space<vmem>>, vector<1x128x64xf32>
    %1 = vector.shape_cast %0 : vector<1x128x64xf32> to vector<128x64xf32>
    %2 = arith.truncf %1 : vector<128x64xf32> to vector<128x64xbf16>
    %c0_2 = arith.constant 0 : index
    %c0_3 = arith.constant 0 : index
    %c0_4 = arith.constant 0 : index
    %3 = vector.load %arg3[%c0_2, %c0_3, %c0_4] : memref<1x256x1xf32, #tpu.memory_space<vmem>>, vector<1x256x1xf32>
    %4 = vector.shape_cast %3 : vector<1x256x1xf32> to vector<256x1xf32>
    %c0_5 = arith.constant 0 : index
    %c0_6 = arith.constant 0 : index
    %c0_7 = arith.constant 0 : index
    %5 = vector.load %arg4[%c0_5, %c0_6, %c0_7] : memref<1x256x1xf32, #tpu.memory_space<vmem>>, vector<1x256x1xf32>
    %6 = vector.shape_cast %5 : vector<1x256x1xf32> to vector<256x1xf32>
    %c0_8 = arith.constant 0 : index
    %c0_9 = arith.constant 0 : index
    %7 = vector.load %arg5[%c0_8, %c0_9] : memref<256x128xbf16, #tpu.memory_space<vmem>>, vector<256x128xbf16>
    %cst = arith.constant dense<0.000000e+00> : vector<256x64xf32>
    %8 = tpu.matmul %7, %2, %cst {dimension_numbers = #tpu.dot_dimension_numbers<[1], [0], [0], [1], [0, 0, 1, 1], [], []>} : vector<256x128xbf16>, vector<128x64xbf16>, vector<256x64xf32> -> vector<256x64xf32>
    %9 = vector.broadcast %4 : vector<256x1xf32> to vector<256x64xf32>
    %10 = arith.addf %8, %9 : vector<256x64xf32>
    %11 = vector.extract_strided_slice %10 {offsets = [0, 0], sizes = [128, 64], strides = [1, 1]} : vector<256x64xf32> to vector<128x64xf32>
    %cst_10 = arith.constant 0.000000e+00 : f32
    %12 = vector.broadcast %cst_10 : f32 to vector<128x64xf32>
    %13 = arith.maximumf %11, %12 : vector<128x64xf32>
    %14 = arith.truncf %13 : vector<128x64xf32> to vector<128x64xbf16>
    %c0_11 = arith.constant 0 : index
    %c0_12 = arith.constant 0 : index
    %15 = vector.load %arg6[%c0_11, %c0_12] : memref<128x128xbf16, #tpu.memory_space<vmem>>, vector<128x128xbf16>
    %cst_13 = arith.constant dense<0.000000e+00> : vector<128x64xf32>
    %16 = tpu.matmul %15, %14, %cst_13 {dimension_numbers = #tpu.dot_dimension_numbers<[1], [0], [0], [1], [0, 0, 1, 1], [], []>} : vector<128x128xbf16>, vector<128x64xbf16>, vector<128x64xf32> -> vector<128x64xf32>
    %17 = vector.extract_strided_slice %10 {offsets = [128, 0], sizes = [128, 64], strides = [1, 1]} : vector<256x64xf32> to vector<128x64xf32>
    %18 = arith.addf %16, %17 : vector<128x64xf32>
    %19 = arith.truncf %18 : vector<128x64xf32> to vector<128x64xbf16>
    %c0_14 = arith.constant 0 : index
    %c0_15 = arith.constant 0 : index
    %20 = vector.load %arg7[%c0_14, %c0_15] : memref<192x128xbf16, #tpu.memory_space<vmem>>, vector<192x128xbf16>
    %cst_16 = arith.constant dense<0.000000e+00> : vector<192x64xf32>
    %21 = tpu.matmul %20, %19, %cst_16 {dimension_numbers = #tpu.dot_dimension_numbers<[1], [0], [0], [1], [0, 0, 1, 1], [], []>} : vector<192x128xbf16>, vector<128x64xbf16>, vector<192x64xf32> -> vector<192x64xf32>
    %c0_17 = arith.constant 0 : index
    %c0_18 = arith.constant 0 : index
    %22 = vector.load %arg8[%c0_17, %c0_18] : memref<192x1xf32, #tpu.memory_space<vmem>>, vector<192x1xf32>
    %23 = vector.broadcast %22 : vector<192x1xf32> to vector<192x64xf32>
    %24 = arith.addf %21, %23 : vector<192x64xf32>
    %25 = vector.extract_strided_slice %24 {offsets = [0, 0], sizes = [64, 64], strides = [1, 1]} : vector<192x64xf32> to vector<64x64xf32>
    %cst_19 = arith.constant 0.000000e+00 : f32
    %26 = vector.broadcast %cst_19 : f32 to vector<64x64xf32>
    %27 = arith.maximumf %25, %26 : vector<64x64xf32>
    %28 = arith.truncf %27 : vector<64x64xf32> to vector<64x64xbf16>
    %c0_20 = arith.constant 0 : index
    %c0_21 = arith.constant 0 : index
    %29 = vector.load %arg9[%c0_20, %c0_21] : memref<128x64xbf16, #tpu.memory_space<vmem>>, vector<128x64xbf16>
    %cst_22 = arith.constant dense<0.000000e+00> : vector<128x64xf32>
    %30 = tpu.matmul %29, %28, %cst_22 {dimension_numbers = #tpu.dot_dimension_numbers<[1], [0], [0], [1], [0, 0, 1, 1], [], []>} : vector<128x64xbf16>, vector<64x64xbf16>, vector<128x64xf32> -> vector<128x64xf32>
    %31 = vector.extract_strided_slice %24 {offsets = [64, 0], sizes = [128, 64], strides = [1, 1]} : vector<192x64xf32> to vector<128x64xf32>
    %32 = arith.addf %30, %31 : vector<128x64xf32>
    %33 = arith.truncf %32 : vector<128x64xf32> to vector<128x64xbf16>
    %c0_23 = arith.constant 0 : index
    %c0_24 = arith.constant 0 : index
    %34 = vector.load %arg10[%c0_23, %c0_24] : memref<256x128xbf16, #tpu.memory_space<vmem>>, vector<256x128xbf16>
    %cst_25 = arith.constant dense<0.000000e+00> : vector<256x64xf32>
    %35 = tpu.matmul %34, %33, %cst_25 {dimension_numbers = #tpu.dot_dimension_numbers<[1], [0], [0], [1], [0, 0, 1, 1], [], []>} : vector<256x128xbf16>, vector<128x64xbf16>, vector<256x64xf32> -> vector<256x64xf32>
    %36 = vector.broadcast %6 : vector<256x1xf32> to vector<256x64xf32>
    %37 = arith.addf %35, %36 : vector<256x64xf32>
    %38 = vector.extract_strided_slice %37 {offsets = [0, 0], sizes = [128, 64], strides = [1, 1]} : vector<256x64xf32> to vector<128x64xf32>
    %cst_26 = arith.constant 0.000000e+00 : f32
    %39 = vector.broadcast %cst_26 : f32 to vector<128x64xf32>
    %40 = arith.maximumf %38, %39 : vector<128x64xf32>
    %41 = arith.truncf %40 : vector<128x64xf32> to vector<128x64xbf16>
    %c0_27 = arith.constant 0 : index
    %c0_28 = arith.constant 0 : index
    %42 = vector.load %arg11[%c0_27, %c0_28] : memref<128x128xbf16, #tpu.memory_space<vmem>>, vector<128x128xbf16>
    %cst_29 = arith.constant dense<0.000000e+00> : vector<128x64xf32>
    %43 = tpu.matmul %42, %41, %cst_29 {dimension_numbers = #tpu.dot_dimension_numbers<[1], [0], [0], [1], [0, 0, 1, 1], [], []>} : vector<128x128xbf16>, vector<128x64xbf16>, vector<128x64xf32> -> vector<128x64xf32>
    %44 = vector.extract_strided_slice %37 {offsets = [128, 0], sizes = [128, 64], strides = [1, 1]} : vector<256x64xf32> to vector<128x64xf32>
    %45 = arith.addf %43, %44 : vector<128x64xf32>
    %46 = arith.truncf %45 : vector<128x64xf32> to vector<128x64xbf16>
    %c0_30 = arith.constant 0 : index
    %c0_31 = arith.constant 0 : index
    %47 = vector.load %arg12[%c0_30, %c0_31] : memref<64x128xbf16, #tpu.memory_space<vmem>>, vector<64x128xbf16>
    %cst_32 = arith.constant dense<0.000000e+00> : vector<64x64xf32>
    %48 = tpu.matmul %47, %46, %cst_32 {dimension_numbers = #tpu.dot_dimension_numbers<[1], [0], [0], [1], [0, 0, 1, 1], [], []>} : vector<64x128xbf16>, vector<128x64xbf16>, vector<64x64xf32> -> vector<64x64xf32>
    %c0_33 = arith.constant 0 : index
    %c0_34 = arith.constant 0 : index
    %49 = vector.load %arg13[%c0_33, %c0_34] : memref<64x1xf32, #tpu.memory_space<vmem>>, vector<64x1xf32>
    %50 = vector.broadcast %49 : vector<64x1xf32> to vector<64x64xf32>
    %51 = arith.addf %48, %50 : vector<64x64xf32>
    %cst_35 = arith.constant 0.000000e+00 : f32
    %52 = vector.broadcast %cst_35 : f32 to vector<64x64xf32>
    %53 = arith.maximumf %51, %52 : vector<64x64xf32>
    %54 = arith.truncf %53 : vector<64x64xf32> to vector<64x64xbf16>
    %c0_36 = arith.constant 0 : index
    %c0_37 = arith.constant 0 : index
    %55 = vector.load %arg14[%c0_36, %c0_37] : memref<3x64xbf16, #tpu.memory_space<vmem>>, vector<3x64xbf16>
    %cst_38 = arith.constant dense<0.000000e+00> : vector<3x64xf32>
    %56 = tpu.matmul %55, %54, %cst_38 {dimension_numbers = #tpu.dot_dimension_numbers<[1], [0], [0], [1], [0, 0, 1, 1], [], []>} : vector<3x64xbf16>, vector<64x64xbf16>, vector<3x64xf32> -> vector<3x64xf32>
    %c0_39 = arith.constant 0 : index
    %c0_40 = arith.constant 0 : index
    %57 = vector.load %arg15[%c0_39, %c0_40] : memref<3x1xf32, #tpu.memory_space<vmem>>, vector<3x1xf32>
    %58 = vector.broadcast %57 : vector<3x1xf32> to vector<3x64xf32>
    %59 = arith.addf %56, %58 : vector<3x64xf32>
    %60 = math.tanh %59 : vector<3x64xf32>
    %cst_41 = arith.constant 5.000000e-01 : f32
    %61 = vector.broadcast %cst_41 : f32 to vector<3x64xf32>
    %62 = arith.mulf %60, %61 : vector<3x64xf32>
    %c0_42 = arith.constant 0 : index
    %c0_43 = arith.constant 0 : index
    %c0_44 = arith.constant 0 : index
    %63 = vector.load %arg16[%c0_42, %c0_43, %c0_44] : memref<1x3x64xf32, #tpu.memory_space<vmem>>, vector<1x3x64xf32>
    %64 = vector.shape_cast %63 : vector<1x3x64xf32> to vector<3x64xf32>
    %65 = vector.shape_cast %62 : vector<3x64xf32> to vector<1x3x64xf32>
    tpu.vector_store %arg16[%c0_42, %c0_43, %c0_44], %65 {strides = array<i32>} : memref<1x3x64xf32, #tpu.memory_space<vmem>>, vector<1x3x64xf32>,
    return
  }
  func.func @transform_0(%arg0: i32, %arg1: i32) -> (i32, i32, i32) {
    %c0_i32 = arith.constant 0 : i32
    %c0_i32_0 = arith.constant 0 : i32
    return %arg0, %c0_i32, %arg1 : i32, i32, i32
  }
  func.func @transform_1(%arg0: i32, %arg1: i32) -> (i32, i32, i32) {
    %c0_i32 = arith.constant 0 : i32
    %c0_i32_0 = arith.constant 0 : i32
    %c0_i32_1 = arith.constant 0 : i32
    return %arg0, %c0_i32, %c0_i32_0 : i32, i32, i32
  }
  func.func @transform_2(%arg0: i32, %arg1: i32) -> (i32, i32, i32) {
    %c0_i32 = arith.constant 0 : i32
    %c0_i32_0 = arith.constant 0 : i32
    %c0_i32_1 = arith.constant 0 : i32
    return %arg0, %c0_i32, %c0_i32_0 : i32, i32, i32
  }
  func.func @transform_3(%arg0: i32, %arg1: i32) -> (i32, i32) {
    %c0_i32 = arith.constant 0 : i32
    %c0_i32_0 = arith.constant 0 : i32
    %c0_i32_1 = arith.constant 0 : i32
    return %c0_i32, %c0_i32_0 : i32, i32
  }
  func.func @transform_4(%arg0: i32, %arg1: i32) -> (i32, i32) {
    %c0_i32 = arith.constant 0 : i32
    %c0_i32_0 = arith.constant 0 : i32
    %c0_i32_1 = arith.constant 0 : i32
    return %c0_i32, %c0_i32_0 : i32, i32
  }
  func.func @transform_5(%arg0: i32, %arg1: i32) -> (i32, i32) {
    %c0_i32 = arith.constant 0 : i32
    %c0_i32_0 = arith.constant 0 : i32
    %c0_i32_1 = arith.constant 0 : i32
    return %c0_i32, %c0_i32_0 : i32, i32
  }
  func.func @transform_6(%arg0: i32, %arg1: i32) -> (i32, i32) {
    %c0_i32 = arith.constant 0 : i32
    %c0_i32_0 = arith.constant 0 : i32
    %c0_i32_1 = arith.constant 0 : i32
    return %c0_i32, %c0_i32_0 : i32, i32
  }
  func.func @transform_7(%arg0: i32, %arg1: i32) -> (i32, i32) {
    %c0_i32 = arith.constant 0 : i32
    %c0_i32_0 = arith.constant 0 : i32
    %c0_i32_1 = arith.constant 0 : i32
    return %c0_i32, %c0_i32_0 : i32, i32
  }
  func.func @transform_8(%arg0: i32, %arg1: i32) -> (i32, i32) {
    %c0_i32 = arith.constant 0 : i32
    %c0_i32_0 = arith.constant 0 : i32
    %c0_i32_1 = arith.constant 0 : i32
    return %c0_i32, %c0_i32_0 : i32, i32
  }
  func.func @transform_9(%arg0: i32, %arg1: i32) -> (i32, i32) {
    %c0_i32 = arith.constant 0 : i32
    %c0_i32_0 = arith.constant 0 : i32
    %c0_i32_1 = arith.constant 0 : i32
    return %c0_i32, %c0_i32_0 : i32, i32
  }
  func.func @transform_10(%arg0: i32, %arg1: i32) -> (i32, i32) {
    %c0_i32 = arith.constant 0 : i32
    %c0_i32_0 = arith.constant 0 : i32
    %c0_i32_1 = arith.constant 0 : i32
    return %c0_i32, %c0_i32_0 : i32, i32
  }
  func.func @transform_11(%arg0: i32, %arg1: i32) -> (i32, i32) {
    %c0_i32 = arith.constant 0 : i32
    %c0_i32_0 = arith.constant 0 : i32
    %c0_i32_1 = arith.constant 0 : i32
    return %c0_i32, %c0_i32_0 : i32, i32
  }
  func.func @transform_12(%arg0: i32, %arg1: i32) -> (i32, i32) {
    %c0_i32 = arith.constant 0 : i32
    %c0_i32_0 = arith.constant 0 : i32
    %c0_i32_1 = arith.constant 0 : i32
    return %c0_i32, %c0_i32_0 : i32, i32
  }
  func.func @transform_13(%arg0: i32, %arg1: i32) -> (i32, i32) {
    %c0_i32 = arith.constant 0 : i32
    %c0_i32_0 = arith.constant 0 : i32
    %c0_i32_1 = arith.constant 0 : i32
    return %c0_i32, %c0_i32_0 : i32, i32
  }
  func.func @transform_14(%arg0: i32, %arg1: i32) -> (i32, i32, i32) {
    %c0_i32 = arith.constant 0 : i32
    %c0_i32_0 = arith.constant 0 : i32
    return %arg0, %c0_i32, %arg1 : i32, i32, i32
  }
}

</mosaic_0001>

<llo_original>
// kernel: seed_generator_forward.3
$region0: #{seed_generator_forward.3}
  #allocation0 [shape = 'u32[]', space=smem, size = 0x4, offset = 0x4, fixed_abs, tag = 'smem constant byte address 0x4 - core index']
  #allocation1 [shape = 'u32[144,128]{1,0:T(1,128)}', space=vmem, size = 0x12000, scoped, tag = 'internal scratch']
  %s0 = inlined_call_operand.vmem [shape: f32[2,128,64], index: 0, kind: input, shape index: {}]
  %s1 = inlined_call_operand.vmem [shape: f32[2,256,1], index: 1, kind: input, shape index: {}]
  %s2 = inlined_call_operand.vmem [shape: f32[2,256,1], index: 2, kind: input, shape index: {}]
  %s3 = inlined_call_operand.vmem [shape: bf16[256,128], index: 3, kind: input, shape index: {}]
  %s4 = inlined_call_operand.vmem [shape: bf16[128,128], index: 4, kind: input, shape index: {}]
  %s5 = inlined_call_operand.vmem [shape: bf16[192,128], index: 5, kind: input, shape index: {}]
  %s6 = inlined_call_operand.vmem [shape: f32[192,1], index: 6, kind: input, shape index: {}]
  %s7 = inlined_call_operand.vmem [shape: bf16[128,64], index: 7, kind: input, shape index: {}]
  %s8 = inlined_call_operand.vmem [shape: bf16[256,128], index: 8, kind: input, shape index: {}]
  %s9 = inlined_call_operand.vmem [shape: bf16[128,128], index: 9, kind: input, shape index: {}]
  %s10 = inlined_call_operand.vmem [shape: bf16[64,128], index: 10, kind: input, shape index: {}]
  %s11 = inlined_call_operand.vmem [shape: f32[64,1], index: 11, kind: input, shape index: {}]
  %s12 = inlined_call_operand.vmem [shape: bf16[3,64], index: 12, kind: input, shape index: {}]
  %s13 = inlined_call_operand.vmem [shape: f32[3,1], index: 13, kind: input, shape index: {}]
  %s14 = inlined_call_operand.vmem [shape: f32[2,3,64], index: 14, kind: output, shape index: {}]
  %s15 = sld [smem:[#allocation0]]
  $region89: #{seed_generator_forward.3} parent=0
    _
  %s17 = ssub.s32 1, %s15
  %s18 = scalar_select 0, %s17, %s15
  loop: start=0, step=1, limit=4
  $region2: #{seed_generator_forward.3} parent=0 // loop_pre_header
    _
  $region3: #{seed_generator_forward.3} parent=0 // loop_header
    %s20 = sphi 0, %s24
    %p21 = scmp.ge.s32.totalorder %s20, 4
    %s27 = sphi 0, %s39
    %s28 = sphi 0, %s35
    %s29 = sphi 0, %s27
    %s30 = sphi 0, %s28
    %s31 = sphi 0, %s29
    %s32 = sphi 0, %s30
    %s44 = sphi 0, %s46
    %s47 = sphi 0, %s44
    %s48 = sphi 0, %s47
    %s64 = sphi 0, %s48
    %s70 = sphi 0, %s72
    %s73 = sphi 0, %s70
    %s74 = sphi 0, %s73
    %s90 = sphi 0, %s74
    %s96 = sphi 0, %s98
    %s99 = sphi 0, %s96
    %s100 = sphi 0, %s99
    %s116 = sphi 0, %s100
    %s120 = sphi 0, %s120
    %s122 = sphi 0, %s120
    %s123 = sphi 0, %s122
    %s137 = sphi 0, %s123
    %s141 = sphi 0, %s141
    %s143 = sphi 0, %s141
    %s144 = sphi 0, %s143
    %s158 = sphi 0, %s144
    %s162 = sphi 0, %s162
    %s164 = sphi 0, %s162
    %s165 = sphi 0, %s164
    %s179 = sphi 0, %s165
    %s183 = sphi 0, %s183
    %s185 = sphi 0, %s183
    %s186 = sphi 0, %s185
    %s200 = sphi 0, %s186
    %s204 = sphi 0, %s204
    %s206 = sphi 0, %s204
    %s207 = sphi 0, %s206
    %s221 = sphi 0, %s207
    %s225 = sphi 0, %s225
    %s227 = sphi 0, %s225
    %s228 = sphi 0, %s227
    %s242 = sphi 0, %s228
    %s246 = sphi 0, %s246
    %s248 = sphi 0, %s246
    %s249 = sphi 0, %s248
    %s263 = sphi 0, %s249
    %s267 = sphi 0, %s267
    %s269 = sphi 0, %s267
    %s270 = sphi 0, %s269
    %s284 = sphi 0, %s270
    %s288 = sphi 0, %s288
    %s290 = sphi 0, %s288
    %s291 = sphi 0, %s290
    %s305 = sphi 0, %s291
    %s309 = sphi 0, %s309
    %s311 = sphi 0, %s309
    %s312 = sphi 0, %s311
    %s326 = sphi 0, %s312
    %s330 = sphi 0, %s330
    %s332 = sphi 0, %s330
    %s333 = sphi 0, %s332
    %s347 = sphi 0, %s333
    %s355 = sphi 0, %s357
    %s358 = sphi 0, %s355
    %s359 = sphi 0, %s358
    %s375 = sphi 0, %s359
  $region4: #{seed_generator_forward.3} parent=0 // loop_header_branch
    %23 = sbr.rel (%p21) target = $region8
  $region5: #{seed_generator_forward.3} parent=0 // loop_body
    %s25 = ssub.s32 %s20, 1
    %s26 = ssub.s32 %s20, 2
    %s33 = sadd.s32 1, %s28
    %p34 = scmp.ge.s32.totalorder %s33, 1
    %s35 = scalar_select %p34, 0, %s33
    %s36 = sadd.s32 1, %s27
    %s37 = scalar_select %p34, %s36, %s27
    %p38 = scmp.ge.s32.totalorder %s37, 2
    %s39 = scalar_select %p38, 0, %s37
    %s40 = ssub.s32 %s27, %s39
    %s41 = ssub.s32 %s28, %s35
    %s42 = sor.u32 %s40, %s41
    %p43 = scmp.eq.s32.totalorder %s42, 0
    %s45 = sadd.s32 %s44, 1
    %s46 = scalar_select %p43, %s44, %s45
    %p49 = pneg %p43
    %p50 = scmp.eq.s32.totalorder %s20, 1
    %p51 = por %p49, %p50
    %p52 = scmp.ne.s32.totalorder %s44, %s47
    %p53 = scmp.eq.s32.totalorder %s20, 0
    %p54 = por %p52, %p53
    %p55 = scmp.ne.s32.totalorder %s44, %s47
    %p56 = scmp.eq.s32.totalorder %s25, 1
    %p57 = por %p55, %p56
    %p58 = scmp.ne.s32.totalorder %s47, %s48
    %p59 = scmp.eq.s32.totalorder %s25, 0
    %p60 = por %p58, %p59
    %p61 = scmp.ne.s32.totalorder %s47, %s48
    %p62 = scmp.eq.s32.totalorder %s26, 1
    %p63 = por %p61, %p62
    %p65 = scmp.ne.s32.totalorder %s48, %s64
    %p66 = scmp.eq.s32.totalorder %s26, 0
    %p67 = por %p65, %p66
    %s68 = ssub.s32 %s27, %s39
    %p69 = scmp.eq.s32.totalorder %s68, 0
    %s71 = sadd.s32 %s70, 1
    %s72 = scalar_select %p69, %s70, %s71
    %p75 = pneg %p69
    %p76 = scmp.eq.s32.totalorder %s20, 1
    %p77 = por %p75, %p76
    %p78 = scmp.ne.s32.totalorder %s70, %s73
    %p79 = scmp.eq.s32.totalorder %s20, 0
    %p80 = por %p78, %p79
    %p81 = scmp.ne.s32.totalorder %s70, %s73
    %p82 = scmp.eq.s32.totalorder %s25, 1
    %p83 = por %p81, %p82
    %p84 = scmp.ne.s32.totalorder %s73, %s74
    %p85 = scmp.eq.s32.totalorder %s25, 0
    %p86 = por %p84, %p85
    %p87 = scmp.ne.s32.totalorder %s73, %s74
    %p88 = scmp.eq.s32.totalorder %s26, 1
    %p89 = por %p87, %p88
    %p91 = scmp.ne.s32.totalorder %s74, %s90
    %p92 = scmp.eq.s32.totalorder %s26, 0
    %p93 = por %p91, %p92
    %s94 = ssub.s32 %s27, %s39
    %p95 = scmp.eq.s32.totalorder %s94, 0
    %s97 = sadd.s32 %s96, 1
    %s98 = scalar_select %p95, %s96, %s97
    %p101 = pneg %p95
    %p102 = scmp.eq.s32.totalorder %s20, 1
    %p103 = por %p101, %p102
    %p104 = scmp.ne.s32.totalorder %s96, %s99
    %p105 = scmp.eq.s32.totalorder %s20, 0
    %p106 = por %p104, %p105
    %p107 = scmp.ne.s32.totalorder %s96, %s99
    %p108 = scmp.eq.s32.totalorder %s25, 1
    %p109 = por %p107, %p108
    %p110 = scmp.ne.s32.totalorder %s99, %s100
    %p111 = scmp.eq.s32.totalorder %s25, 0
    %p112 = por %p110, %p111
    %p113 = scmp.ne.s32.totalorder %s99, %s100
    %p114 = scmp.eq.s32.totalorder %s26, 1
    %p115 = por %p113, %p114
    %p117 = scmp.ne.s32.totalorder %s100, %s116
    %p118 = scmp.eq.s32.totalorder %s26, 0
    %p119 = por %p117, %p118
    %s121 = sadd.s32 %s120, 1
    %p124 = scmp.eq.s32.totalorder %s20, 1
    %p125 = scmp.ne.s32.totalorder %s120, %s122
    %p126 = scmp.eq.s32.totalorder %s20, 0
    %p127 = por %p125, %p126
    %p128 = scmp.ne.s32.totalorder %s120, %s122
    %p129 = scmp.eq.s32.totalorder %s25, 1
    %p130 = por %p128, %p129
    %p131 = scmp.ne.s32.totalorder %s122, %s123
    %p132 = scmp.eq.s32.totalorder %s25, 0
    %p133 = por %p131, %p132
    %p134 = scmp.ne.s32.totalorder %s122, %s123
    %p135 = scmp.eq.s32.totalorder %s26, 1
    %p136 = por %p134, %p135
    %p138 = scmp.ne.s32.totalorder %s123, %s137
    %p139 = scmp.eq.s32.totalorder %s26, 0
    %p140 = por %p138, %p139
    %s142 = sadd.s32 %s141, 1
    %p145 = scmp.eq.s32.totalorder %s20, 1
    %p146 = scmp.ne.s32.totalorder %s141, %s143
    %p147 = scmp.eq.s32.totalorder %s20, 0
    %p148 = por %p146, %p147
    %p149 = scmp.ne.s32.totalorder %s141, %s143
    %p150 = scmp.eq.s32.totalorder %s25, 1
    %p151 = por %p149, %p150
    %p152 = scmp.ne.s32.totalorder %s143, %s144
    %p153 = scmp.eq.s32.totalorder %s25, 0
    %p154 = por %p152, %p153
    %p155 = scmp.ne.s32.totalorder %s143, %s144
    %p156 = scmp.eq.s32.totalorder %s26, 1
    %p157 = por %p155, %p156
    %p159 = scmp.ne.s32.totalorder %s144, %s158
    %p160 = scmp.eq.s32.totalorder %s26, 0
    %p161 = por %p159, %p160
    %s163 = sadd.s32 %s162, 1
    %p166 = scmp.eq.s32.totalorder %s20, 1
    %p167 = scmp.ne.s32.totalorder %s162, %s164
    %p168 = scmp.eq.s32.totalorder %s20, 0
    %p169 = por %p167, %p168
    %p170 = scmp.ne.s32.totalorder %s162, %s164
    %p171 = scmp.eq.s32.totalorder %s25, 1
    %p172 = por %p170, %p171
    %p173 = scmp.ne.s32.totalorder %s164, %s165
    %p174 = scmp.eq.s32.totalorder %s25, 0
    %p175 = por %p173, %p174
    %p176 = scmp.ne.s32.totalorder %s164, %s165
    %p177 = scmp.eq.s32.totalorder %s26, 1
    %p178 = por %p176, %p177
    %p180 = scmp.ne.s32.totalorder %s165, %s179
    %p181 = scmp.eq.s32.totalorder %s26, 0
    %p182 = por %p180, %p181
    %s184 = sadd.s32 %s183, 1
    %p187 = scmp.eq.s32.totalorder %s20, 1
    %p188 = scmp.ne.s32.totalorder %s183, %s185
    %p189 = scmp.eq.s32.totalorder %s20, 0
    %p190 = por %p188, %p189
    %p191 = scmp.ne.s32.totalorder %s183, %s185
    %p192 = scmp.eq.s32.totalorder %s25, 1
    %p193 = por %p191, %p192
    %p194 = scmp.ne.s32.totalorder %s185, %s186
    %p195 = scmp.eq.s32.totalorder %s25, 0
    %p196 = por %p194, %p195
    %p197 = scmp.ne.s32.totalorder %s185, %s186
    %p198 = scmp.eq.s32.totalorder %s26, 1
    %p199 = por %p197, %p198
    %p201 = scmp.ne.s32.totalorder %s186, %s200
    %p202 = scmp.eq.s32.totalorder %s26, 0
    %p203 = por %p201, %p202
    %s205 = sadd.s32 %s204, 1
    %p208 = scmp.eq.s32.totalorder %s20, 1
    %p209 = scmp.ne.s32.totalorder %s204, %s206
    %p210 = scmp.eq.s32.totalorder %s20, 0
    %p211 = por %p209, %p210
    %p212 = scmp.ne.s32.totalorder %s204, %s206
    %p213 = scmp.eq.s32.totalorder %s25, 1
    %p214 = por %p212, %p213
    %p215 = scmp.ne.s32.totalorder %s206, %s207
    %p216 = scmp.eq.s32.totalorder %s25, 0
    %p217 = por %p215, %p216
    %p218 = scmp.ne.s32.totalorder %s206, %s207
    %p219 = scmp.eq.s32.totalorder %s26, 1
    %p220 = por %p218, %p219
    %p222 = scmp.ne.s32.totalorder %s207, %s221
    %p223 = scmp.eq.s32.totalorder %s26, 0
    %p224 = por %p222, %p223
    %s226 = sadd.s32 %s225, 1
    %p229 = scmp.eq.s32.totalorder %s20, 1
    %p230 = scmp.ne.s32.totalorder %s225, %s227
    %p231 = scmp.eq.s32.totalorder %s20, 0
    %p232 = por %p230, %p231
    %p233 = scmp.ne.s32.totalorder %s225, %s227
    %p234 = scmp.eq.s32.totalorder %s25, 1
    %p235 = por %p233, %p234
    %p236 = scmp.ne.s32.totalorder %s227, %s228
    %p237 = scmp.eq.s32.totalorder %s25, 0
    %p238 = por %p236, %p237
    %p239 = scmp.ne.s32.totalorder %s227, %s228
    %p240 = scmp.eq.s32.totalorder %s26, 1
    %p241 = por %p239, %p240
    %p243 = scmp.ne.s32.totalorder %s228, %s242
    %p244 = scmp.eq.s32.totalorder %s26, 0
    %p245 = por %p243, %p244
    %s247 = sadd.s32 %s246, 1
    %p250 = scmp.eq.s32.totalorder %s20, 1
    %p251 = scmp.ne.s32.totalorder %s246, %s248
    %p252 = scmp.eq.s32.totalorder %s20, 0
    %p253 = por %p251, %p252
    %p254 = scmp.ne.s32.totalorder %s246, %s248
    %p255 = scmp.eq.s32.totalorder %s25, 1
    %p256 = por %p254, %p255
    %p257 = scmp.ne.s32.totalorder %s248, %s249
    %p258 = scmp.eq.s32.totalorder %s25, 0
    %p259 = por %p257, %p258
    %p260 = scmp.ne.s32.totalorder %s248, %s249
    %p261 = scmp.eq.s32.totalorder %s26, 1
    %p262 = por %p260, %p261
    %p264 = scmp.ne.s32.totalorder %s249, %s263
    %p265 = scmp.eq.s32.totalorder %s26, 0
    %p266 = por %p264, %p265
    %s268 = sadd.s32 %s267, 1
    %p271 = scmp.eq.s32.totalorder %s20, 1
    %p272 = scmp.ne.s32.totalorder %s267, %s269
    %p273 = scmp.eq.s32.totalorder %s20, 0
    %p274 = por %p272, %p273
    %p275 = scmp.ne.s32.totalorder %s267, %s269
    %p276 = scmp.eq.s32.totalorder %s25, 1
    %p277 = por %p275, %p276
    %p278 = scmp.ne.s32.totalorder %s269, %s270
    %p279 = scmp.eq.s32.totalorder %s25, 0
    %p280 = por %p278, %p279
    %p281 = scmp.ne.s32.totalorder %s269, %s270
    %p282 = scmp.eq.s32.totalorder %s26, 1
    %p283 = por %p281, %p282
    %p285 = scmp.ne.s32.totalorder %s270, %s284
    %p286 = scmp.eq.s32.totalorder %s26, 0
    %p287 = por %p285, %p286
    %s289 = sadd.s32 %s288, 1
    %p292 = scmp.eq.s32.totalorder %s20, 1
    %p293 = scmp.ne.s32.totalorder %s288, %s290
    %p294 = scmp.eq.s32.totalorder %s20, 0
    %p295 = por %p293, %p294
    %p296 = scmp.ne.s32.totalorder %s288, %s290
    %p297 = scmp.eq.s32.totalorder %s25, 1
    %p298 = por %p296, %p297
    %p299 = scmp.ne.s32.totalorder %s290, %s291
    %p300 = scmp.eq.s32.totalorder %s25, 0
    %p301 = por %p299, %p300
    %p302 = scmp.ne.s32.totalorder %s290, %s291
    %p303 = scmp.eq.s32.totalorder %s26, 1
    %p304 = por %p302, %p303
    %p306 = scmp.ne.s32.totalorder %s291, %s305
    %p307 = scmp.eq.s32.totalorder %s26, 0
    %p308 = por %p306, %p307
    %s310 = sadd.s32 %s309, 1
    %p313 = scmp.eq.s32.totalorder %s20, 1
    %p314 = scmp.ne.s32.totalorder %s309, %s311
    %p315 = scmp.eq.s32.totalorder %s20, 0
    %p316 = por %p314, %p315
    %p317 = scmp.ne.s32.totalorder %s309, %s311
    %p318 = scmp.eq.s32.totalorder %s25, 1
    %p319 = por %p317, %p318
    %p320 = scmp.ne.s32.totalorder %s311, %s312
    %p321 = scmp.eq.s32.totalorder %s25, 0
    %p322 = por %p320, %p321
    %p323 = scmp.ne.s32.totalorder %s311, %s312
    %p324 = scmp.eq.s32.totalorder %s26, 1
    %p325 = por %p323, %p324
    %p327 = scmp.ne.s32.totalorder %s312, %s326
    %p328 = scmp.eq.s32.totalorder %s26, 0
    %p329 = por %p327, %p328
    %s331 = sadd.s32 %s330, 1
    %p334 = scmp.eq.s32.totalorder %s20, 1
    %p335 = scmp.ne.s32.totalorder %s330, %s332
    %p336 = scmp.eq.s32.totalorder %s20, 0
    %p337 = por %p335, %p336
    %p338 = scmp.ne.s32.totalorder %s330, %s332
    %p339 = scmp.eq.s32.totalorder %s25, 1
    %p340 = por %p338, %p339
    %p341 = scmp.ne.s32.totalorder %s332, %s333
    %p342 = scmp.eq.s32.totalorder %s25, 0
    %p343 = por %p341, %p342
    %p344 = scmp.ne.s32.totalorder %s332, %s333
    %p345 = scmp.eq.s32.totalorder %s26, 1
    %p346 = por %p344, %p345
    %p348 = scmp.ne.s32.totalorder %s333, %s347
    %p349 = scmp.eq.s32.totalorder %s26, 0
    %p350 = por %p348, %p349
    %s351 = ssub.s32 %s27, %s39
    %s352 = ssub.s32 %s28, %s35
    %s353 = sor.u32 %s351, %s352
    %p354 = scmp.eq.s32.totalorder %s353, 0
    %s356 = sadd.s32 %s355, 1
    %s357 = scalar_select %p354, %s355, %s356
    %p360 = pneg %p354
    %p361 = scmp.eq.s32.totalorder %s20, 1
    %p362 = por %p360, %p361
    %p363 = scmp.ne.s32.totalorder %s355, %s358
    %p364 = scmp.eq.s32.totalorder %s20, 0
    %p365 = por %p363, %p364
    %p366 = scmp.ne.s32.totalorder %s355, %s358
    %p367 = scmp.eq.s32.totalorder %s25, 1
    %p368 = por %p366, %p367
    %p369 = scmp.ne.s32.totalorder %s358, %s359
    %p370 = scmp.eq.s32.totalorder %s25, 0
    %p371 = por %p369, %p370
    %p372 = scmp.ne.s32.totalorder %s358, %s359
    %p373 = scmp.eq.s32.totalorder %s26, 1
    %p374 = por %p372, %p373
    %p376 = scmp.ne.s32.totalorder %s359, %s375
    %p377 = scmp.eq.s32.totalorder %s26, 0
    %p378 = por %p376, %p377
    %p379 = scmp.le.s32.totalorder 1, %s20
    %p380 = scmp.lt.s32.totalorder %s20, 3
    %p381 = pnand %p379, %p380
    %p382 = pneg %p381
    // Predicated region
    $region9: #{seed_generator_forward.3} parent=5 // pred_check
      _
    $region10: #{seed_generator_forward.3} parent=5 // pred_check_branch
      %384 = sbr.rel (%p381) target = $region12
    $region11: #{seed_generator_forward.3} parent=5 // pred_region
      %s385 = ssub.s32 %s20, 1
      // Predicated region
      $region13: #{seed_generator_forward.3} parent=11 // pred_check
        %p386 = pneg %p133
      $region14: #{seed_generator_forward.3} parent=11 // pred_check_branch
        %388 = sbr.rel (%p386) target = $region16
      $region15: #{seed_generator_forward.3} parent=11 // pred_region
        _
      $region16: #{seed_generator_forward.3} parent=11 // pred_fallthru
        _
      // Predicated region
      $region17: #{seed_generator_forward.3} parent=11 // pred_check
        %p389 = pneg %p154
      $region18: #{seed_generator_forward.3} parent=11 // pred_check_branch
        %391 = sbr.rel (%p389) target = $region20
      $region19: #{seed_generator_forward.3} parent=11 // pred_region
        _
      $region20: #{seed_generator_forward.3} parent=11 // pred_fallthru
        _
      // Predicated region
      $region21: #{seed_generator_forward.3} parent=11 // pred_check
        %p392 = pneg %p175
      $region22: #{seed_generator_forward.3} parent=11 // pred_check_branch
        %394 = sbr.rel (%p392) target = $region24
      $region23: #{seed_generator_forward.3} parent=11 // pred_region
        _
      $region24: #{seed_generator_forward.3} parent=11 // pred_fallthru
        _
      // Predicated region
      $region25: #{seed_generator_forward.3} parent=11 // pred_check
        %p395 = pneg %p196
      $region26: #{seed_generator_forward.3} parent=11 // pred_check_branch
        %397 = sbr.rel (%p395) target = $region28
      $region27: #{seed_generator_forward.3} parent=11 // pred_region
        _
      $region28: #{seed_generator_forward.3} parent=11 // pred_fallthru
        _
      // Predicated region
      $region29: #{seed_generator_forward.3} parent=11 // pred_check
        %p398 = pneg %p217
      $region30: #{seed_generator_forward.3} parent=11 // pred_check_branch
        %400 = sbr.rel (%p398) target = $region32
      $region31: #{seed_generator_forward.3} parent=11 // pred_region
        _
      $region32: #{seed_generator_forward.3} parent=11 // pred_fallthru
        _
      // Predicated region
      $region33: #{seed_generator_forward.3} parent=11 // pred_check
        %p401 = pneg %p238
      $region34: #{seed_generator_forward.3} parent=11 // pred_check_branch
        %403 = sbr.rel (%p401) target = $region36
      $region35: #{seed_generator_forward.3} parent=11 // pred_region
        _
      $region36: #{seed_generator_forward.3} parent=11 // pred_fallthru
        _
      // Predicated region
      $region37: #{seed_generator_forward.3} parent=11 // pred_check
        %p404 = pneg %p259
      $region38: #{seed_generator_forward.3} parent=11 // pred_check_branch
        %406 = sbr.rel (%p404) target = $region40
      $region39: #{seed_generator_forward.3} parent=11 // pred_region
        _
      $region40: #{seed_generator_forward.3} parent=11 // pred_fallthru
        _
      // Predicated region
      $region41: #{seed_generator_forward.3} parent=11 // pred_check
        %p407 = pneg %p280
      $region42: #{seed_generator_forward.3} parent=11 // pred_check_branch
        %409 = sbr.rel (%p407) target = $region44
      $region43: #{seed_generator_forward.3} parent=11 // pred_region
        _
      $region44: #{seed_generator_forward.3} parent=11 // pred_fallthru
        _
      // Predicated region
      $region45: #{seed_generator_forward.3} parent=11 // pred_check
        %p410 = pneg %p301
      $region46: #{seed_generator_forward.3} parent=11 // pred_check_branch
        %412 = sbr.rel (%p410) target = $region48
      $region47: #{seed_generator_forward.3} parent=11 // pred_region
        _
      $region48: #{seed_generator_forward.3} parent=11 // pred_fallthru
        _
      // Predicated region
      $region49: #{seed_generator_forward.3} parent=11 // pred_check
        %p413 = pneg %p322
      $region50: #{seed_generator_forward.3} parent=11 // pred_check_branch
        %415 = sbr.rel (%p413) target = $region52
      $region51: #{seed_generator_forward.3} parent=11 // pred_region
        _
      $region52: #{seed_generator_forward.3} parent=11 // pred_fallthru
        _
      // Predicated region
      $region53: #{seed_generator_forward.3} parent=11 // pred_check
        %p416 = pneg %p343
      $region54: #{seed_generator_forward.3} parent=11 // pred_check_branch
        %418 = sbr.rel (%p416) target = $region56
      $region55: #{seed_generator_forward.3} parent=11 // pred_region
        _
      $region56: #{seed_generator_forward.3} parent=11 // pred_fallthru
        _
    $region12: #{seed_generator_forward.3} parent=5 // pred_fallthru
      _
    %p419 = scmp.lt.s32.totalorder %s20, 2
    // Predicated region
    $region57: #{seed_generator_forward.3} parent=5 // pred_check
      %p420 = pneg %p419
    $region58: #{seed_generator_forward.3} parent=5 // pred_check_branch
      %422 = sbr.rel (%p420) target = $region60
    $region59: #{seed_generator_forward.3} parent=5 // pred_region
      // Predicated region
      $region61: #{seed_generator_forward.3} parent=59 // pred_check
        %p423 = pneg %p54
      $region62: #{seed_generator_forward.3} parent=59 // pred_check_branch
        %425 = sbr.rel (%p423) target = $region64
      $region63: #{seed_generator_forward.3} parent=59 // pred_region
        %p426 = scmp.lt.s32.totalorder %s27, 1
        %s427 = scalar_select %p426, %s27, 1
        %p428 = scmp.lt.s32.totalorder %s28, 0
        %s429 = scalar_select %p428, %s28, 0
        %s430 = smul.addr %s427, 16
        %s431 = sadd.s32 %s429, %s430
        %s432 = smul.addr %s431, 8
        %s433 = scalar_lea.vmem %s0, %s432
      $region64: #{seed_generator_forward.3} parent=59 // pred_fallthru
        _
      // Predicated region
      $region65: #{seed_generator_forward.3} parent=59 // pred_check
        %p434 = pneg %p80
      $region66: #{seed_generator_forward.3} parent=59 // pred_check_branch
        %436 = sbr.rel (%p434) target = $region68
      $region67: #{seed_generator_forward.3} parent=59 // pred_region
        %p437 = scmp.lt.s32.totalorder %s27, 1
        %s438 = scalar_select %p437, %s27, 1
        %s439 = smul.addr %s438, 32
        %s440 = smul.addr %s439, 8
        %s441 = scalar_lea.vmem %s1, %s440
      $region68: #{seed_generator_forward.3} parent=59 // pred_fallthru
        _
      // Predicated region
      $region69: #{seed_generator_forward.3} parent=59 // pred_check
        %p442 = pneg %p106
      $region70: #{seed_generator_forward.3} parent=59 // pred_check_branch
        %444 = sbr.rel (%p442) target = $region72
      $region71: #{seed_generator_forward.3} parent=59 // pred_region
        %p445 = scmp.lt.s32.totalorder %s27, 1
        %s446 = scalar_select %p445, %s27, 1
        %s447 = smul.addr %s446, 32
        %s448 = smul.addr %s447, 8
        %s449 = scalar_lea.vmem %s2, %s448
      $region72: #{seed_generator_forward.3} parent=59 // pred_fallthru
        _
    $region60: #{seed_generator_forward.3} parent=5 // pred_fallthru
      _
    %p450 = scmp.le.s32.totalorder 1, %s20
    %p451 = scmp.lt.s32.totalorder %s20, 3
    %p452 = pnand %p450, %p451
    %p453 = pneg %p452
    // Predicated region
    $region73: #{seed_generator_forward.3} parent=5 // pred_check
      _
    $region74: #{seed_generator_forward.3} parent=5 // pred_check_branch
      %455 = sbr.rel (%p452) target = $region76
    $region75: #{seed_generator_forward.3} parent=5 // pred_region
      %s456 = ssub.s32 %s20, 1
      %p457 = scmp.lt.s32.totalorder %s29, 1
      %s458 = scalar_select %p457, %s29, 1
      %p459 = scmp.lt.s32.totalorder %s30, 0
      %s460 = scalar_select %p459, %s30, 0
      %s461 = smul.addr %s458, 16
      %s462 = sadd.s32 %s460, %s461
      %s463 = smul.addr %s462, 8
      %s464 = scalar_lea.vmem %s0, %s463
      %p465 = pneg %p60
      %p466 = pneg %p57
      %p467 = scmp.lt.s32.totalorder %s29, 1
      %s468 = scalar_select %p467, %s29, 1
      %s469 = smul.addr %s468, 32
      %s470 = smul.addr %s469, 8
      %s471 = scalar_lea.vmem %s1, %s470
      %p472 = pneg %p86
      %p473 = pneg %p83
      %p474 = scmp.lt.s32.totalorder %s29, 1
      %s475 = scalar_select %p474, %s29, 1
      %s476 = smul.addr %s475, 32
      %s477 = smul.addr %s476, 8
      %s478 = scalar_lea.vmem %s2, %s477
      %p479 = pneg %p112
      %p480 = pneg %p109
      %p481 = pneg %p133
      %p482 = pneg %p130
      %p483 = pneg %p154
      %p484 = pneg %p151
      %p485 = pneg %p175
      %p486 = pneg %p172
      %p487 = pneg %p196
      %p488 = pneg %p193
      %p489 = pneg %p217
      %p490 = pneg %p214
      %p491 = pneg %p238
      %p492 = pneg %p235
      %p493 = pneg %p259
      %p494 = pneg %p256
      %p495 = pneg %p280
      %p496 = pneg %p277
      %p497 = pneg %p301
      %p498 = pneg %p298
      %p499 = pneg %p322
      %p500 = pneg %p319
      %p501 = pneg %p343
      %p502 = pneg %p340
      %p503 = pneg %p371
      %p504 = pneg %p368
      %p505 = scmp.lt.s32.totalorder %s29, 1
      %s506 = scalar_select %p505, %s29, 1
      %p507 = scmp.lt.s32.totalorder %s30, 0
      %s508 = scalar_select %p507, %s30, 0
      %s509 = sadd.s32 %s508, %s506
      %s510 = smul.addr %s509, 4
      %s511 = scalar_lea.vmem %s14, %s510
      %p512 = scmp.lt.s32.totalorder %s29, 1
      %s513 = scalar_select %p512, %s29, 1
      %p514 = scmp.lt.s32.totalorder %s30, 0
      %s515 = scalar_select %p514, %s30, 0
      %s516 = smul.addr %s513, 16
      %s517 = sadd.s32 %s515, %s516
      %s518 = smul.addr %s517, 8
      %s519 = scalar_lea.vmem %s0, %s518
      %p520 = scmp.lt.s32.totalorder %s29, 1
      %s521 = scalar_select %p520, %s29, 1
      %s522 = smul.addr %s521, 32
      %s523 = smul.addr %s522, 8
      %s524 = scalar_lea.vmem %s1, %s523
      %p525 = scmp.lt.s32.totalorder %s29, 1
      %s526 = scalar_select %p525, %s29, 1
      %s527 = smul.addr %s526, 32
      %s528 = smul.addr %s527, 8
      %s529 = scalar_lea.vmem %s2, %s528
      %p530 = scmp.lt.s32.totalorder %s29, 1
      %s531 = scalar_select %p530, %s29, 1
      %p532 = scmp.lt.s32.totalorder %s30, 0
      %s533 = scalar_select %p532, %s30, 0
      %s534 = sadd.s32 %s533, %s531
      %s535 = smul.addr %s534, 4
      %s536 = scalar_lea.vmem %s14, %s535
      %v538 = vld [vmem:[%s519] sm:$0xff]
      %v539 = vld [vmem:[%s519 + $0x8] sm:$0xff]
      %v540 = vld [vmem:[%s519 + $0x10] sm:$0xff]
      %v541 = vld [vmem:[%s519 + $0x18] sm:$0xff]
      %v542 = vld [vmem:[%s519 + $0x20] sm:$0xff]
      %v543 = vld [vmem:[%s519 + $0x28] sm:$0xff]
      %v544 = vld [vmem:[%s519 + $0x30] sm:$0xff]
      %v545 = vld [vmem:[%s519 + $0x38] sm:$0xff]
      %v546 = vld [vmem:[%s519 + $0x40] sm:$0xff]
      %v547 = vld [vmem:[%s519 + $0x48] sm:$0xff]
      %v548 = vld [vmem:[%s519 + $0x50] sm:$0xff]
      %v549 = vld [vmem:[%s519 + $0x58] sm:$0xff]
      %v550 = vld [vmem:[%s519 + $0x60] sm:$0xff]
      %v551 = vld [vmem:[%s519 + $0x68] sm:$0xff]
      %v552 = vld [vmem:[%s519 + $0x70] sm:$0xff]
      %v553 = vld [vmem:[%s519 + $0x78] sm:$0xff]
      %v554 = vpack.c.bf16 %v539, %v538
      %v555 = vpack.c.bf16 %v541, %v540
      %v556 = vpack.c.bf16 %v543, %v542
      %v557 = vpack.c.bf16 %v545, %v544
      %v558 = vpack.c.bf16 %v547, %v546
      %v559 = vpack.c.bf16 %v549, %v548
      %v560 = vpack.c.bf16 %v551, %v550
      %v561 = vpack.c.bf16 %v553, %v552
      %v562 = vld [vmem:[%s524] sm:$0xff]
      %v563 = vld [vmem:[%s524 + $0x8] sm:$0xff]
      %v564 = vld [vmem:[%s524 + $0x10] sm:$0xff]
      %v565 = vld [vmem:[%s524 + $0x18] sm:$0xff]
      %v566 = vld [vmem:[%s524 + $0x20] sm:$0xff]
      %v567 = vld [vmem:[%s524 + $0x28] sm:$0xff]
      %v568 = vld [vmem:[%s524 + $0x30] sm:$0xff]
      %v569 = vld [vmem:[%s524 + $0x38] sm:$0xff]
      %v570 = vld [vmem:[%s524 + $0x40] sm:$0xff]
      %v571 = vld [vmem:[%s524 + $0x48] sm:$0xff]
      %v572 = vld [vmem:[%s524 + $0x50] sm:$0xff]
      %v573 = vld [vmem:[%s524 + $0x58] sm:$0xff]
      %v574 = vld [vmem:[%s524 + $0x60] sm:$0xff]
      %v575 = vld [vmem:[%s524 + $0x68] sm:$0xff]
      %v576 = vld [vmem:[%s524 + $0x70] sm:$0xff]
      %v577 = vld [vmem:[%s524 + $0x78] sm:$0xff]
      %v578 = vld [vmem:[%s524 + $0x80] sm:$0xff]
      %v579 = vld [vmem:[%s524 + $0x88] sm:$0xff]
      %v580 = vld [vmem:[%s524 + $0x90] sm:$0xff]
      %v581 = vld [vmem:[%s524 + $0x98] sm:$0xff]
      %v582 = vld [vmem:[%s524 + $0xa0] sm:$0xff]
      %v583 = vld [vmem:[%s524 + $0xa8] sm:$0xff]
      %v584 = vld [vmem:[%s524 + $0xb0] sm:$0xff]
      %v585 = vld [vmem:[%s524 + $0xb8] sm:$0xff]
      %v586 = vld [vmem:[%s524 + $0xc0] sm:$0xff]
      %v587 = vld [vmem:[%s524 + $0xc8] sm:$0xff]
      %v588 = vld [vmem:[%s524 + $0xd0] sm:$0xff]
      %v589 = vld [vmem:[%s524 + $0xd8] sm:$0xff]
      %v590 = vld [vmem:[%s524 + $0xe0] sm:$0xff]
      %v591 = vld [vmem:[%s524 + $0xe8] sm:$0xff]
      %v592 = vld [vmem:[%s524 + $0xf0] sm:$0xff]
      %v593 = vld [vmem:[%s524 + $0xf8] sm:$0xff]
      %v594 = vld [vmem:[%s529] sm:$0xff]
      %v595 = vld [vmem:[%s529 + $0x8] sm:$0xff]
      %v596 = vld [vmem:[%s529 + $0x10] sm:$0xff]
      %v597 = vld [vmem:[%s529 + $0x18] sm:$0xff]
      %v598 = vld [vmem:[%s529 + $0x20] sm:$0xff]
      %v599 = vld [vmem:[%s529 + $0x28] sm:$0xff]
      %v600 = vld [vmem:[%s529 + $0x30] sm:$0xff]
      %v601 = vld [vmem:[%s529 + $0x38] sm:$0xff]
      %v602 = vld [vmem:[%s529 + $0x40] sm:$0xff]
      %v603 = vld [vmem:[%s529 + $0x48] sm:$0xff]
      %v604 = vld [vmem:[%s529 + $0x50] sm:$0xff]
      %v605 = vld [vmem:[%s529 + $0x58] sm:$0xff]
      %v606 = vld [vmem:[%s529 + $0x60] sm:$0xff]
      %v607 = vld [vmem:[%s529 + $0x68] sm:$0xff]
      %v608 = vld [vmem:[%s529 + $0x70] sm:$0xff]
      %v609 = vld [vmem:[%s529 + $0x78] sm:$0xff]
      %v610 = vld [vmem:[%s529 + $0x80] sm:$0xff]
      %v611 = vld [vmem:[%s529 + $0x88] sm:$0xff]
      %v612 = vld [vmem:[%s529 + $0x90] sm:$0xff]
      %v613 = vld [vmem:[%s529 + $0x98] sm:$0xff]
      %v614 = vld [vmem:[%s529 + $0xa0] sm:$0xff]
      %v615 = vld [vmem:[%s529 + $0xa8] sm:$0xff]
      %v616 = vld [vmem:[%s529 + $0xb0] sm:$0xff]
      %v617 = vld [vmem:[%s529 + $0xb8] sm:$0xff]
      %v618 = vld [vmem:[%s529 + $0xc0] sm:$0xff]
      %v619 = vld [vmem:[%s529 + $0xc8] sm:$0xff]
      %v620 = vld [vmem:[%s529 + $0xd0] sm:$0xff]
      %v621 = vld [vmem:[%s529 + $0xd8] sm:$0xff]
      %v622 = vld [vmem:[%s529 + $0xe0] sm:$0xff]
      %v623 = vld [vmem:[%s529 + $0xe8] sm:$0xff]
      %v624 = vld [vmem:[%s529 + $0xf0] sm:$0xff]
      %v625 = vld [vmem:[%s529 + $0xf8] sm:$0xff]
      %v626 = vld [vmem:[%s3] sm:$0xf]
      %v627 = vld [vmem:[%s3 + $0x4] sm:$0xf]
      %v628 = vld [vmem:[%s3 + $0x8] sm:$0xf]
      %v629 = vld [vmem:[%s3 + $0xc] sm:$0xf]
      %v630 = vld [vmem:[%s3 + $0x10] sm:$0xf]
      %v631 = vld [vmem:[%s3 + $0x14] sm:$0xf]
      %v632 = vld [vmem:[%s3 + $0x18] sm:$0xf]
      %v633 = vld [vmem:[%s3 + $0x1c] sm:$0xf]
      %v634 = vld [vmem:[%s3 + $0x20] sm:$0xf]
      %v635 = vld [vmem:[%s3 + $0x24] sm:$0xf]
      %v636 = vld [vmem:[%s3 + $0x28] sm:$0xf]
      %v637 = vld [vmem:[%s3 + $0x2c] sm:$0xf]
      %v638 = vld [vmem:[%s3 + $0x30] sm:$0xf]
      %v639 = vld [vmem:[%s3 + $0x34] sm:$0xf]
      %v640 = vld [vmem:[%s3 + $0x38] sm:$0xf]
      %v641 = vld [vmem:[%s3 + $0x3c] sm:$0xf]
      %v642 = vld [vmem:[%s3 + $0x40] sm:$0xf]
      %v643 = vld [vmem:[%s3 + $0x44] sm:$0xf]
      %v644 = vld [vmem:[%s3 + $0x48] sm:$0xf]
      %v645 = vld [vmem:[%s3 + $0x4c] sm:$0xf]
      %v646 = vld [vmem:[%s3 + $0x50] sm:$0xf]
      %v647 = vld [vmem:[%s3 + $0x54] sm:$0xf]
      %v648 = vld [vmem:[%s3 + $0x58] sm:$0xf]
      %v649 = vld [vmem:[%s3 + $0x5c] sm:$0xf]
      %v650 = vld [vmem:[%s3 + $0x60] sm:$0xf]
      %v651 = vld [vmem:[%s3 + $0x64] sm:$0xf]
      %v652 = vld [vmem:[%s3 + $0x68] sm:$0xf]
      %v653 = vld [vmem:[%s3 + $0x6c] sm:$0xf]
      %v654 = vld [vmem:[%s3 + $0x70] sm:$0xf]
      %v655 = vld [vmem:[%s3 + $0x74] sm:$0xf]
      %v656 = vld [vmem:[%s3 + $0x78] sm:$0xf]
      %v657 = vld [vmem:[%s3 + $0x7c] sm:$0xf]
      %659 = vset.pattern.permute.xlu0 0
      %660 = vperm.xlu0 %659, %v562
      %v661 = vpop.permute.xlu0 %660
      %664 = vset.pattern.permute.xlu0 0
      %665 = vperm.xlu0 %664, %v563
      %v666 = vpop.permute.xlu0 %665
      %669 = vset.pattern.permute.xlu0 0
      %670 = vperm.xlu0 %669, %v564
      %v671 = vpop.permute.xlu0 %670
      %674 = vset.pattern.permute.xlu0 0
      %675 = vperm.xlu0 %674, %v565
      %v676 = vpop.permute.xlu0 %675
      %679 = vset.pattern.permute.xlu0 0
      %680 = vperm.xlu0 %679, %v566
      %v681 = vpop.permute.xlu0 %680
      %684 = vset.pattern.permute.xlu0 0
      %685 = vperm.xlu0 %684, %v567
      %v686 = vpop.permute.xlu0 %685
      %689 = vset.pattern.permute.xlu0 0
      %690 = vperm.xlu0 %689, %v568
      %v691 = vpop.permute.xlu0 %690
      %694 = vset.pattern.permute.xlu0 0
      %695 = vperm.xlu0 %694, %v569
      %v696 = vpop.permute.xlu0 %695
      %699 = vset.pattern.permute.xlu0 0
      %700 = vperm.xlu0 %699, %v570
      %v701 = vpop.permute.xlu0 %700
      %704 = vset.pattern.permute.xlu0 0
      %705 = vperm.xlu0 %704, %v571
      %v706 = vpop.permute.xlu0 %705
      %709 = vset.pattern.permute.xlu0 0
      %710 = vperm.xlu0 %709, %v572
      %v711 = vpop.permute.xlu0 %710
      %714 = vset.pattern.permute.xlu0 0
      %715 = vperm.xlu0 %714, %v573
      %v716 = vpop.permute.xlu0 %715
      %719 = vset.pattern.permute.xlu0 0
      %720 = vperm.xlu0 %719, %v574
      %v721 = vpop.permute.xlu0 %720
      %724 = vset.pattern.permute.xlu0 0
      %725 = vperm.xlu0 %724, %v575
      %v726 = vpop.permute.xlu0 %725
      %729 = vset.pattern.permute.xlu0 0
      %730 = vperm.xlu0 %729, %v576
      %v731 = vpop.permute.xlu0 %730
      %734 = vset.pattern.permute.xlu0 0
      %735 = vperm.xlu0 %734, %v577
      %v736 = vpop.permute.xlu0 %735
      %739 = vset.pattern.permute.xlu0 0
      %740 = vperm.xlu0 %739, %v578
      %v741 = vpop.permute.xlu0 %740
      %744 = vset.pattern.permute.xlu0 0
      %745 = vperm.xlu0 %744, %v579
      %v746 = vpop.permute.xlu0 %745
      %749 = vset.pattern.permute.xlu0 0
      %750 = vperm.xlu0 %749, %v580
      %v751 = vpop.permute.xlu0 %750
      %754 = vset.pattern.permute.xlu0 0
      %755 = vperm.xlu0 %754, %v581
      %v756 = vpop.permute.xlu0 %755
      %759 = vset.pattern.permute.xlu0 0
      %760 = vperm.xlu0 %759, %v582
      %v761 = vpop.permute.xlu0 %760
      %764 = vset.pattern.permute.xlu0 0
      %765 = vperm.xlu0 %764, %v583
      %v766 = vpop.permute.xlu0 %765
      %769 = vset.pattern.permute.xlu0 0
      %770 = vperm.xlu0 %769, %v584
      %v771 = vpop.permute.xlu0 %770
      %774 = vset.pattern.permute.xlu0 0
      %775 = vperm.xlu0 %774, %v585
      %v776 = vpop.permute.xlu0 %775
      %779 = vset.pattern.permute.xlu0 0
      %780 = vperm.xlu0 %779, %v586
      %v781 = vpop.permute.xlu0 %780
      %784 = vset.pattern.permute.xlu0 0
      %785 = vperm.xlu0 %784, %v587
      %v786 = vpop.permute.xlu0 %785
      %789 = vset.pattern.permute.xlu0 0
      %790 = vperm.xlu0 %789, %v588
      %v791 = vpop.permute.xlu0 %790
      %794 = vset.pattern.permute.xlu0 0
      %795 = vperm.xlu0 %794, %v589
      %v796 = vpop.permute.xlu0 %795
      %799 = vset.pattern.permute.xlu0 0
      %800 = vperm.xlu0 %799, %v590
      %v801 = vpop.permute.xlu0 %800
      %804 = vset.pattern.permute.xlu0 0
      %805 = vperm.xlu0 %804, %v591
      %v806 = vpop.permute.xlu0 %805
      %809 = vset.pattern.permute.xlu0 0
      %810 = vperm.xlu0 %809, %v592
      %v811 = vpop.permute.xlu0 %810
      %814 = vset.pattern.permute.xlu0 0
      %815 = vperm.xlu0 %814, %v593
      %v816 = vpop.permute.xlu0 %815
      %v850 = vunpack.c.l.b16 %v626
      %v851 = vunpack.c.l.b16 %v627
      %v852 = vunpack.c.l.b16 %v628
      %v853 = vunpack.c.l.b16 %v629
      %v854 = vunpack.c.l.b16 %v630
      %v855 = vunpack.c.l.b16 %v631
      %v856 = vunpack.c.l.b16 %v632
      %v857 = vunpack.c.l.b16 %v633
      %v858 = vunpack.c.l.b16 %v634
      %v859 = vunpack.c.l.b16 %v635
      %v860 = vunpack.c.l.b16 %v636
      %v861 = vunpack.c.l.b16 %v637
      %v862 = vunpack.c.l.b16 %v638
      %v863 = vunpack.c.l.b16 %v639
      %v864 = vunpack.c.l.b16 %v640
      %v865 = vunpack.c.l.b16 %v641
      %v866 = vunpack.c.l.b16 %v642
      %v867 = vunpack.c.l.b16 %v643
      %v868 = vunpack.c.l.b16 %v644
      %v869 = vunpack.c.l.b16 %v645
      %v870 = vunpack.c.l.b16 %v646
      %v871 = vunpack.c.l.b16 %v647
      %v872 = vunpack.c.l.b16 %v648
      %v873 = vunpack.c.l.b16 %v649
      %v874 = vunpack.c.l.b16 %v650
      %v875 = vunpack.c.l.b16 %v651
      %v876 = vunpack.c.l.b16 %v652
      %v877 = vunpack.c.l.b16 %v653
      %v878 = vunpack.c.l.b16 %v654
      %v879 = vunpack.c.l.b16 %v655
      %v880 = vunpack.c.l.b16 %v656
      %v881 = vunpack.c.l.b16 %v657
      %v882 = vpack.c.b16 %v851, %v850
      %v883 = vpack.c.b16 %v853, %v852
      %v884 = vpack.c.b16 %v855, %v854
      %v885 = vpack.c.b16 %v857, %v856
      %v886 = vpack.c.b16 %v859, %v858
      %v887 = vpack.c.b16 %v861, %v860
      %v888 = vpack.c.b16 %v863, %v862
      %v889 = vpack.c.b16 %v865, %v864
      %v890 = vpack.c.b16 %v867, %v866
      %v891 = vpack.c.b16 %v869, %v868
      %v892 = vpack.c.b16 %v871, %v870
      %v893 = vpack.c.b16 %v873, %v872
      %v894 = vpack.c.b16 %v875, %v874
      %v895 = vpack.c.b16 %v877, %v876
      %v896 = vpack.c.b16 %v879, %v878
      %v897 = vpack.c.b16 %v881, %v880
      %914 = vmatprep.subr.bf16.mxu0 0
      %915 = vmatpush1.bf16.msra.mxu0 %v561
      %916 = vmatprep.subr.bf16.mxu0 0
      %917 = vmatpush1.bf16.msra.mxu0 %v560
      %918 = vmatprep.subr.bf16.mxu0 0
      %919 = vmatpush1.bf16.msra.mxu0 %v559
      %920 = vmatprep.subr.bf16.mxu0 0
      %921 = vmatpush1.bf16.msra.mxu0 %v558
      %922 = vmatprep.subr.bf16.mxu0 0
      %923 = vmatpush1.bf16.msra.mxu0 %v557
      %924 = vmatprep.subr.bf16.mxu0 0
      %925 = vmatpush1.bf16.msra.mxu0 %v556
      %926 = vmatprep.subr.bf16.mxu0 0
      %927 = vmatpush1.bf16.msra.mxu0 %v555
      %928 = vmatprep.subr.bf16.mxu0 0
      %929 = vmatpush1.bf16.msra.mxu0 %v554
      %930 = vmatprep.subr.bf16.mxu0 0
      %931 = vmatpush2.bf16.msra.mxu0 0
      %932 = vmatprep.subr.bf16.mxu0 0
      %933 = vmatpush2.bf16.msra.mxu0 0
      %934 = vmatprep.subr.bf16.mxu0 0
      %935 = vmatpush2.bf16.msra.mxu0 0
      %936 = vmatprep.subr.bf16.mxu0 0
      %937 = vmatpush2.bf16.msra.mxu0 0
      %938 = vmatprep.subr.bf16.mxu0 0
      %939 = vmatpush2.bf16.msra.mxu0 0
      %940 = vmatprep.subr.bf16.mxu0 0
      %941 = vmatpush2.bf16.msra.mxu0 0
      %942 = vmatprep.subr.bf16.mxu0 0
      %943 = vmatpush2.bf16.msra.mxu0 0
      %944 = vmatprep.subr.bf16.mxu0 0
      %945 = vmatpush2.bf16.msra.mxu0 0
      %946 = vmatprep.mubr.bf16.mxu0 0
      %947 = vmatmul.mubr.bf16.gmra.mxu0 %v882
      %v948 = vpop.f32.mrf.mxu0
      %v949 = vadd.f32 %v661, %v948
      %v950 = vpop.f32.mrf.mxu0
      %v951 = vpop.f32.mrf.mxu0
      %v952 = vadd.f32 %v666, %v951
      %v953 = vpop.f32.mrf.mxu0
      %954 = vmatprep.mubr.bf16.mxu0 0
      %955 = vmatmul.mubr.bf16.gmra.mxu0 %v883
      %v956 = vpop.f32.mrf.mxu0
      %v957 = vadd.f32 %v671, %v956
      %v958 = vpop.f32.mrf.mxu0
      %v959 = vpop.f32.mrf.mxu0
      %v960 = vadd.f32 %v676, %v959
      %v961 = vpop.f32.mrf.mxu0
      %962 = vmatprep.mubr.bf16.mxu0 0
      %963 = vmatmul.mubr.bf16.gmra.mxu0 %v884
      %v964 = vpop.f32.mrf.mxu0
      %v965 = vadd.f32 %v681, %v964
      %v966 = vpop.f32.mrf.mxu0
      %v967 = vpop.f32.mrf.mxu0
      %v968 = vadd.f32 %v686, %v967
      %v969 = vpop.f32.mrf.mxu0
      %970 = vmatprep.mubr.bf16.mxu0 0
      %971 = vmatmul.mubr.bf16.gmra.mxu0 %v885
      %v972 = vpop.f32.mrf.mxu0
      %v973 = vadd.f32 %v691, %v972
      %v974 = vpop.f32.mrf.mxu0
      %v975 = vpop.f32.mrf.mxu0
      %v976 = vadd.f32 %v696, %v975
      %v977 = vpop.f32.mrf.mxu0
      %978 = vmatprep.mubr.bf16.mxu0 0
      %979 = vmatmul.mubr.bf16.gmra.mxu0 %v886
      %v980 = vpop.f32.mrf.mxu0
      %v981 = vadd.f32 %v701, %v980
      %v982 = vpop.f32.mrf.mxu0
      %v983 = vpop.f32.mrf.mxu0
      %v984 = vadd.f32 %v706, %v983
      %v985 = vpop.f32.mrf.mxu0
      %986 = vmatprep.mubr.bf16.mxu0 0
      %987 = vmatmul.mubr.bf16.gmra.mxu0 %v887
      %v988 = vpop.f32.mrf.mxu0
      %v989 = vadd.f32 %v711, %v988
      %v990 = vpop.f32.mrf.mxu0
      %v991 = vpop.f32.mrf.mxu0
      %v992 = vadd.f32 %v716, %v991
      %v993 = vpop.f32.mrf.mxu0
      %994 = vmatprep.mubr.bf16.mxu0 0
      %995 = vmatmul.mubr.bf16.gmra.mxu0 %v888
      %v996 = vpop.f32.mrf.mxu0
      %v997 = vadd.f32 %v721, %v996
      %v998 = vpop.f32.mrf.mxu0
      %v999 = vpop.f32.mrf.mxu0
      %v1000 = vadd.f32 %v726, %v999
      %v1001 = vpop.f32.mrf.mxu0
      %1002 = vmatprep.mubr.bf16.mxu0 0
      %1003 = vmatmul.mubr.bf16.gmra.mxu0 %v889
      %v1004 = vpop.f32.mrf.mxu0
      %v1005 = vadd.f32 %v731, %v1004
      %v1006 = vpop.f32.mrf.mxu0
      %v1007 = vpop.f32.mrf.mxu0
      %v1008 = vadd.f32 %v736, %v1007
      %v1009 = vpop.f32.mrf.mxu0
      %1010 = vmatprep.mubr.bf16.mxu0 0
      %1011 = vmatmul.mubr.bf16.gmra.mxu0 %v890
      %v1012 = vpop.f32.mrf.mxu0
      %v1013 = vadd.f32 %v741, %v1012
      %v1014 = vpop.f32.mrf.mxu0
      %v1015 = vpop.f32.mrf.mxu0
      %v1016 = vadd.f32 %v746, %v1015
      %v1017 = vpop.f32.mrf.mxu0
      %1018 = vmatprep.mubr.bf16.mxu0 0
      %1019 = vmatmul.mubr.bf16.gmra.mxu0 %v891
      %v1020 = vpop.f32.mrf.mxu0
      %v1021 = vadd.f32 %v751, %v1020
      %v1022 = vpop.f32.mrf.mxu0
      %v1023 = vpop.f32.mrf.mxu0
      %v1024 = vadd.f32 %v756, %v1023
      %v1025 = vpop.f32.mrf.mxu0
      %1026 = vmatprep.mubr.bf16.mxu0 0
      %1027 = vmatmul.mubr.bf16.gmra.mxu0 %v892
      %v1028 = vpop.f32.mrf.mxu0
      %v1029 = vadd.f32 %v761, %v1028
      %v1030 = vpop.f32.mrf.mxu0
      %v1031 = vpop.f32.mrf.mxu0
      %v1032 = vadd.f32 %v766, %v1031
      %v1033 = vpop.f32.mrf.mxu0
      %1034 = vmatprep.mubr.bf16.mxu0 0
      %1035 = vmatmul.mubr.bf16.gmra.mxu0 %v893
      %v1036 = vpop.f32.mrf.mxu0
      %v1037 = vadd.f32 %v771, %v1036
      %v1038 = vpop.f32.mrf.mxu0
      %v1039 = vpop.f32.mrf.mxu0
      %v1040 = vadd.f32 %v776, %v1039
      %v1041 = vpop.f32.mrf.mxu0
      %1042 = vmatprep.mubr.bf16.mxu0 0
      %1043 = vmatmul.mubr.bf16.gmra.mxu0 %v894
      %v1044 = vpop.f32.mrf.mxu0
      %v1045 = vadd.f32 %v781, %v1044
      %v1046 = vpop.f32.mrf.mxu0
      %v1047 = vpop.f32.mrf.mxu0
      %v1048 = vadd.f32 %v786, %v1047
      %v1049 = vpop.f32.mrf.mxu0
      %1050 = vmatprep.mubr.bf16.mxu0 0
      %1051 = vmatmul.mubr.bf16.gmra.mxu0 %v895
      %v1052 = vpop.f32.mrf.mxu0
      %v1053 = vadd.f32 %v791, %v1052
      %v1054 = vpop.f32.mrf.mxu0
      %v1055 = vpop.f32.mrf.mxu0
      %v1056 = vadd.f32 %v796, %v1055
      %v1057 = vpop.f32.mrf.mxu0
      %1058 = vmatprep.mubr.bf16.mxu0 0
      %1059 = vmatmul.mubr.bf16.gmra.mxu0 %v896
      %v1060 = vpop.f32.mrf.mxu0
      %v1061 = vadd.f32 %v801, %v1060
      %v1062 = vpop.f32.mrf.mxu0
      %v1063 = vpop.f32.mrf.mxu0
      %v1064 = vadd.f32 %v806, %v1063
      %v1065 = vpop.f32.mrf.mxu0
      %1066 = vmatprep.mubr.bf16.mxu0 0
      %1067 = vmatmul.mubr.bf16.gmra.mxu0 %v897
      %v1068 = vpop.f32.mrf.mxu0
      %v1069 = vadd.f32 %v811, %v1068
      %v1070 = vpop.f32.mrf.mxu0
      %v1071 = vpop.f32.mrf.mxu0
      %v1072 = vadd.f32 %v816, %v1071
      %v1073 = vpop.f32.mrf.mxu0
      %1074 = vdwg.mxu0
      %v1075 = vmax.f32 %v949, 0.0
      %v1076 = vmax.f32 %v952, 0.0
      %v1077 = vmax.f32 %v957, 0.0
      %v1078 = vmax.f32 %v960, 0.0
      %v1079 = vmax.f32 %v965, 0.0
      %v1080 = vmax.f32 %v968, 0.0
      %v1081 = vmax.f32 %v973, 0.0
      %v1082 = vmax.f32 %v976, 0.0
      %v1083 = vmax.f32 %v981, 0.0
      %v1084 = vmax.f32 %v984, 0.0
      %v1085 = vmax.f32 %v989, 0.0
      %v1086 = vmax.f32 %v992, 0.0
      %v1087 = vmax.f32 %v997, 0.0
      %v1088 = vmax.f32 %v1000, 0.0
      %v1089 = vmax.f32 %v1005, 0.0
      %v1090 = vmax.f32 %v1008, 0.0
      %v1091 = vpack.c.bf16 %v1076, %v1075
      %v1092 = vpack.c.bf16 %v1078, %v1077
      %v1093 = vpack.c.bf16 %v1080, %v1079
      %v1094 = vpack.c.bf16 %v1082, %v1081
      %v1095 = vpack.c.bf16 %v1084, %v1083
      %v1096 = vpack.c.bf16 %v1086, %v1085
      %v1097 = vpack.c.bf16 %v1088, %v1087
      %v1098 = vpack.c.bf16 %v1090, %v1089
      %v1099 = vld [vmem:[%s4] sm:$0xf]
      %v1100 = vld [vmem:[%s4 + $0x4] sm:$0xf]
      %v1101 = vld [vmem:[%s4 + $0x8] sm:$0xf]
      %v1102 = vld [vmem:[%s4 + $0xc] sm:$0xf]
      %v1103 = vld [vmem:[%s4 + $0x10] sm:$0xf]
      %v1104 = vld [vmem:[%s4 + $0x14] sm:$0xf]
      %v1105 = vld [vmem:[%s4 + $0x18] sm:$0xf]
      %v1106 = vld [vmem:[%s4 + $0x1c] sm:$0xf]
      %v1107 = vld [vmem:[%s4 + $0x20] sm:$0xf]
      %v1108 = vld [vmem:[%s4 + $0x24] sm:$0xf]
      %v1109 = vld [vmem:[%s4 + $0x28] sm:$0xf]
      %v1110 = vld [vmem:[%s4 + $0x2c] sm:$0xf]
      %v1111 = vld [vmem:[%s4 + $0x30] sm:$0xf]
      %v1112 = vld [vmem:[%s4 + $0x34] sm:$0xf]
      %v1113 = vld [vmem:[%s4 + $0x38] sm:$0xf]
      %v1114 = vld [vmem:[%s4 + $0x3c] sm:$0xf]
      %v1131 = vunpack.c.l.b16 %v1099
      %v1132 = vunpack.c.l.b16 %v1100
      %v1133 = vunpack.c.l.b16 %v1101
      %v1134 = vunpack.c.l.b16 %v1102
      %v1135 = vunpack.c.l.b16 %v1103
      %v1136 = vunpack.c.l.b16 %v1104
      %v1137 = vunpack.c.l.b16 %v1105
      %v1138 = vunpack.c.l.b16 %v1106
      %v1139 = vunpack.c.l.b16 %v1107
      %v1140 = vunpack.c.l.b16 %v1108
      %v1141 = vunpack.c.l.b16 %v1109
      %v1142 = vunpack.c.l.b16 %v1110
      %v1143 = vunpack.c.l.b16 %v1111
      %v1144 = vunpack.c.l.b16 %v1112
      %v1145 = vunpack.c.l.b16 %v1113
      %v1146 = vunpack.c.l.b16 %v1114
      %v1147 = vpack.c.b16 %v1132, %v1131
      %v1148 = vpack.c.b16 %v1134, %v1133
      %v1149 = vpack.c.b16 %v1136, %v1135
      %v1150 = vpack.c.b16 %v1138, %v1137
      %v1151 = vpack.c.b16 %v1140, %v1139
      %v1152 = vpack.c.b16 %v1142, %v1141
      %v1153 = vpack.c.b16 %v1144, %v1143
      %v1154 = vpack.c.b16 %v1146, %v1145
      %1163 = vmatprep.subr.bf16.mxu0 0
      %1164 = vmatpush1.bf16.msra.mxu0 %v1098
      %1165 = vmatprep.subr.bf16.mxu0 0
      %1166 = vmatpush1.bf16.msra.mxu0 %v1097
      %1167 = vmatprep.subr.bf16.mxu0 0
      %1168 = vmatpush1.bf16.msra.mxu0 %v1096
      %1169 = vmatprep.subr.bf16.mxu0 0
      %1170 = vmatpush1.bf16.msra.mxu0 %v1095
      %1171 = vmatprep.subr.bf16.mxu0 0
      %1172 = vmatpush1.bf16.msra.mxu0 %v1094
      %1173 = vmatprep.subr.bf16.mxu0 0
      %1174 = vmatpush1.bf16.msra.mxu0 %v1093
      %1175 = vmatprep.subr.bf16.mxu0 0
      %1176 = vmatpush1.bf16.msra.mxu0 %v1092
      %1177 = vmatprep.subr.bf16.mxu0 0
      %1178 = vmatpush1.bf16.msra.mxu0 %v1091
      %1179 = vmatprep.subr.bf16.mxu0 0
      %1180 = vmatpush2.bf16.msra.mxu0 0
      %1181 = vmatprep.subr.bf16.mxu0 0
      %1182 = vmatpush2.bf16.msra.mxu0 0
      %1183 = vmatprep.subr.bf16.mxu0 0
      %1184 = vmatpush2.bf16.msra.mxu0 0
      %1185 = vmatprep.subr.bf16.mxu0 0
      %1186 = vmatpush2.bf16.msra.mxu0 0
      %1187 = vmatprep.subr.bf16.mxu0 0
      %1188 = vmatpush2.bf16.msra.mxu0 0
      %1189 = vmatprep.subr.bf16.mxu0 0
      %1190 = vmatpush2.bf16.msra.mxu0 0
      %1191 = vmatprep.subr.bf16.mxu0 0
      %1192 = vmatpush2.bf16.msra.mxu0 0
      %1193 = vmatprep.subr.bf16.mxu0 0
      %1194 = vmatpush2.bf16.msra.mxu0 0
      %1195 = vmatprep.mubr.bf16.mxu0 0
      %1196 = vmatmul.mubr.bf16.gmra.mxu0 %v1147
      %v1197 = vpop.f32.mrf.mxu0
      %v1198 = vadd.f32 %v1013, %v1197
      %v1199 = vpop.f32.mrf.mxu0
      %v1200 = vpop.f32.mrf.mxu0
      %v1201 = vadd.f32 %v1016, %v1200
      %v1202 = vpop.f32.mrf.mxu0
      %1203 = vmatprep.mubr.bf16.mxu0 0
      %1204 = vmatmul.mubr.bf16.gmra.mxu0 %v1148
      %v1205 = vpop.f32.mrf.mxu0
      %v1206 = vadd.f32 %v1021, %v1205
      %v1207 = vpop.f32.mrf.mxu0
      %v1208 = vpop.f32.mrf.mxu0
      %v1209 = vadd.f32 %v1024, %v1208
      %v1210 = vpop.f32.mrf.mxu0
      %1211 = vmatprep.mubr.bf16.mxu0 0
      %1212 = vmatmul.mubr.bf16.gmra.mxu0 %v1149
      %v1213 = vpop.f32.mrf.mxu0
      %v1214 = vadd.f32 %v1029, %v1213
      %v1215 = vpop.f32.mrf.mxu0
      %v1216 = vpop.f32.mrf.mxu0
      %v1217 = vadd.f32 %v1032, %v1216
      %v1218 = vpop.f32.mrf.mxu0
      %1219 = vmatprep.mubr.bf16.mxu0 0
      %1220 = vmatmul.mubr.bf16.gmra.mxu0 %v1150
      %v1221 = vpop.f32.mrf.mxu0
      %v1222 = vadd.f32 %v1037, %v1221
      %v1223 = vpop.f32.mrf.mxu0
      %v1224 = vpop.f32.mrf.mxu0
      %v1225 = vadd.f32 %v1040, %v1224
      %v1226 = vpop.f32.mrf.mxu0
      %1227 = vmatprep.mubr.bf16.mxu0 0
      %1228 = vmatmul.mubr.bf16.gmra.mxu0 %v1151
      %v1229 = vpop.f32.mrf.mxu0
      %v1230 = vadd.f32 %v1045, %v1229
      %v1231 = vpop.f32.mrf.mxu0
      %v1232 = vpop.f32.mrf.mxu0
      %v1233 = vadd.f32 %v1048, %v1232
      %v1234 = vpop.f32.mrf.mxu0
      %1235 = vmatprep.mubr.bf16.mxu0 0
      %1236 = vmatmul.mubr.bf16.gmra.mxu0 %v1152
      %v1237 = vpop.f32.mrf.mxu0
      %v1238 = vadd.f32 %v1053, %v1237
      %v1239 = vpop.f32.mrf.mxu0
      %v1240 = vpop.f32.mrf.mxu0
      %v1241 = vadd.f32 %v1056, %v1240
      %v1242 = vpop.f32.mrf.mxu0
      %1243 = vmatprep.mubr.bf16.mxu0 0
      %1244 = vmatmul.mubr.bf16.gmra.mxu0 %v1153
      %v1245 = vpop.f32.mrf.mxu0
      %v1246 = vadd.f32 %v1061, %v1245
      %v1247 = vpop.f32.mrf.mxu0
      %v1248 = vpop.f32.mrf.mxu0
      %v1249 = vadd.f32 %v1064, %v1248
      %v1250 = vpop.f32.mrf.mxu0
      %1251 = vmatprep.mubr.bf16.mxu0 0
      %1252 = vmatmul.mubr.bf16.gmra.mxu0 %v1154
      %v1253 = vpop.f32.mrf.mxu0
      %v1254 = vadd.f32 %v1069, %v1253
      %v1255 = vpop.f32.mrf.mxu0
      %v1256 = vpop.f32.mrf.mxu0
      %v1257 = vadd.f32 %v1072, %v1256
      %v1258 = vpop.f32.mrf.mxu0
      %1259 = vdwg.mxu0
      %v1260 = vpack.c.bf16 %v1201, %v1198
      %v1261 = vpack.c.bf16 %v1209, %v1206
      %v1262 = vpack.c.bf16 %v1217, %v1214
      %v1263 = vpack.c.bf16 %v1225, %v1222
      %v1264 = vpack.c.bf16 %v1233, %v1230
      %v1265 = vpack.c.bf16 %v1241, %v1238
      %v1266 = vpack.c.bf16 %v1249, %v1246
      %v1267 = vpack.c.bf16 %v1257, %v1254
      %v1268 = vld [vmem:[%s5] sm:$0xf]
      %v1269 = vld [vmem:[%s5 + $0x4] sm:$0xf]
      %v1270 = vld [vmem:[%s5 + $0x8] sm:$0xf]
      %v1271 = vld [vmem:[%s5 + $0xc] sm:$0xf]
      %v1272 = vld [vmem:[%s5 + $0x10] sm:$0xf]
      %v1273 = vld [vmem:[%s5 + $0x14] sm:$0xf]
      %v1274 = vld [vmem:[%s5 + $0x18] sm:$0xf]
      %v1275 = vld [vmem:[%s5 + $0x1c] sm:$0xf]
      %v1276 = vld [vmem:[%s5 + $0x20] sm:$0xf]
      %v1277 = vld [vmem:[%s5 + $0x24] sm:$0xf]
      %v1278 = vld [vmem:[%s5 + $0x28] sm:$0xf]
      %v1279 = vld [vmem:[%s5 + $0x2c] sm:$0xf]
      %v1280 = vld [vmem:[%s5 + $0x30] sm:$0xf]
      %v1281 = vld [vmem:[%s5 + $0x34] sm:$0xf]
      %v1282 = vld [vmem:[%s5 + $0x38] sm:$0xf]
      %v1283 = vld [vmem:[%s5 + $0x3c] sm:$0xf]
      %v1284 = vld [vmem:[%s5 + $0x40] sm:$0xf]
      %v1285 = vld [vmem:[%s5 + $0x44] sm:$0xf]
      %v1286 = vld [vmem:[%s5 + $0x48] sm:$0xf]
      %v1287 = vld [vmem:[%s5 + $0x4c] sm:$0xf]
      %v1288 = vld [vmem:[%s5 + $0x50] sm:$0xf]
      %v1289 = vld [vmem:[%s5 + $0x54] sm:$0xf]
      %v1290 = vld [vmem:[%s5 + $0x58] sm:$0xf]
      %v1291 = vld [vmem:[%s5 + $0x5c] sm:$0xf]
      %v1292 = vld [vmem:[%s6] sm:$0xff]
      %v1293 = vld [vmem:[%s6 + $0x8] sm:$0xff]
      %v1294 = vld [vmem:[%s6 + $0x10] sm:$0xff]
      %v1295 = vld [vmem:[%s6 + $0x18] sm:$0xff]
      %v1296 = vld [vmem:[%s6 + $0x20] sm:$0xff]
      %v1297 = vld [vmem:[%s6 + $0x28] sm:$0xff]
      %v1298 = vld [vmem:[%s6 + $0x30] sm:$0xff]
      %v1299 = vld [vmem:[%s6 + $0x38] sm:$0xff]
      %v1300 = vld [vmem:[%s6 + $0x40] sm:$0xff]
      %v1301 = vld [vmem:[%s6 + $0x48] sm:$0xff]
      %v1302 = vld [vmem:[%s6 + $0x50] sm:$0xff]
      %v1303 = vld [vmem:[%s6 + $0x58] sm:$0xff]
      %v1304 = vld [vmem:[%s6 + $0x60] sm:$0xff]
      %v1305 = vld [vmem:[%s6 + $0x68] sm:$0xff]
      %v1306 = vld [vmem:[%s6 + $0x70] sm:$0xff]
      %v1307 = vld [vmem:[%s6 + $0x78] sm:$0xff]
      %v1308 = vld [vmem:[%s6 + $0x80] sm:$0xff]
      %v1309 = vld [vmem:[%s6 + $0x88] sm:$0xff]
      %v1310 = vld [vmem:[%s6 + $0x90] sm:$0xff]
      %v1311 = vld [vmem:[%s6 + $0x98] sm:$0xff]
      %v1312 = vld [vmem:[%s6 + $0xa0] sm:$0xff]
      %v1313 = vld [vmem:[%s6 + $0xa8] sm:$0xff]
      %v1314 = vld [vmem:[%s6 + $0xb0] sm:$0xff]
      %v1315 = vld [vmem:[%s6 + $0xb8] sm:$0xff]
      %1317 = vset.pattern.permute.xlu0 0
      %1318 = vperm.xlu0 %1317, %v1292
      %v1319 = vpop.permute.xlu0 %1318
      %1322 = vset.pattern.permute.xlu0 0
      %1323 = vperm.xlu0 %1322, %v1293
      %v1324 = vpop.permute.xlu0 %1323
      %1327 = vset.pattern.permute.xlu0 0
      %1328 = vperm.xlu0 %1327, %v1294
      %v1329 = vpop.permute.xlu0 %1328
      %1332 = vset.pattern.permute.xlu0 0
      %1333 = vperm.xlu0 %1332, %v1295
      %v1334 = vpop.permute.xlu0 %1333
      %1337 = vset.pattern.permute.xlu0 0
      %1338 = vperm.xlu0 %1337, %v1296
      %v1339 = vpop.permute.xlu0 %1338
      %1342 = vset.pattern.permute.xlu0 0
      %1343 = vperm.xlu0 %1342, %v1297
      %v1344 = vpop.permute.xlu0 %1343
      %1347 = vset.pattern.permute.xlu0 0
      %1348 = vperm.xlu0 %1347, %v1298
      %v1349 = vpop.permute.xlu0 %1348
      %1352 = vset.pattern.permute.xlu0 0
      %1353 = vperm.xlu0 %1352, %v1299
      %v1354 = vpop.permute.xlu0 %1353
      %1357 = vset.pattern.permute.xlu0 0
      %1358 = vperm.xlu0 %1357, %v1300
      %v1359 = vpop.permute.xlu0 %1358
      %1362 = vset.pattern.permute.xlu0 0
      %1363 = vperm.xlu0 %1362, %v1301
      %v1364 = vpop.permute.xlu0 %1363
      %1367 = vset.pattern.permute.xlu0 0
      %1368 = vperm.xlu0 %1367, %v1302
      %v1369 = vpop.permute.xlu0 %1368
      %1372 = vset.pattern.permute.xlu0 0
      %1373 = vperm.xlu0 %1372, %v1303
      %v1374 = vpop.permute.xlu0 %1373
      %1377 = vset.pattern.permute.xlu0 0
      %1378 = vperm.xlu0 %1377, %v1304
      %v1379 = vpop.permute.xlu0 %1378
      %1382 = vset.pattern.permute.xlu0 0
      %1383 = vperm.xlu0 %1382, %v1305
      %v1384 = vpop.permute.xlu0 %1383
      %1387 = vset.pattern.permute.xlu0 0
      %1388 = vperm.xlu0 %1387, %v1306
      %v1389 = vpop.permute.xlu0 %1388
      %1392 = vset.pattern.permute.xlu0 0
      %1393 = vperm.xlu0 %1392, %v1307
      %v1394 = vpop.permute.xlu0 %1393
      %1397 = vset.pattern.permute.xlu0 0
      %1398 = vperm.xlu0 %1397, %v1308
      %v1399 = vpop.permute.xlu0 %1398
      %1402 = vset.pattern.permute.xlu0 0
      %1403 = vperm.xlu0 %1402, %v1309
      %v1404 = vpop.permute.xlu0 %1403
      %1407 = vset.pattern.permute.xlu0 0
      %1408 = vperm.xlu0 %1407, %v1310
      %v1409 = vpop.permute.xlu0 %1408
      %1412 = vset.pattern.permute.xlu0 0
      %1413 = vperm.xlu0 %1412, %v1311
      %v1414 = vpop.permute.xlu0 %1413
      %1417 = vset.pattern.permute.xlu0 0
      %1418 = vperm.xlu0 %1417, %v1312
      %v1419 = vpop.permute.xlu0 %1418
      %1422 = vset.pattern.permute.xlu0 0
      %1423 = vperm.xlu0 %1422, %v1313
      %v1424 = vpop.permute.xlu0 %1423
      %1427 = vset.pattern.permute.xlu0 0
      %1428 = vperm.xlu0 %1427, %v1314
      %v1429 = vpop.permute.xlu0 %1428
      %1432 = vset.pattern.permute.xlu0 0
      %1433 = vperm.xlu0 %1432, %v1315
      %v1434 = vpop.permute.xlu0 %1433
      %v1460 = vunpack.c.l.b16 %v1268
      %v1461 = vunpack.c.l.b16 %v1269
      %v1462 = vunpack.c.l.b16 %v1270
      %v1463 = vunpack.c.l.b16 %v1271
      %v1464 = vunpack.c.l.b16 %v1272
      %v1465 = vunpack.c.l.b16 %v1273
      %v1466 = vunpack.c.l.b16 %v1274
      %v1467 = vunpack.c.l.b16 %v1275
      %v1468 = vunpack.c.l.b16 %v1276
      %v1469 = vunpack.c.l.b16 %v1277
      %v1470 = vunpack.c.l.b16 %v1278
      %v1471 = vunpack.c.l.b16 %v1279
      %v1472 = vunpack.c.l.b16 %v1280
      %v1473 = vunpack.c.l.b16 %v1281
      %v1474 = vunpack.c.l.b16 %v1282
      %v1475 = vunpack.c.l.b16 %v1283
      %v1476 = vunpack.c.l.b16 %v1284
      %v1477 = vunpack.c.l.b16 %v1285
      %v1478 = vunpack.c.l.b16 %v1286
      %v1479 = vunpack.c.l.b16 %v1287
      %v1480 = vunpack.c.l.b16 %v1288
      %v1481 = vunpack.c.l.b16 %v1289
      %v1482 = vunpack.c.l.b16 %v1290
      %v1483 = vunpack.c.l.b16 %v1291
      %v1484 = vpack.c.b16 %v1461, %v1460
      %v1485 = vpack.c.b16 %v1463, %v1462
      %v1486 = vpack.c.b16 %v1465, %v1464
      %v1487 = vpack.c.b16 %v1467, %v1466
      %v1488 = vpack.c.b16 %v1469, %v1468
      %v1489 = vpack.c.b16 %v1471, %v1470
      %v1490 = vpack.c.b16 %v1473, %v1472
      %v1491 = vpack.c.b16 %v1475, %v1474
      %v1492 = vpack.c.b16 %v1477, %v1476
      %v1493 = vpack.c.b16 %v1479, %v1478
      %v1494 = vpack.c.b16 %v1481, %v1480
      %v1495 = vpack.c.b16 %v1483, %v1482
      %1508 = vmatprep.subr.bf16.mxu0 0
      %1509 = vmatpush1.bf16.msra.mxu0 %v1267
      %1510 = vmatprep.subr.bf16.mxu0 0
      %1511 = vmatpush1.bf16.msra.mxu0 %v1266
      %1512 = vmatprep.subr.bf16.mxu0 0
      %1513 = vmatpush1.bf16.msra.mxu0 %v1265
      %1514 = vmatprep.subr.bf16.mxu0 0
      %1515 = vmatpush1.bf16.msra.mxu0 %v1264
      %1516 = vmatprep.subr.bf16.mxu0 0
      %1517 = vmatpush1.bf16.msra.mxu0 %v1263
      %1518 = vmatprep.subr.bf16.mxu0 0
      %1519 = vmatpush1.bf16.msra.mxu0 %v1262
      %1520 = vmatprep.subr.bf16.mxu0 0
      %1521 = vmatpush1.bf16.msra.mxu0 %v1261
      %1522 = vmatprep.subr.bf16.mxu0 0
      %1523 = vmatpush1.bf16.msra.mxu0 %v1260
      %1524 = vmatprep.subr.bf16.mxu0 0
      %1525 = vmatpush2.bf16.msra.mxu0 0
      %1526 = vmatprep.subr.bf16.mxu0 0
      %1527 = vmatpush2.bf16.msra.mxu0 0
      %1528 = vmatprep.subr.bf16.mxu0 0
      %1529 = vmatpush2.bf16.msra.mxu0 0
      %1530 = vmatprep.subr.bf16.mxu0 0
      %1531 = vmatpush2.bf16.msra.mxu0 0
      %1532 = vmatprep.subr.bf16.mxu0 0
      %1533 = vmatpush2.bf16.msra.mxu0 0
      %1534 = vmatprep.subr.bf16.mxu0 0
      %1535 = vmatpush2.bf16.msra.mxu0 0
      %1536 = vmatprep.subr.bf16.mxu0 0
      %1537 = vmatpush2.bf16.msra.mxu0 0
      %1538 = vmatprep.subr.bf16.mxu0 0
      %1539 = vmatpush2.bf16.msra.mxu0 0
      %1540 = vmatprep.mubr.bf16.mxu0 0
      %1541 = vmatmul.mubr.bf16.gmra.mxu0 %v1484
      %v1542 = vpop.f32.mrf.mxu0
      %v1543 = vadd.f32 %v1319, %v1542
      %v1544 = vpop.f32.mrf.mxu0
      %v1545 = vpop.f32.mrf.mxu0
      %v1546 = vadd.f32 %v1324, %v1545
      %v1547 = vpop.f32.mrf.mxu0
      %1548 = vmatprep.mubr.bf16.mxu0 0
      %1549 = vmatmul.mubr.bf16.gmra.mxu0 %v1485
      %v1550 = vpop.f32.mrf.mxu0
      %v1551 = vadd.f32 %v1329, %v1550
      %v1552 = vpop.f32.mrf.mxu0
      %v1553 = vpop.f32.mrf.mxu0
      %v1554 = vadd.f32 %v1334, %v1553
      %v1555 = vpop.f32.mrf.mxu0
      %1556 = vmatprep.mubr.bf16.mxu0 0
      %1557 = vmatmul.mubr.bf16.gmra.mxu0 %v1486
      %v1558 = vpop.f32.mrf.mxu0
      %v1559 = vadd.f32 %v1339, %v1558
      %v1560 = vpop.f32.mrf.mxu0
      %v1561 = vpop.f32.mrf.mxu0
      %v1562 = vadd.f32 %v1344, %v1561
      %v1563 = vpop.f32.mrf.mxu0
      %1564 = vmatprep.mubr.bf16.mxu0 0
      %1565 = vmatmul.mubr.bf16.gmra.mxu0 %v1487
      %v1566 = vpop.f32.mrf.mxu0
      %v1567 = vadd.f32 %v1349, %v1566
      %v1568 = vpop.f32.mrf.mxu0
      %v1569 = vpop.f32.mrf.mxu0
      %v1570 = vadd.f32 %v1354, %v1569
      %v1571 = vpop.f32.mrf.mxu0
      %1572 = vmatprep.mubr.bf16.mxu0 0
      %1573 = vmatmul.mubr.bf16.gmra.mxu0 %v1488
      %v1574 = vpop.f32.mrf.mxu0
      %v1575 = vadd.f32 %v1359, %v1574
      %v1576 = vpop.f32.mrf.mxu0
      %v1577 = vpop.f32.mrf.mxu0
      %v1578 = vadd.f32 %v1364, %v1577
      %v1579 = vpop.f32.mrf.mxu0
      %1580 = vmatprep.mubr.bf16.mxu0 0
      %1581 = vmatmul.mubr.bf16.gmra.mxu0 %v1489
      %v1582 = vpop.f32.mrf.mxu0
      %v1583 = vadd.f32 %v1369, %v1582
      %v1584 = vpop.f32.mrf.mxu0
      %v1585 = vpop.f32.mrf.mxu0
      %v1586 = vadd.f32 %v1374, %v1585
      %v1587 = vpop.f32.mrf.mxu0
      %1588 = vmatprep.mubr.bf16.mxu0 0
      %1589 = vmatmul.mubr.bf16.gmra.mxu0 %v1490
      %v1590 = vpop.f32.mrf.mxu0
      %v1591 = vadd.f32 %v1379, %v1590
      %v1592 = vpop.f32.mrf.mxu0
      %v1593 = vpop.f32.mrf.mxu0
      %v1594 = vadd.f32 %v1384, %v1593
      %v1595 = vpop.f32.mrf.mxu0
      %1596 = vmatprep.mubr.bf16.mxu0 0
      %1597 = vmatmul.mubr.bf16.gmra.mxu0 %v1491
      %v1598 = vpop.f32.mrf.mxu0
      %v1599 = vadd.f32 %v1389, %v1598
      %v1600 = vpop.f32.mrf.mxu0
      %v1601 = vpop.f32.mrf.mxu0
      %v1602 = vadd.f32 %v1394, %v1601
      %v1603 = vpop.f32.mrf.mxu0
      %1604 = vmatprep.mubr.bf16.mxu0 0
      %1605 = vmatmul.mubr.bf16.gmra.mxu0 %v1492
      %v1606 = vpop.f32.mrf.mxu0
      %v1607 = vadd.f32 %v1399, %v1606
      %v1608 = vpop.f32.mrf.mxu0
      %v1609 = vpop.f32.mrf.mxu0
      %v1610 = vadd.f32 %v1404, %v1609
      %v1611 = vpop.f32.mrf.mxu0
      %1612 = vmatprep.mubr.bf16.mxu0 0
      %1613 = vmatmul.mubr.bf16.gmra.mxu0 %v1493
      %v1614 = vpop.f32.mrf.mxu0
      %v1615 = vadd.f32 %v1409, %v1614
      %v1616 = vpop.f32.mrf.mxu0
      %v1617 = vpop.f32.mrf.mxu0
      %v1618 = vadd.f32 %v1414, %v1617
      %v1619 = vpop.f32.mrf.mxu0
      %1620 = vmatprep.mubr.bf16.mxu0 0
      %1621 = vmatmul.mubr.bf16.gmra.mxu0 %v1494
      %v1622 = vpop.f32.mrf.mxu0
      %v1623 = vadd.f32 %v1419, %v1622
      %v1624 = vpop.f32.mrf.mxu0
      %v1625 = vpop.f32.mrf.mxu0
      %v1626 = vadd.f32 %v1424, %v1625
      %v1627 = vpop.f32.mrf.mxu0
      %1628 = vmatprep.mubr.bf16.mxu0 0
      %1629 = vmatmul.mubr.bf16.gmra.mxu0 %v1495
      %v1630 = vpop.f32.mrf.mxu0
      %v1631 = vadd.f32 %v1429, %v1630
      %v1632 = vpop.f32.mrf.mxu0
      %v1633 = vpop.f32.mrf.mxu0
      %v1634 = vadd.f32 %v1434, %v1633
      %v1635 = vpop.f32.mrf.mxu0
      %1636 = vdwg.mxu0
      %v1637 = vmax.f32 %v1543, 0.0
      %v1638 = vmax.f32 %v1546, 0.0
      %v1639 = vmax.f32 %v1551, 0.0
      %v1640 = vmax.f32 %v1554, 0.0
      %v1641 = vmax.f32 %v1559, 0.0
      %v1642 = vmax.f32 %v1562, 0.0
      %v1643 = vmax.f32 %v1567, 0.0
      %v1644 = vmax.f32 %v1570, 0.0
      %v1645 = vpack.c.bf16 %v1638, %v1637
      %v1646 = vpack.c.bf16 %v1640, %v1639
      %v1647 = vpack.c.bf16 %v1642, %v1641
      %v1648 = vpack.c.bf16 %v1644, %v1643
      %v1649 = vld [vmem:[%s7] sm:$0xf]
      %v1650 = vld [vmem:[%s7 + $0x4] sm:$0xf]
      %v1651 = vld [vmem:[%s7 + $0x8] sm:$0xf]
      %v1652 = vld [vmem:[%s7 + $0xc] sm:$0xf]
      %v1653 = vld [vmem:[%s7 + $0x10] sm:$0xf]
      %v1654 = vld [vmem:[%s7 + $0x14] sm:$0xf]
      %v1655 = vld [vmem:[%s7 + $0x18] sm:$0xf]
      %v1656 = vld [vmem:[%s7 + $0x1c] sm:$0xf]
      %v1657 = vld [vmem:[%s7 + $0x20] sm:$0xf]
      %v1658 = vld [vmem:[%s7 + $0x24] sm:$0xf]
      %v1659 = vld [vmem:[%s7 + $0x28] sm:$0xf]
      %v1660 = vld [vmem:[%s7 + $0x2c] sm:$0xf]
      %v1661 = vld [vmem:[%s7 + $0x30] sm:$0xf]
      %v1662 = vld [vmem:[%s7 + $0x34] sm:$0xf]
      %v1663 = vld [vmem:[%s7 + $0x38] sm:$0xf]
      %v1664 = vld [vmem:[%s7 + $0x3c] sm:$0xf]
      %v1681 = vunpack.c.l.b16 %v1649
      %v1682 = vunpack.c.l.b16 %v1650
      %v1683 = vunpack.c.l.b16 %v1651
      %v1684 = vunpack.c.l.b16 %v1652
      %v1685 = vunpack.c.l.b16 %v1653
      %v1686 = vunpack.c.l.b16 %v1654
      %v1687 = vunpack.c.l.b16 %v1655
      %v1688 = vunpack.c.l.b16 %v1656
      %v1689 = vunpack.c.l.b16 %v1657
      %v1690 = vunpack.c.l.b16 %v1658
      %v1691 = vunpack.c.l.b16 %v1659
      %v1692 = vunpack.c.l.b16 %v1660
      %v1693 = vunpack.c.l.b16 %v1661
      %v1694 = vunpack.c.l.b16 %v1662
      %v1695 = vunpack.c.l.b16 %v1663
      %v1696 = vunpack.c.l.b16 %v1664
      %v1697 = vpack.c.b16 %v1682, %v1681
      %v1698 = vpack.c.b16 %v1684, %v1683
      %v1699 = vpack.c.b16 %v1686, %v1685
      %v1700 = vpack.c.b16 %v1688, %v1687
      %v1701 = vpack.c.b16 %v1690, %v1689
      %v1702 = vpack.c.b16 %v1692, %v1691
      %v1703 = vpack.c.b16 %v1694, %v1693
      %v1704 = vpack.c.b16 %v1696, %v1695
      %vm1705 = vcmask 523264
      %v1707 = vsel %vm1705, %v1697, 0
      %v1710 = vsel %vm1705, %v1698, 0
      %v1713 = vsel %vm1705, %v1699, 0
      %v1716 = vsel %vm1705, %v1700, 0
      %v1719 = vsel %vm1705, %v1701, 0
      %v1722 = vsel %vm1705, %v1702, 0
      %v1725 = vsel %vm1705, %v1703, 0
      %v1728 = vsel %vm1705, %v1704, 0
      %1730 = vmatprep.subr.bf16.mxu0 0
      %1731 = vmatpush1.bf16.msra.mxu0 0
      %1732 = vmatprep.subr.bf16.mxu0 0
      %1733 = vmatpush1.bf16.msra.mxu0 0
      %1734 = vmatprep.subr.bf16.mxu0 0
      %1735 = vmatpush1.bf16.msra.mxu0 0
      %1736 = vmatprep.subr.bf16.mxu0 0
      %1737 = vmatpush1.bf16.msra.mxu0 0
      %1738 = vmatprep.subr.bf16.mxu0 0
      %1739 = vmatpush1.bf16.msra.mxu0 %v1648
      %1740 = vmatprep.subr.bf16.mxu0 0
      %1741 = vmatpush1.bf16.msra.mxu0 %v1647
      %1742 = vmatprep.subr.bf16.mxu0 0
      %1743 = vmatpush1.bf16.msra.mxu0 %v1646
      %1744 = vmatprep.subr.bf16.mxu0 0
      %1745 = vmatpush1.bf16.msra.mxu0 %v1645
      %1746 = vmatprep.subr.bf16.mxu0 0
      %1747 = vmatpush2.bf16.msra.mxu0 0
      %1748 = vmatprep.subr.bf16.mxu0 0
      %1749 = vmatpush2.bf16.msra.mxu0 0
      %1750 = vmatprep.subr.bf16.mxu0 0
      %1751 = vmatpush2.bf16.msra.mxu0 0
      %1752 = vmatprep.subr.bf16.mxu0 0
      %1753 = vmatpush2.bf16.msra.mxu0 0
      %1754 = vmatprep.subr.bf16.mxu0 0
      %1755 = vmatpush2.bf16.msra.mxu0 0
      %1756 = vmatprep.subr.bf16.mxu0 0
      %1757 = vmatpush2.bf16.msra.mxu0 0
      %1758 = vmatprep.subr.bf16.mxu0 0
      %1759 = vmatpush2.bf16.msra.mxu0 0
      %1760 = vmatprep.subr.bf16.mxu0 0
      %1761 = vmatpush2.bf16.msra.mxu0 0
      %1762 = vmatprep.mubr.bf16.mxu0 0
      %1763 = vmatmul.mubr.bf16.gmra.mxu0 %v1707
      %v1764 = vpop.f32.mrf.mxu0
      %v1765 = vadd.f32 %v1575, %v1764
      %v1766 = vpop.f32.mrf.mxu0
      %v1767 = vpop.f32.mrf.mxu0
      %v1768 = vadd.f32 %v1578, %v1767
      %v1769 = vpop.f32.mrf.mxu0
      %1770 = vmatprep.mubr.bf16.mxu0 0
      %1771 = vmatmul.mubr.bf16.gmra.mxu0 %v1710
      %v1772 = vpop.f32.mrf.mxu0
      %v1773 = vadd.f32 %v1583, %v1772
      %v1774 = vpop.f32.mrf.mxu0
      %v1775 = vpop.f32.mrf.mxu0
      %v1776 = vadd.f32 %v1586, %v1775
      %v1777 = vpop.f32.mrf.mxu0
      %1778 = vmatprep.mubr.bf16.mxu0 0
      %1779 = vmatmul.mubr.bf16.gmra.mxu0 %v1713
      %v1780 = vpop.f32.mrf.mxu0
      %v1781 = vadd.f32 %v1591, %v1780
      %v1782 = vpop.f32.mrf.mxu0
      %v1783 = vpop.f32.mrf.mxu0
      %v1784 = vadd.f32 %v1594, %v1783
      %v1785 = vpop.f32.mrf.mxu0
      %1786 = vmatprep.mubr.bf16.mxu0 0
      %1787 = vmatmul.mubr.bf16.gmra.mxu0 %v1716
      %v1788 = vpop.f32.mrf.mxu0
      %v1789 = vadd.f32 %v1599, %v1788
      %v1790 = vpop.f32.mrf.mxu0
      %v1791 = vpop.f32.mrf.mxu0
      %v1792 = vadd.f32 %v1602, %v1791
      %v1793 = vpop.f32.mrf.mxu0
      %1794 = vmatprep.mubr.bf16.mxu0 0
      %1795 = vmatmul.mubr.bf16.gmra.mxu0 %v1719
      %v1796 = vpop.f32.mrf.mxu0
      %v1797 = vadd.f32 %v1607, %v1796
      %v1798 = vpop.f32.mrf.mxu0
      %v1799 = vpop.f32.mrf.mxu0
      %v1800 = vadd.f32 %v1610, %v1799
      %v1801 = vpop.f32.mrf.mxu0
      %1802 = vmatprep.mubr.bf16.mxu0 0
      %1803 = vmatmul.mubr.bf16.gmra.mxu0 %v1722
      %v1804 = vpop.f32.mrf.mxu0
      %v1805 = vadd.f32 %v1615, %v1804
      %v1806 = vpop.f32.mrf.mxu0
      %v1807 = vpop.f32.mrf.mxu0
      %v1808 = vadd.f32 %v1618, %v1807
      %v1809 = vpop.f32.mrf.mxu0
      %1810 = vmatprep.mubr.bf16.mxu0 0
      %1811 = vmatmul.mubr.bf16.gmra.mxu0 %v1725
      %v1812 = vpop.f32.mrf.mxu0
      %v1813 = vadd.f32 %v1623, %v1812
      %v1814 = vpop.f32.mrf.mxu0
      %v1815 = vpop.f32.mrf.mxu0
      %v1816 = vadd.f32 %v1626, %v1815
      %v1817 = vpop.f32.mrf.mxu0
      %1818 = vmatprep.mubr.bf16.mxu0 0
      %1819 = vmatmul.mubr.bf16.gmra.mxu0 %v1728
      %v1820 = vpop.f32.mrf.mxu0
      %v1821 = vadd.f32 %v1631, %v1820
      %v1822 = vpop.f32.mrf.mxu0
      %v1823 = vpop.f32.mrf.mxu0
      %v1824 = vadd.f32 %v1634, %v1823
      %v1825 = vpop.f32.mrf.mxu0
      %1826 = vdwg.mxu0
      %v1827 = vpack.c.bf16 %v1768, %v1765
      %v1828 = vpack.c.bf16 %v1776, %v1773
      %v1829 = vpack.c.bf16 %v1784, %v1781
      %v1830 = vpack.c.bf16 %v1792, %v1789
      %v1831 = vpack.c.bf16 %v1800, %v1797
      %v1832 = vpack.c.bf16 %v1808, %v1805
      %v1833 = vpack.c.bf16 %v1816, %v1813
      %v1834 = vpack.c.bf16 %v1824, %v1821
      %v1835 = vld [vmem:[%s8] sm:$0xf]
      %v1836 = vld [vmem:[%s8 + $0x4] sm:$0xf]
      %v1837 = vld [vmem:[%s8 + $0x8] sm:$0xf]
      %v1838 = vld [vmem:[%s8 + $0xc] sm:$0xf]
      %v1839 = vld [vmem:[%s8 + $0x10] sm:$0xf]
      %v1840 = vld [vmem:[%s8 + $0x14] sm:$0xf]
      %v1841 = vld [vmem:[%s8 + $0x18] sm:$0xf]
      %v1842 = vld [vmem:[%s8 + $0x1c] sm:$0xf]
      %v1843 = vld [vmem:[%s8 + $0x20] sm:$0xf]
      %v1844 = vld [vmem:[%s8 + $0x24] sm:$0xf]
      %v1845 = vld [vmem:[%s8 + $0x28] sm:$0xf]
      %v1846 = vld [vmem:[%s8 + $0x2c] sm:$0xf]
      %v1847 = vld [vmem:[%s8 + $0x30] sm:$0xf]
      %v1848 = vld [vmem:[%s8 + $0x34] sm:$0xf]
      %v1849 = vld [vmem:[%s8 + $0x38] sm:$0xf]
      %v1850 = vld [vmem:[%s8 + $0x3c] sm:$0xf]
      %v1851 = vld [vmem:[%s8 + $0x40] sm:$0xf]
      %v1852 = vld [vmem:[%s8 + $0x44] sm:$0xf]
      %v1853 = vld [vmem:[%s8 + $0x48] sm:$0xf]
      %v1854 = vld [vmem:[%s8 + $0x4c] sm:$0xf]
      %v1855 = vld [vmem:[%s8 + $0x50] sm:$0xf]
      %v1856 = vld [vmem:[%s8 + $0x54] sm:$0xf]
      %v1857 = vld [vmem:[%s8 + $0x58] sm:$0xf]
      %v1858 = vld [vmem:[%s8 + $0x5c] sm:$0xf]
      %v1859 = vld [vmem:[%s8 + $0x60] sm:$0xf]
      %v1860 = vld [vmem:[%s8 + $0x64] sm:$0xf]
      %v1861 = vld [vmem:[%s8 + $0x68] sm:$0xf]
      %v1862 = vld [vmem:[%s8 + $0x6c] sm:$0xf]
      %v1863 = vld [vmem:[%s8 + $0x70] sm:$0xf]
      %v1864 = vld [vmem:[%s8 + $0x74] sm:$0xf]
      %v1865 = vld [vmem:[%s8 + $0x78] sm:$0xf]
      %v1866 = vld [vmem:[%s8 + $0x7c] sm:$0xf]
      %1868 = vset.pattern.permute.xlu0 0
      %1869 = vperm.xlu0 %1868, %v594
      %v1870 = vpop.permute.xlu0 %1869
      %1873 = vset.pattern.permute.xlu0 0
      %1874 = vperm.xlu0 %1873, %v595
      %v1875 = vpop.permute.xlu0 %1874
      %1878 = vset.pattern.permute.xlu0 0
      %1879 = vperm.xlu0 %1878, %v596
      %v1880 = vpop.permute.xlu0 %1879
      %1883 = vset.pattern.permute.xlu0 0
      %1884 = vperm.xlu0 %1883, %v597
      %v1885 = vpop.permute.xlu0 %1884
      %1888 = vset.pattern.permute.xlu0 0
      %1889 = vperm.xlu0 %1888, %v598
      %v1890 = vpop.permute.xlu0 %1889
      %1893 = vset.pattern.permute.xlu0 0
      %1894 = vperm.xlu0 %1893, %v599
      %v1895 = vpop.permute.xlu0 %1894
      %1898 = vset.pattern.permute.xlu0 0
      %1899 = vperm.xlu0 %1898, %v600
      %v1900 = vpop.permute.xlu0 %1899
      %1903 = vset.pattern.permute.xlu0 0
      %1904 = vperm.xlu0 %1903, %v601
      %v1905 = vpop.permute.xlu0 %1904
      %1908 = vset.pattern.permute.xlu0 0
      %1909 = vperm.xlu0 %1908, %v602
      %v1910 = vpop.permute.xlu0 %1909
      %1913 = vset.pattern.permute.xlu0 0
      %1914 = vperm.xlu0 %1913, %v603
      %v1915 = vpop.permute.xlu0 %1914
      %1918 = vset.pattern.permute.xlu0 0
      %1919 = vperm.xlu0 %1918, %v604
      %v1920 = vpop.permute.xlu0 %1919
      %1923 = vset.pattern.permute.xlu0 0
      %1924 = vperm.xlu0 %1923, %v605
      %v1925 = vpop.permute.xlu0 %1924
      %1928 = vset.pattern.permute.xlu0 0
      %1929 = vperm.xlu0 %1928, %v606
      %v1930 = vpop.permute.xlu0 %1929
      %1933 = vset.pattern.permute.xlu0 0
      %1934 = vperm.xlu0 %1933, %v607
      %v1935 = vpop.permute.xlu0 %1934
      %1938 = vset.pattern.permute.xlu0 0
      %1939 = vperm.xlu0 %1938, %v608
      %v1940 = vpop.permute.xlu0 %1939
      %1943 = vset.pattern.permute.xlu0 0
      %1944 = vperm.xlu0 %1943, %v609
      %v1945 = vpop.permute.xlu0 %1944
      %1948 = vset.pattern.permute.xlu0 0
      %1949 = vperm.xlu0 %1948, %v610
      %v1950 = vpop.permute.xlu0 %1949
      %1953 = vset.pattern.permute.xlu0 0
      %1954 = vperm.xlu0 %1953, %v611
      %v1955 = vpop.permute.xlu0 %1954
      %1958 = vset.pattern.permute.xlu0 0
      %1959 = vperm.xlu0 %1958, %v612
      %v1960 = vpop.permute.xlu0 %1959
      %1963 = vset.pattern.permute.xlu0 0
      %1964 = vperm.xlu0 %1963, %v613
      %v1965 = vpop.permute.xlu0 %1964
      %1968 = vset.pattern.permute.xlu0 0
      %1969 = vperm.xlu0 %1968, %v614
      %v1970 = vpop.permute.xlu0 %1969
      %1973 = vset.pattern.permute.xlu0 0
      %1974 = vperm.xlu0 %1973, %v615
      %v1975 = vpop.permute.xlu0 %1974
      %1978 = vset.pattern.permute.xlu0 0
      %1979 = vperm.xlu0 %1978, %v616
      %v1980 = vpop.permute.xlu0 %1979
      %1983 = vset.pattern.permute.xlu0 0
      %1984 = vperm.xlu0 %1983, %v617
      %v1985 = vpop.permute.xlu0 %1984
      %1988 = vset.pattern.permute.xlu0 0
      %1989 = vperm.xlu0 %1988, %v618
      %v1990 = vpop.permute.xlu0 %1989
      %1993 = vset.pattern.permute.xlu0 0
      %1994 = vperm.xlu0 %1993, %v619
      %v1995 = vpop.permute.xlu0 %1994
      %1998 = vset.pattern.permute.xlu0 0
      %1999 = vperm.xlu0 %1998, %v620
      %v2000 = vpop.permute.xlu0 %1999
      %2003 = vset.pattern.permute.xlu0 0
      %2004 = vperm.xlu0 %2003, %v621
      %v2005 = vpop.permute.xlu0 %2004
      %2008 = vset.pattern.permute.xlu0 0
      %2009 = vperm.xlu0 %2008, %v622
      %v2010 = vpop.permute.xlu0 %2009
      %2013 = vset.pattern.permute.xlu0 0
      %2014 = vperm.xlu0 %2013, %v623
      %v2015 = vpop.permute.xlu0 %2014
      %2018 = vset.pattern.permute.xlu0 0
      %2019 = vperm.xlu0 %2018, %v624
      %v2020 = vpop.permute.xlu0 %2019
      %2023 = vset.pattern.permute.xlu0 0
      %2024 = vperm.xlu0 %2023, %v625
      %v2025 = vpop.permute.xlu0 %2024
      %v2059 = vunpack.c.l.b16 %v1835
      %v2060 = vunpack.c.l.b16 %v1836
      %v2061 = vunpack.c.l.b16 %v1837
      %v2062 = vunpack.c.l.b16 %v1838
      %v2063 = vunpack.c.l.b16 %v1839
      %v2064 = vunpack.c.l.b16 %v1840
      %v2065 = vunpack.c.l.b16 %v1841
      %v2066 = vunpack.c.l.b16 %v1842
      %v2067 = vunpack.c.l.b16 %v1843
      %v2068 = vunpack.c.l.b16 %v1844
      %v2069 = vunpack.c.l.b16 %v1845
      %v2070 = vunpack.c.l.b16 %v1846
      %v2071 = vunpack.c.l.b16 %v1847
      %v2072 = vunpack.c.l.b16 %v1848
      %v2073 = vunpack.c.l.b16 %v1849
      %v2074 = vunpack.c.l.b16 %v1850
      %v2075 = vunpack.c.l.b16 %v1851
      %v2076 = vunpack.c.l.b16 %v1852
      %v2077 = vunpack.c.l.b16 %v1853
      %v2078 = vunpack.c.l.b16 %v1854
      %v2079 = vunpack.c.l.b16 %v1855
      %v2080 = vunpack.c.l.b16 %v1856
      %v2081 = vunpack.c.l.b16 %v1857
      %v2082 = vunpack.c.l.b16 %v1858
      %v2083 = vunpack.c.l.b16 %v1859
      %v2084 = vunpack.c.l.b16 %v1860
      %v2085 = vunpack.c.l.b16 %v1861
      %v2086 = vunpack.c.l.b16 %v1862
      %v2087 = vunpack.c.l.b16 %v1863
      %v2088 = vunpack.c.l.b16 %v1864
      %v2089 = vunpack.c.l.b16 %v1865
      %v2090 = vunpack.c.l.b16 %v1866
      %v2091 = vpack.c.b16 %v2060, %v2059
      %v2092 = vpack.c.b16 %v2062, %v2061
      %v2093 = vpack.c.b16 %v2064, %v2063
      %v2094 = vpack.c.b16 %v2066, %v2065
      %v2095 = vpack.c.b16 %v2068, %v2067
      %v2096 = vpack.c.b16 %v2070, %v2069
      %v2097 = vpack.c.b16 %v2072, %v2071
      %v2098 = vpack.c.b16 %v2074, %v2073
      %v2099 = vpack.c.b16 %v2076, %v2075
      %v2100 = vpack.c.b16 %v2078, %v2077
      %v2101 = vpack.c.b16 %v2080, %v2079
      %v2102 = vpack.c.b16 %v2082, %v2081
      %v2103 = vpack.c.b16 %v2084, %v2083
      %v2104 = vpack.c.b16 %v2086, %v2085
      %v2105 = vpack.c.b16 %v2088, %v2087
      %v2106 = vpack.c.b16 %v2090, %v2089
      %2123 = vmatprep.subr.bf16.mxu0 0
      %2124 = vmatpush1.bf16.msra.mxu0 %v1834
      %2125 = vmatprep.subr.bf16.mxu0 0
      %2126 = vmatpush1.bf16.msra.mxu0 %v1833
      %2127 = vmatprep.subr.bf16.mxu0 0
      %2128 = vmatpush1.bf16.msra.mxu0 %v1832
      %2129 = vmatprep.subr.bf16.mxu0 0
      %2130 = vmatpush1.bf16.msra.mxu0 %v1831
      %2131 = vmatprep.subr.bf16.mxu0 0
      %2132 = vmatpush1.bf16.msra.mxu0 %v1830
      %2133 = vmatprep.subr.bf16.mxu0 0
      %2134 = vmatpush1.bf16.msra.mxu0 %v1829
      %2135 = vmatprep.subr.bf16.mxu0 0
      %2136 = vmatpush1.bf16.msra.mxu0 %v1828
      %2137 = vmatprep.subr.bf16.mxu0 0
      %2138 = vmatpush1.bf16.msra.mxu0 %v1827
      %2139 = vmatprep.subr.bf16.mxu0 0
      %2140 = vmatpush2.bf16.msra.mxu0 0
      %2141 = vmatprep.subr.bf16.mxu0 0
      %2142 = vmatpush2.bf16.msra.mxu0 0
      %2143 = vmatprep.subr.bf16.mxu0 0
      %2144 = vmatpush2.bf16.msra.mxu0 0
      %2145 = vmatprep.subr.bf16.mxu0 0
      %2146 = vmatpush2.bf16.msra.mxu0 0
      %2147 = vmatprep.subr.bf16.mxu0 0
      %2148 = vmatpush2.bf16.msra.mxu0 0
      %2149 = vmatprep.subr.bf16.mxu0 0
      %2150 = vmatpush2.bf16.msra.mxu0 0
      %2151 = vmatprep.subr.bf16.mxu0 0
      %2152 = vmatpush2.bf16.msra.mxu0 0
      %2153 = vmatprep.subr.bf16.mxu0 0
      %2154 = vmatpush2.bf16.msra.mxu0 0
      %2155 = vmatprep.mubr.bf16.mxu0 0
      %2156 = vmatmul.mubr.bf16.gmra.mxu0 %v2091
      %v2157 = vpop.f32.mrf.mxu0
      %v2158 = vadd.f32 %v1870, %v2157
      %v2159 = vpop.f32.mrf.mxu0
      %v2160 = vpop.f32.mrf.mxu0
      %v2161 = vadd.f32 %v1875, %v2160
      %v2162 = vpop.f32.mrf.mxu0
      %2163 = vmatprep.mubr.bf16.mxu0 0
      %2164 = vmatmul.mubr.bf16.gmra.mxu0 %v2092
      %v2165 = vpop.f32.mrf.mxu0
      %v2166 = vadd.f32 %v1880, %v2165
      %v2167 = vpop.f32.mrf.mxu0
      %v2168 = vpop.f32.mrf.mxu0
      %v2169 = vadd.f32 %v1885, %v2168
      %v2170 = vpop.f32.mrf.mxu0
      %2171 = vmatprep.mubr.bf16.mxu0 0
      %2172 = vmatmul.mubr.bf16.gmra.mxu0 %v2093
      %v2173 = vpop.f32.mrf.mxu0
      %v2174 = vadd.f32 %v1890, %v2173
      %v2175 = vpop.f32.mrf.mxu0
      %v2176 = vpop.f32.mrf.mxu0
      %v2177 = vadd.f32 %v1895, %v2176
      %v2178 = vpop.f32.mrf.mxu0
      %2179 = vmatprep.mubr.bf16.mxu0 0
      %2180 = vmatmul.mubr.bf16.gmra.mxu0 %v2094
      %v2181 = vpop.f32.mrf.mxu0
      %v2182 = vadd.f32 %v1900, %v2181
      %v2183 = vpop.f32.mrf.mxu0
      %v2184 = vpop.f32.mrf.mxu0
      %v2185 = vadd.f32 %v1905, %v2184
      %v2186 = vpop.f32.mrf.mxu0
      %2187 = vmatprep.mubr.bf16.mxu0 0
      %2188 = vmatmul.mubr.bf16.gmra.mxu0 %v2095
      %v2189 = vpop.f32.mrf.mxu0
      %v2190 = vadd.f32 %v1910, %v2189
      %v2191 = vpop.f32.mrf.mxu0
      %v2192 = vpop.f32.mrf.mxu0
      %v2193 = vadd.f32 %v1915, %v2192
      %v2194 = vpop.f32.mrf.mxu0
      %2195 = vmatprep.mubr.bf16.mxu0 0
      %2196 = vmatmul.mubr.bf16.gmra.mxu0 %v2096
      %v2197 = vpop.f32.mrf.mxu0
      %v2198 = vadd.f32 %v1920, %v2197
      %v2199 = vpop.f32.mrf.mxu0
      %v2200 = vpop.f32.mrf.mxu0
      %v2201 = vadd.f32 %v1925, %v2200
      %v2202 = vpop.f32.mrf.mxu0
      %2203 = vmatprep.mubr.bf16.mxu0 0
      %2204 = vmatmul.mubr.bf16.gmra.mxu0 %v2097
      %v2205 = vpop.f32.mrf.mxu0
      %v2206 = vadd.f32 %v1930, %v2205
      %v2207 = vpop.f32.mrf.mxu0
      %v2208 = vpop.f32.mrf.mxu0
      %v2209 = vadd.f32 %v1935, %v2208
      %v2210 = vpop.f32.mrf.mxu0
      %2211 = vmatprep.mubr.bf16.mxu0 0
      %2212 = vmatmul.mubr.bf16.gmra.mxu0 %v2098
      %v2213 = vpop.f32.mrf.mxu0
      %v2214 = vadd.f32 %v1940, %v2213
      %v2215 = vpop.f32.mrf.mxu0
      %v2216 = vpop.f32.mrf.mxu0
      %v2217 = vadd.f32 %v1945, %v2216
      %v2218 = vpop.f32.mrf.mxu0
      %2219 = vmatprep.mubr.bf16.mxu0 0
      %2220 = vmatmul.mubr.bf16.gmra.mxu0 %v2099
      %v2221 = vpop.f32.mrf.mxu0
      %v2222 = vadd.f32 %v1950, %v2221
      %v2223 = vpop.f32.mrf.mxu0
      %v2224 = vpop.f32.mrf.mxu0
      %v2225 = vadd.f32 %v1955, %v2224
      %v2226 = vpop.f32.mrf.mxu0
      %2227 = vmatprep.mubr.bf16.mxu0 0
      %2228 = vmatmul.mubr.bf16.gmra.mxu0 %v2100
      %v2229 = vpop.f32.mrf.mxu0
      %v2230 = vadd.f32 %v1960, %v2229
      %v2231 = vpop.f32.mrf.mxu0
      %v2232 = vpop.f32.mrf.mxu0
      %v2233 = vadd.f32 %v1965, %v2232
      %v2234 = vpop.f32.mrf.mxu0
      %2235 = vmatprep.mubr.bf16.mxu0 0
      %2236 = vmatmul.mubr.bf16.gmra.mxu0 %v2101
      %v2237 = vpop.f32.mrf.mxu0
      %v2238 = vadd.f32 %v1970, %v2237
      %v2239 = vpop.f32.mrf.mxu0
      %v2240 = vpop.f32.mrf.mxu0
      %v2241 = vadd.f32 %v1975, %v2240
      %v2242 = vpop.f32.mrf.mxu0
      %2243 = vmatprep.mubr.bf16.mxu0 0
      %2244 = vmatmul.mubr.bf16.gmra.mxu0 %v2102
      %v2245 = vpop.f32.mrf.mxu0
      %v2246 = vadd.f32 %v1980, %v2245
      %v2247 = vpop.f32.mrf.mxu0
      %v2248 = vpop.f32.mrf.mxu0
      %v2249 = vadd.f32 %v1985, %v2248
      %v2250 = vpop.f32.mrf.mxu0
      %2251 = vmatprep.mubr.bf16.mxu0 0
      %2252 = vmatmul.mubr.bf16.gmra.mxu0 %v2103
      %v2253 = vpop.f32.mrf.mxu0
      %v2254 = vadd.f32 %v1990, %v2253
      %v2255 = vpop.f32.mrf.mxu0
      %v2256 = vpop.f32.mrf.mxu0
      %v2257 = vadd.f32 %v1995, %v2256
      %v2258 = vpop.f32.mrf.mxu0
      %2259 = vmatprep.mubr.bf16.mxu0 0
      %2260 = vmatmul.mubr.bf16.gmra.mxu0 %v2104
      %v2261 = vpop.f32.mrf.mxu0
      %v2262 = vadd.f32 %v2000, %v2261
      %v2263 = vpop.f32.mrf.mxu0
      %v2264 = vpop.f32.mrf.mxu0
      %v2265 = vadd.f32 %v2005, %v2264
      %v2266 = vpop.f32.mrf.mxu0
      %2267 = vmatprep.mubr.bf16.mxu0 0
      %2268 = vmatmul.mubr.bf16.gmra.mxu0 %v2105
      %v2269 = vpop.f32.mrf.mxu0
      %v2270 = vadd.f32 %v2010, %v2269
      %v2271 = vpop.f32.mrf.mxu0
      %v2272 = vpop.f32.mrf.mxu0
      %v2273 = vadd.f32 %v2015, %v2272
      %v2274 = vpop.f32.mrf.mxu0
      %2275 = vmatprep.mubr.bf16.mxu0 0
      %2276 = vmatmul.mubr.bf16.gmra.mxu0 %v2106
      %v2277 = vpop.f32.mrf.mxu0
      %v2278 = vadd.f32 %v2020, %v2277
      %v2279 = vpop.f32.mrf.mxu0
      %v2280 = vpop.f32.mrf.mxu0
      %v2281 = vadd.f32 %v2025, %v2280
      %v2282 = vpop.f32.mrf.mxu0
      %2283 = vdwg.mxu0
      %v2284 = vmax.f32 %v2158, 0.0
      %v2285 = vmax.f32 %v2161, 0.0
      %v2286 = vmax.f32 %v2166, 0.0
      %v2287 = vmax.f32 %v2169, 0.0
      %v2288 = vmax.f32 %v2174, 0.0
      %v2289 = vmax.f32 %v2177, 0.0
      %v2290 = vmax.f32 %v2182, 0.0
      %v2291 = vmax.f32 %v2185, 0.0
      %v2292 = vmax.f32 %v2190, 0.0
      %v2293 = vmax.f32 %v2193, 0.0
      %v2294 = vmax.f32 %v2198, 0.0
      %v2295 = vmax.f32 %v2201, 0.0
      %v2296 = vmax.f32 %v2206, 0.0
      %v2297 = vmax.f32 %v2209, 0.0
      %v2298 = vmax.f32 %v2214, 0.0
      %v2299 = vmax.f32 %v2217, 0.0
      %v2300 = vpack.c.bf16 %v2285, %v2284
      %v2301 = vpack.c.bf16 %v2287, %v2286
      %v2302 = vpack.c.bf16 %v2289, %v2288
      %v2303 = vpack.c.bf16 %v2291, %v2290
      %v2304 = vpack.c.bf16 %v2293, %v2292
      %v2305 = vpack.c.bf16 %v2295, %v2294
      %v2306 = vpack.c.bf16 %v2297, %v2296
      %v2307 = vpack.c.bf16 %v2299, %v2298
      %v2308 = vld [vmem:[%s9] sm:$0xf]
      %v2309 = vld [vmem:[%s9 + $0x4] sm:$0xf]
      %v2310 = vld [vmem:[%s9 + $0x8] sm:$0xf]
      %v2311 = vld [vmem:[%s9 + $0xc] sm:$0xf]
      %v2312 = vld [vmem:[%s9 + $0x10] sm:$0xf]
      %v2313 = vld [vmem:[%s9 + $0x14] sm:$0xf]
      %v2314 = vld [vmem:[%s9 + $0x18] sm:$0xf]
      %v2315 = vld [vmem:[%s9 + $0x1c] sm:$0xf]
      %v2316 = vld [vmem:[%s9 + $0x20] sm:$0xf]
      %v2317 = vld [vmem:[%s9 + $0x24] sm:$0xf]
      %v2318 = vld [vmem:[%s9 + $0x28] sm:$0xf]
      %v2319 = vld [vmem:[%s9 + $0x2c] sm:$0xf]
      %v2320 = vld [vmem:[%s9 + $0x30] sm:$0xf]
      %v2321 = vld [vmem:[%s9 + $0x34] sm:$0xf]
      %v2322 = vld [vmem:[%s9 + $0x38] sm:$0xf]
      %v2323 = vld [vmem:[%s9 + $0x3c] sm:$0xf]
      %v2340 = vunpack.c.l.b16 %v2308
      %v2341 = vunpack.c.l.b16 %v2309
      %v2342 = vunpack.c.l.b16 %v2310
      %v2343 = vunpack.c.l.b16 %v2311
      %v2344 = vunpack.c.l.b16 %v2312
      %v2345 = vunpack.c.l.b16 %v2313
      %v2346 = vunpack.c.l.b16 %v2314
      %v2347 = vunpack.c.l.b16 %v2315
      %v2348 = vunpack.c.l.b16 %v2316
      %v2349 = vunpack.c.l.b16 %v2317
      %v2350 = vunpack.c.l.b16 %v2318
      %v2351 = vunpack.c.l.b16 %v2319
      %v2352 = vunpack.c.l.b16 %v2320
      %v2353 = vunpack.c.l.b16 %v2321
      %v2354 = vunpack.c.l.b16 %v2322
      %v2355 = vunpack.c.l.b16 %v2323
      %v2356 = vpack.c.b16 %v2341, %v2340
      %v2357 = vpack.c.b16 %v2343, %v2342
      %v2358 = vpack.c.b16 %v2345, %v2344
      %v2359 = vpack.c.b16 %v2347, %v2346
      %v2360 = vpack.c.b16 %v2349, %v2348
      %v2361 = vpack.c.b16 %v2351, %v2350
      %v2362 = vpack.c.b16 %v2353, %v2352
      %v2363 = vpack.c.b16 %v2355, %v2354
      %2372 = vmatprep.subr.bf16.mxu0 0
      %2373 = vmatpush1.bf16.msra.mxu0 %v2307
      %2374 = vmatprep.subr.bf16.mxu0 0
      %2375 = vmatpush1.bf16.msra.mxu0 %v2306
      %2376 = vmatprep.subr.bf16.mxu0 0
      %2377 = vmatpush1.bf16.msra.mxu0 %v2305
      %2378 = vmatprep.subr.bf16.mxu0 0
      %2379 = vmatpush1.bf16.msra.mxu0 %v2304
      %2380 = vmatprep.subr.bf16.mxu0 0
      %2381 = vmatpush1.bf16.msra.mxu0 %v2303
      %2382 = vmatprep.subr.bf16.mxu0 0
      %2383 = vmatpush1.bf16.msra.mxu0 %v2302
      %2384 = vmatprep.subr.bf16.mxu0 0
      %2385 = vmatpush1.bf16.msra.mxu0 %v2301
      %2386 = vmatprep.subr.bf16.mxu0 0
      %2387 = vmatpush1.bf16.msra.mxu0 %v2300
      %2388 = vmatprep.subr.bf16.mxu0 0
      %2389 = vmatpush2.bf16.msra.mxu0 0
      %2390 = vmatprep.subr.bf16.mxu0 0
      %2391 = vmatpush2.bf16.msra.mxu0 0
      %2392 = vmatprep.subr.bf16.mxu0 0
      %2393 = vmatpush2.bf16.msra.mxu0 0
      %2394 = vmatprep.subr.bf16.mxu0 0
      %2395 = vmatpush2.bf16.msra.mxu0 0
      %2396 = vmatprep.subr.bf16.mxu0 0
      %2397 = vmatpush2.bf16.msra.mxu0 0
      %2398 = vmatprep.subr.bf16.mxu0 0
      %2399 = vmatpush2.bf16.msra.mxu0 0
      %2400 = vmatprep.subr.bf16.mxu0 0
      %2401 = vmatpush2.bf16.msra.mxu0 0
      %2402 = vmatprep.subr.bf16.mxu0 0
      %2403 = vmatpush2.bf16.msra.mxu0 0
      %2404 = vmatprep.mubr.bf16.mxu0 0
      %2405 = vmatmul.mubr.bf16.gmra.mxu0 %v2356
      %v2406 = vpop.f32.mrf.mxu0
      %v2407 = vadd.f32 %v2222, %v2406
      %v2408 = vpop.f32.mrf.mxu0
      %v2409 = vpop.f32.mrf.mxu0
      %v2410 = vadd.f32 %v2225, %v2409
      %v2411 = vpop.f32.mrf.mxu0
      %2412 = vmatprep.mubr.bf16.mxu0 0
      %2413 = vmatmul.mubr.bf16.gmra.mxu0 %v2357
      %v2414 = vpop.f32.mrf.mxu0
      %v2415 = vadd.f32 %v2230, %v2414
      %v2416 = vpop.f32.mrf.mxu0
      %v2417 = vpop.f32.mrf.mxu0
      %v2418 = vadd.f32 %v2233, %v2417
      %v2419 = vpop.f32.mrf.mxu0
      %2420 = vmatprep.mubr.bf16.mxu0 0
      %2421 = vmatmul.mubr.bf16.gmra.mxu0 %v2358
      %v2422 = vpop.f32.mrf.mxu0
      %v2423 = vadd.f32 %v2238, %v2422
      %v2424 = vpop.f32.mrf.mxu0
      %v2425 = vpop.f32.mrf.mxu0
      %v2426 = vadd.f32 %v2241, %v2425
      %v2427 = vpop.f32.mrf.mxu0
      %2428 = vmatprep.mubr.bf16.mxu0 0
      %2429 = vmatmul.mubr.bf16.gmra.mxu0 %v2359
      %v2430 = vpop.f32.mrf.mxu0
      %v2431 = vadd.f32 %v2246, %v2430
      %v2432 = vpop.f32.mrf.mxu0
      %v2433 = vpop.f32.mrf.mxu0
      %v2434 = vadd.f32 %v2249, %v2433
      %v2435 = vpop.f32.mrf.mxu0
      %2436 = vmatprep.mubr.bf16.mxu0 0
      %2437 = vmatmul.mubr.bf16.gmra.mxu0 %v2360
      %v2438 = vpop.f32.mrf.mxu0
      %v2439 = vadd.f32 %v2254, %v2438
      %v2440 = vpop.f32.mrf.mxu0
      %v2441 = vpop.f32.mrf.mxu0
      %v2442 = vadd.f32 %v2257, %v2441
      %v2443 = vpop.f32.mrf.mxu0
      %2444 = vmatprep.mubr.bf16.mxu0 0
      %2445 = vmatmul.mubr.bf16.gmra.mxu0 %v2361
      %v2446 = vpop.f32.mrf.mxu0
      %v2447 = vadd.f32 %v2262, %v2446
      %v2448 = vpop.f32.mrf.mxu0
      %v2449 = vpop.f32.mrf.mxu0
      %v2450 = vadd.f32 %v2265, %v2449
      %v2451 = vpop.f32.mrf.mxu0
      %2452 = vmatprep.mubr.bf16.mxu0 0
      %2453 = vmatmul.mubr.bf16.gmra.mxu0 %v2362
      %v2454 = vpop.f32.mrf.mxu0
      %v2455 = vadd.f32 %v2270, %v2454
      %v2456 = vpop.f32.mrf.mxu0
      %v2457 = vpop.f32.mrf.mxu0
      %v2458 = vadd.f32 %v2273, %v2457
      %v2459 = vpop.f32.mrf.mxu0
      %2460 = vmatprep.mubr.bf16.mxu0 0
      %2461 = vmatmul.mubr.bf16.gmra.mxu0 %v2363
      %v2462 = vpop.f32.mrf.mxu0
      %v2463 = vadd.f32 %v2278, %v2462
      %v2464 = vpop.f32.mrf.mxu0
      %v2465 = vpop.f32.mrf.mxu0
      %v2466 = vadd.f32 %v2281, %v2465
      %v2467 = vpop.f32.mrf.mxu0
      %2468 = vdwg.mxu0
      %v2469 = vpack.c.bf16 %v2410, %v2407
      %v2470 = vpack.c.bf16 %v2418, %v2415
      %v2471 = vpack.c.bf16 %v2426, %v2423
      %v2472 = vpack.c.bf16 %v2434, %v2431
      %v2473 = vpack.c.bf16 %v2442, %v2439
      %v2474 = vpack.c.bf16 %v2450, %v2447
      %v2475 = vpack.c.bf16 %v2458, %v2455
      %v2476 = vpack.c.bf16 %v2466, %v2463
      %v2477 = vld [vmem:[%s10] sm:$0xf]
      %v2478 = vld [vmem:[%s10 + $0x4] sm:$0xf]
      %v2479 = vld [vmem:[%s10 + $0x8] sm:$0xf]
      %v2480 = vld [vmem:[%s10 + $0xc] sm:$0xf]
      %v2481 = vld [vmem:[%s10 + $0x10] sm:$0xf]
      %v2482 = vld [vmem:[%s10 + $0x14] sm:$0xf]
      %v2483 = vld [vmem:[%s10 + $0x18] sm:$0xf]
      %v2484 = vld [vmem:[%s10 + $0x1c] sm:$0xf]
      %v2485 = vld [vmem:[%s11] sm:$0xff]
      %v2486 = vld [vmem:[%s11 + $0x8] sm:$0xff]
      %v2487 = vld [vmem:[%s11 + $0x10] sm:$0xff]
      %v2488 = vld [vmem:[%s11 + $0x18] sm:$0xff]
      %v2489 = vld [vmem:[%s11 + $0x20] sm:$0xff]
      %v2490 = vld [vmem:[%s11 + $0x28] sm:$0xff]
      %v2491 = vld [vmem:[%s11 + $0x30] sm:$0xff]
      %v2492 = vld [vmem:[%s11 + $0x38] sm:$0xff]
      %2494 = vset.pattern.permute.xlu0 0
      %2495 = vperm.xlu0 %2494, %v2485
      %v2496 = vpop.permute.xlu0 %2495
      %2499 = vset.pattern.permute.xlu0 0
      %2500 = vperm.xlu0 %2499, %v2486
      %v2501 = vpop.permute.xlu0 %2500
      %2504 = vset.pattern.permute.xlu0 0
      %2505 = vperm.xlu0 %2504, %v2487
      %v2506 = vpop.permute.xlu0 %2505
      %2509 = vset.pattern.permute.xlu0 0
      %2510 = vperm.xlu0 %2509, %v2488
      %v2511 = vpop.permute.xlu0 %2510
      %2514 = vset.pattern.permute.xlu0 0
      %2515 = vperm.xlu0 %2514, %v2489
      %v2516 = vpop.permute.xlu0 %2515
      %2519 = vset.pattern.permute.xlu0 0
      %2520 = vperm.xlu0 %2519, %v2490
      %v2521 = vpop.permute.xlu0 %2520
      %2524 = vset.pattern.permute.xlu0 0
      %2525 = vperm.xlu0 %2524, %v2491
      %v2526 = vpop.permute.xlu0 %2525
      %2529 = vset.pattern.permute.xlu0 0
      %2530 = vperm.xlu0 %2529, %v2492
      %v2531 = vpop.permute.xlu0 %2530
      %v2541 = vunpack.c.l.b16 %v2477
      %v2542 = vunpack.c.l.b16 %v2478
      %v2543 = vunpack.c.l.b16 %v2479
      %v2544 = vunpack.c.l.b16 %v2480
      %v2545 = vunpack.c.l.b16 %v2481
      %v2546 = vunpack.c.l.b16 %v2482
      %v2547 = vunpack.c.l.b16 %v2483
      %v2548 = vunpack.c.l.b16 %v2484
      %v2549 = vpack.c.b16 %v2542, %v2541
      %v2550 = vpack.c.b16 %v2544, %v2543
      %v2551 = vpack.c.b16 %v2546, %v2545
      %v2552 = vpack.c.b16 %v2548, %v2547
      %2557 = vmatprep.subr.bf16.mxu0 0
      %2558 = vmatpush1.bf16.msra.mxu0 %v2476
      %2559 = vmatprep.subr.bf16.mxu0 0
      %2560 = vmatpush1.bf16.msra.mxu0 %v2475
      %2561 = vmatprep.subr.bf16.mxu0 0
      %2562 = vmatpush1.bf16.msra.mxu0 %v2474
      %2563 = vmatprep.subr.bf16.mxu0 0
      %2564 = vmatpush1.bf16.msra.mxu0 %v2473
      %2565 = vmatprep.subr.bf16.mxu0 0
      %2566 = vmatpush1.bf16.msra.mxu0 %v2472
      %2567 = vmatprep.subr.bf16.mxu0 0
      %2568 = vmatpush1.bf16.msra.mxu0 %v2471
      %2569 = vmatprep.subr.bf16.mxu0 0
      %2570 = vmatpush1.bf16.msra.mxu0 %v2470
      %2571 = vmatprep.subr.bf16.mxu0 0
      %2572 = vmatpush1.bf16.msra.mxu0 %v2469
      %2573 = vmatprep.subr.bf16.mxu0 0
      %2574 = vmatpush2.bf16.msra.mxu0 0
      %2575 = vmatprep.subr.bf16.mxu0 0
      %2576 = vmatpush2.bf16.msra.mxu0 0
      %2577 = vmatprep.subr.bf16.mxu0 0
      %2578 = vmatpush2.bf16.msra.mxu0 0
      %2579 = vmatprep.subr.bf16.mxu0 0
      %2580 = vmatpush2.bf16.msra.mxu0 0
      %2581 = vmatprep.subr.bf16.mxu0 0
      %2582 = vmatpush2.bf16.msra.mxu0 0
      %2583 = vmatprep.subr.bf16.mxu0 0
      %2584 = vmatpush2.bf16.msra.mxu0 0
      %2585 = vmatprep.subr.bf16.mxu0 0
      %2586 = vmatpush2.bf16.msra.mxu0 0
      %2587 = vmatprep.subr.bf16.mxu0 0
      %2588 = vmatpush2.bf16.msra.mxu0 0
      %2589 = vmatprep.mubr.bf16.mxu0 0
      %2590 = vmatmul.mubr.bf16.gmra.mxu0 %v2549
      %v2591 = vpop.f32.mrf.mxu0
      %v2592 = vadd.f32 %v2496, %v2591
      %v2593 = vpop.f32.mrf.mxu0
      %v2594 = vpop.f32.mrf.mxu0
      %v2595 = vadd.f32 %v2501, %v2594
      %v2596 = vpop.f32.mrf.mxu0
      %2597 = vmatprep.mubr.bf16.mxu0 0
      %2598 = vmatmul.mubr.bf16.gmra.mxu0 %v2550
      %v2599 = vpop.f32.mrf.mxu0
      %v2600 = vadd.f32 %v2506, %v2599
      %v2601 = vpop.f32.mrf.mxu0
      %v2602 = vpop.f32.mrf.mxu0
      %v2603 = vadd.f32 %v2511, %v2602
      %v2604 = vpop.f32.mrf.mxu0
      %2605 = vmatprep.mubr.bf16.mxu0 0
      %2606 = vmatmul.mubr.bf16.gmra.mxu0 %v2551
      %v2607 = vpop.f32.mrf.mxu0
      %v2608 = vadd.f32 %v2516, %v2607
      %v2609 = vpop.f32.mrf.mxu0
      %v2610 = vpop.f32.mrf.mxu0
      %v2611 = vadd.f32 %v2521, %v2610
      %v2612 = vpop.f32.mrf.mxu0
      %2613 = vmatprep.mubr.bf16.mxu0 0
      %2614 = vmatmul.mubr.bf16.gmra.mxu0 %v2552
      %v2615 = vpop.f32.mrf.mxu0
      %v2616 = vadd.f32 %v2526, %v2615
      %v2617 = vpop.f32.mrf.mxu0
      %v2618 = vpop.f32.mrf.mxu0
      %v2619 = vadd.f32 %v2531, %v2618
      %v2620 = vpop.f32.mrf.mxu0
      %2621 = vdwg.mxu0
      %v2622 = vmax.f32 %v2592, 0.0
      %v2623 = vmax.f32 %v2595, 0.0
      %v2624 = vmax.f32 %v2600, 0.0
      %v2625 = vmax.f32 %v2603, 0.0
      %v2626 = vmax.f32 %v2608, 0.0
      %v2627 = vmax.f32 %v2611, 0.0
      %v2628 = vmax.f32 %v2616, 0.0
      %v2629 = vmax.f32 %v2619, 0.0
      %v2630 = vpack.c.bf16 %v2623, %v2622
      %v2631 = vpack.c.bf16 %v2625, %v2624
      %v2632 = vpack.c.bf16 %v2627, %v2626
      %v2633 = vpack.c.bf16 %v2629, %v2628
      %v2634 = vld [vmem:[%s12] sm:$0x3]
      %v2635 = vld [vmem:[%s13] sm:$0x7]
      %2637 = vset.pattern.permute.xlu0 0
      %2638 = vperm.xlu0 %2637, %v2635
      %v2639 = vpop.permute.xlu0 %2638
      %v2642 = vsel %vm1705, %v2634, 0
      %2644 = vmatprep.subr.bf16.mxu0 0
      %2645 = vmatpush1.bf16.msra.mxu0 0
      %2646 = vmatprep.subr.bf16.mxu0 0
      %2647 = vmatpush1.bf16.msra.mxu0 0
      %2648 = vmatprep.subr.bf16.mxu0 0
      %2649 = vmatpush1.bf16.msra.mxu0 0
      %2650 = vmatprep.subr.bf16.mxu0 0
      %2651 = vmatpush1.bf16.msra.mxu0 0
      %2652 = vmatprep.subr.bf16.mxu0 0
      %2653 = vmatpush1.bf16.msra.mxu0 %v2633
      %2654 = vmatprep.subr.bf16.mxu0 0
      %2655 = vmatpush1.bf16.msra.mxu0 %v2632
      %2656 = vmatprep.subr.bf16.mxu0 0
      %2657 = vmatpush1.bf16.msra.mxu0 %v2631
      %2658 = vmatprep.subr.bf16.mxu0 0
      %2659 = vmatpush1.bf16.msra.mxu0 %v2630
      %2660 = vmatprep.subr.bf16.mxu0 0
      %2661 = vmatpush2.bf16.msra.mxu0 0
      %2662 = vmatprep.subr.bf16.mxu0 0
      %2663 = vmatpush2.bf16.msra.mxu0 0
      %2664 = vmatprep.subr.bf16.mxu0 0
      %2665 = vmatpush2.bf16.msra.mxu0 0
      %2666 = vmatprep.subr.bf16.mxu0 0
      %2667 = vmatpush2.bf16.msra.mxu0 0
      %2668 = vmatprep.subr.bf16.mxu0 0
      %2669 = vmatpush2.bf16.msra.mxu0 0
      %2670 = vmatprep.subr.bf16.mxu0 0
      %2671 = vmatpush2.bf16.msra.mxu0 0
      %2672 = vmatprep.subr.bf16.mxu0 0
      %2673 = vmatpush2.bf16.msra.mxu0 0
      %2674 = vmatprep.subr.bf16.mxu0 0
      %2675 = vmatpush2.bf16.msra.mxu0 0
      %2676 = vmatprep.mubr.bf16.mxu0 0
      %2677 = vmatmul.mubr.bf16.gmra.mxu0 %v2642
      %v2678 = vpop.f32.mrf.mxu0
      %v2679 = vadd.f32 %v2639, %v2678
      %v2680 = vpop.f32.mrf.mxu0
      %v2681 = vpop.f32.mrf.mxu0
      %v2682 = vpop.f32.mrf.mxu0
      %2683 = vdwg.mxu0
      %v2684 = vtanh.pop %v2679
      %v2685 = vmul.f32 %v2684, 0.5
      %vm2686 = vcmask 518144
      %2687 = vst.msk [vmem:[%s536] sm:$0x7] %vm2686, %v2685
      %p2688 = scmp.lt.s32.totalorder %s29, 1
      %s2689 = scalar_select %p2688, %s29, 1
      %p2690 = scmp.lt.s32.totalorder %s30, 0
      %s2691 = scalar_select %p2690, %s30, 0
      %s2692 = sadd.s32 %s2691, %s2689
      %s2693 = smul.addr %s2692, 4
      %s2694 = scalar_lea.vmem %s14, %s2693
      // Predicated region
      $region77: #{seed_generator_forward.3} parent=75 // pred_check
        %p2695 = pneg %p368
      $region78: #{seed_generator_forward.3} parent=75 // pred_check_branch
        %2697 = sbr.rel (%p2695) target = $region80
      $region79: #{seed_generator_forward.3} parent=75 // pred_region
        _
      $region80: #{seed_generator_forward.3} parent=75 // pred_fallthru
        _
    $region76: #{seed_generator_forward.3} parent=5 // pred_fallthru
      _
    %p2698 = scmp.le.s32.totalorder 2, %s20
    // Predicated region
    $region81: #{seed_generator_forward.3} parent=5 // pred_check
      %p2699 = pneg %p2698
    $region82: #{seed_generator_forward.3} parent=5 // pred_check_branch
      %2701 = sbr.rel (%p2699) target = $region84
    $region83: #{seed_generator_forward.3} parent=5 // pred_region
      %s2702 = ssub.s32 %s20, 2
      // Predicated region
      $region85: #{seed_generator_forward.3} parent=83 // pred_check
        %p2703 = pneg %p374
      $region86: #{seed_generator_forward.3} parent=83 // pred_check_branch
        %2705 = sbr.rel (%p2703) target = $region88
      $region87: #{seed_generator_forward.3} parent=83 // pred_region
        %p2706 = scmp.lt.s32.totalorder %s31, 1
        %s2707 = scalar_select %p2706, %s31, 1
        %p2708 = scmp.lt.s32.totalorder %s32, 0
        %s2709 = scalar_select %p2708, %s32, 0
        %s2710 = sadd.s32 %s2709, %s2707
        %s2711 = smul.addr %s2710, 4
        %s2712 = scalar_lea.vmem %s14, %s2711
      $region88: #{seed_generator_forward.3} parent=83 // pred_fallthru
        _
    $region84: #{seed_generator_forward.3} parent=5 // pred_fallthru
      _
  $region6: #{seed_generator_forward.3} parent=0 // loop_footer
    %s24 = sadd.s32 1, %s20
  $region7: #{seed_generator_forward.3} parent=0 // loop_footer_branch
    %19 = sbr.rel target = $region3
  $region8: #{seed_generator_forward.3} parent=0 // loop_exit
    _

// kernel: seed_generator_forward.2
$region0: #{seed_generator_forward.2}
  #allocation0 [shape = 'u32[]', space=smem, size = 0x4, offset = 0x4, fixed_abs, tag = 'smem constant byte address 0x4 - core index']
  #allocation1 [shape = 'u32[144,128]{1,0:T(1,128)}', space=vmem, size = 0x12000, scoped, tag = 'internal scratch']
  %s0 = inlined_call_operand.vmem [shape: bf16[2,128], index: 0, kind: input, shape index: {}]
  %s1 = inlined_call_operand.hbm [shape: bf16[128,8192], index: 1, kind: input, shape index: {}]
  %s2 = inlined_call_operand.vmem [shape: f32[2,8192], index: 2, kind: output, shape index: {}]
  %s3 = sld [smem:[#allocation0]]
  $region45: #{seed_generator_forward.2} parent=0
    _
  %s5 = ssub.s32 1, %s3
  %s6 = scalar_select 0, %s5, %s3
  $region1: #{seed_generator_forward.2} parent=0
    #allocation2 [shape = 'u8[2097152]{0}', space=vmem, size = 0x200000, scoped, tag = 'input window, operand 1']
    #allocation3 [shape = 's32[2]{0}', space=sflag, size = 0x8, scoped, tag = 'scoped memory for seed_generator_forward.2']
    %7 = vsyncpa [#allocation3], 0
    %s8 = scalar_lea.sflag [#allocation3], 1
    %9 = vsyncpa %s8, 0
    loop: start=0, step=1, limit=4
    $region2: #{seed_generator_forward.2} parent=1 // loop_pre_header
      _
    $region3: #{seed_generator_forward.2} parent=1 // loop_header
      %s11 = sphi 0, %s15
      %p12 = scmp.ge.s32.totalorder %s11, 4
      %s19 = sphi 0, %s19
      %s21 = sphi 0, %s19
      %s22 = sphi 0, %s21
      %s36 = sphi 0, %s22
      %s42 = sphi 0, %s44
      %s45 = sphi 0, %s42
      %s46 = sphi 0, %s45
      %s62 = sphi 0, %s46
      %s68 = sphi 0, %s70
      %s71 = sphi 0, %s68
      %s72 = sphi 0, %s71
      %s88 = sphi 0, %s72
    $region4: #{seed_generator_forward.2} parent=1 // loop_header_branch
      %14 = sbr.rel (%p12) target = $region8
    $region5: #{seed_generator_forward.2} parent=1 // loop_body
      %s16 = ssub.s32 %s11, 1
      %s17 = ssub.s32 %s11, 2
      %s18 = sadd.s32 %s11, 1
      %s20 = sadd.s32 %s19, 1
      %p23 = scmp.eq.s32.totalorder %s11, 1
      %p24 = scmp.ne.s32.totalorder %s19, %s21
      %p25 = scmp.eq.s32.totalorder %s11, 0
      %p26 = por %p24, %p25
      %p27 = scmp.ne.s32.totalorder %s19, %s21
      %p28 = scmp.eq.s32.totalorder %s16, 1
      %p29 = por %p27, %p28
      %p30 = scmp.ne.s32.totalorder %s21, %s22
      %p31 = scmp.eq.s32.totalorder %s16, 0
      %p32 = por %p30, %p31
      %p33 = scmp.ne.s32.totalorder %s21, %s22
      %p34 = scmp.eq.s32.totalorder %s17, 1
      %p35 = por %p33, %p34
      %p37 = scmp.ne.s32.totalorder %s22, %s36
      %p38 = scmp.eq.s32.totalorder %s17, 0
      %p39 = por %p37, %p38
      %s40 = ssub.s32 %s11, %s18
      %p41 = scmp.eq.s32.totalorder %s40, 0
      %s43 = sadd.s32 %s42, 1
      %s44 = scalar_select %p41, %s42, %s43
      %p47 = pneg %p41
      %p48 = scmp.eq.s32.totalorder %s11, 1
      %p49 = por %p47, %p48
      %p50 = scmp.ne.s32.totalorder %s42, %s45
      %p51 = scmp.eq.s32.totalorder %s11, 0
      %p52 = por %p50, %p51
      %p53 = scmp.ne.s32.totalorder %s42, %s45
      %p54 = scmp.eq.s32.totalorder %s16, 1
      %p55 = por %p53, %p54
      %p56 = scmp.ne.s32.totalorder %s45, %s46
      %p57 = scmp.eq.s32.totalorder %s16, 0
      %p58 = por %p56, %p57
      %p59 = scmp.ne.s32.totalorder %s45, %s46
      %p60 = scmp.eq.s32.totalorder %s17, 1
      %p61 = por %p59, %p60
      %p63 = scmp.ne.s32.totalorder %s46, %s62
      %p64 = scmp.eq.s32.totalorder %s17, 0
      %p65 = por %p63, %p64
      %s66 = ssub.s32 %s11, %s18
      %p67 = scmp.eq.s32.totalorder %s66, 0
      %s69 = sadd.s32 %s68, 1
      %s70 = scalar_select %p67, %s68, %s69
      %p73 = pneg %p67
      %p74 = scmp.eq.s32.totalorder %s11, 1
      %p75 = por %p73, %p74
      %p76 = scmp.ne.s32.totalorder %s68, %s71
      %p77 = scmp.eq.s32.totalorder %s11, 0
      %p78 = por %p76, %p77
      %p79 = scmp.ne.s32.totalorder %s68, %s71
      %p80 = scmp.eq.s32.totalorder %s16, 1
      %p81 = por %p79, %p80
      %p82 = scmp.ne.s32.totalorder %s71, %s72
      %p83 = scmp.eq.s32.totalorder %s16, 0
      %p84 = por %p82, %p83
      %p85 = scmp.ne.s32.totalorder %s71, %s72
      %p86 = scmp.eq.s32.totalorder %s17, 1
      %p87 = por %p85, %p86
      %p89 = scmp.ne.s32.totalorder %s72, %s88
      %p90 = scmp.eq.s32.totalorder %s17, 0
      %p91 = por %p89, %p90
      %p92 = scmp.le.s32.totalorder 1, %s11
      %p93 = scmp.lt.s32.totalorder %s11, 3
      %p94 = pnand %p92, %p93
      %p95 = pneg %p94
      // Predicated region
      $region9: #{seed_generator_forward.2} parent=5 // pred_check
        _
      $region10: #{seed_generator_forward.2} parent=5 // pred_check_branch
        %97 = sbr.rel (%p94) target = $region12
      $region11: #{seed_generator_forward.2} parent=5 // pred_region
        %s98 = ssub.s32 %s11, 1
        // Predicated region
        $region13: #{seed_generator_forward.2} parent=11 // pred_check
          %p99 = pneg %p32
        $region14: #{seed_generator_forward.2} parent=11 // pred_check_branch
          %101 = sbr.rel (%p99) target = $region16
        $region15: #{seed_generator_forward.2} parent=11 // pred_region
          _
        $region16: #{seed_generator_forward.2} parent=11 // pred_fallthru
          _
      $region12: #{seed_generator_forward.2} parent=5 // pred_fallthru
        _
      %p102 = scmp.lt.s32.totalorder %s11, 2
      // Predicated region
      $region17: #{seed_generator_forward.2} parent=5 // pred_check
        %p103 = pneg %p102
      $region18: #{seed_generator_forward.2} parent=5 // pred_check_branch
        %105 = sbr.rel (%p103) target = $region20
      $region19: #{seed_generator_forward.2} parent=5 // pred_region
        // Predicated region
        $region21: #{seed_generator_forward.2} parent=19 // pred_check
          %p106 = pneg %p52
        $region22: #{seed_generator_forward.2} parent=19 // pred_check_branch
          %108 = sbr.rel (%p106) target = $region24
        $region23: #{seed_generator_forward.2} parent=19 // pred_region
          %s109 = sand.u32 %s42, 1
          %s110 = scalar_lea.sflag [#allocation3], %s109
          %s111 = sand.u32 %s42, 1
          %s112 = smul.addr %s111, 2048
          %s113 = scalar_lea.vmem [#allocation2], %s112
          %s114 = smul.u32 32, %s11
          %s116 = ssub.s32 32768, 32768
          %117 = vsyncadd %s110, %s116
          %s118 = smul.addr %s114, 64
          %s119 = scalar_lea.hbm %s1, %s118
          %s120 = sshll.u32 %s113, 4
          %s121 = int_to_ptr.vmem [resolvable:$true] %s120
          %126 = dma.hbm_to_vmem [thread:$0]  %s119, 32768, %s121, %s110, 4096, 2048, 128
        $region24: #{seed_generator_forward.2} parent=19 // pred_fallthru
          _
      $region20: #{seed_generator_forward.2} parent=5 // pred_fallthru
        _
      %p127 = scmp.le.s32.totalorder 1, %s11
      %p128 = scmp.lt.s32.totalorder %s11, 3
      %p129 = pnand %p127, %p128
      %p130 = pneg %p129
      // Predicated region
      $region25: #{seed_generator_forward.2} parent=5 // pred_check
        _
      $region26: #{seed_generator_forward.2} parent=5 // pred_check_branch
        %132 = sbr.rel (%p129) target = $region28
      $region27: #{seed_generator_forward.2} parent=5 // pred_region
        %s133 = ssub.s32 %s11, 1
        %s134 = sand.u32 %s45, 1
        %s135 = scalar_lea.sflag [#allocation3], %s134
        %s136 = sand.u32 %s45, 1
        %s137 = smul.addr %s136, 2048
        %s138 = scalar_lea.vmem [#allocation2], %s137
        // Predicated region
        $region29: #{seed_generator_forward.2} parent=27 // pred_check
          %p139 = pneg %p58
        $region30: #{seed_generator_forward.2} parent=27 // pred_check_branch
          %141 = sbr.rel (%p139) target = $region32
        $region31: #{seed_generator_forward.2} parent=27 // pred_region
          %142 = dma.done %s135, 32768
        $region32: #{seed_generator_forward.2} parent=27 // pred_fallthru
          _
        %p143 = pneg %p32
        %p144 = pneg %p29
        %s145 = sand.u32 %s45, 1
        %s146 = scalar_lea.sflag [#allocation3], %s145
        %s147 = sand.u32 %s45, 1
        %s148 = smul.addr %s147, 2048
        %s149 = scalar_lea.vmem [#allocation2], %s148
        %p150 = pneg %p58
        %p151 = pneg %p55
        %p152 = pneg %p84
        %p153 = pneg %p81
        %s154 = smul.u32 32, %s16
        %p155 = scmp.lt.s32.totalorder %s154, 63
        %s156 = scalar_select %p155, %s154, 63
        %s157 = smul.addr %s156, 2
        %s158 = scalar_lea.vmem %s2, %s157
        %s159 = smul.u32 32, %s16
        %s160 = smul.u32 32, %s16
        %p161 = scmp.lt.s32.totalorder %s160, 63
        %s162 = scalar_select %p161, %s160, 63
        %s163 = smul.addr %s162, 2
        %s164 = scalar_lea.vmem %s2, %s163
        %s165 = smul.u32 32, %s16
        %v167 = vld [vmem:[%s0] sm:$0x1]
        %v168 = vld [vmem:[%s138] sm:$0xff]
        %v169 = vld [vmem:[%s138 + $0x8] sm:$0xff]
        %v170 = vld [vmem:[%s138 + $0x10] sm:$0xff]
        %v171 = vld [vmem:[%s138 + $0x18] sm:$0xff]
        %v172 = vld [vmem:[%s138 + $0x20] sm:$0xff]
        %v173 = vld [vmem:[%s138 + $0x28] sm:$0xff]
        %v174 = vld [vmem:[%s138 + $0x30] sm:$0xff]
        %v175 = vld [vmem:[%s138 + $0x38] sm:$0xff]
        %v176 = vld [vmem:[%s138 + $0x40] sm:$0xff]
        %v177 = vld [vmem:[%s138 + $0x48] sm:$0xff]
        %v178 = vld [vmem:[%s138 + $0x50] sm:$0xff]
        %v179 = vld [vmem:[%s138 + $0x58] sm:$0xff]
        %v180 = vld [vmem:[%s138 + $0x60] sm:$0xff]
        %v181 = vld [vmem:[%s138 + $0x68] sm:$0xff]
        %v182 = vld [vmem:[%s138 + $0x70] sm:$0xff]
        %v183 = vld [vmem:[%s138 + $0x78] sm:$0xff]
        %v184 = vld [vmem:[%s138 + $0x80] sm:$0xff]
        %v185 = vld [vmem:[%s138 + $0x88] sm:$0xff]
        %v186 = vld [vmem:[%s138 + $0x90] sm:$0xff]
        %v187 = vld [vmem:[%s138 + $0x98] sm:$0xff]
        %v188 = vld [vmem:[%s138 + $0xa0] sm:$0xff]
        %v189 = vld [vmem:[%s138 + $0xa8] sm:$0xff]
        %v190 = vld [vmem:[%s138 + $0xb0] sm:$0xff]
        %v191 = vld [vmem:[%s138 + $0xb8] sm:$0xff]
        %v192 = vld [vmem:[%s138 + $0xc0] sm:$0xff]
        %v193 = vld [vmem:[%s138 + $0xc8] sm:$0xff]
        %v194 = vld [vmem:[%s138 + $0xd0] sm:$0xff]
        %v195 = vld [vmem:[%s138 + $0xd8] sm:$0xff]
        %v196 = vld [vmem:[%s138 + $0xe0] sm:$0xff]
        %v197 = vld [vmem:[%s138 + $0xe8] sm:$0xff]
        %v198 = vld [vmem:[%s138 + $0xf0] sm:$0xff]
        %v199 = vld [vmem:[%s138 + $0xf8] sm:$0xff]
        %v200 = vld [vmem:[%s138 + $0x100] sm:$0xff]
        %v201 = vld [vmem:[%s138 + $0x108] sm:$0xff]
        %v202 = vld [vmem:[%s138 + $0x110] sm:$0xff]
        %v203 = vld [vmem:[%s138 + $0x118] sm:$0xff]
        %v204 = vld [vmem:[%s138 + $0x120] sm:$0xff]
        %v205 = vld [vmem:[%s138 + $0x128] sm:$0xff]
        %v206 = vld [vmem:[%s138 + $0x130] sm:$0xff]
        %v207 = vld [vmem:[%s138 + $0x138] sm:$0xff]
        %v208 = vld [vmem:[%s138 + $0x140] sm:$0xff]
        %v209 = vld [vmem:[%s138 + $0x148] sm:$0xff]
        %v210 = vld [vmem:[%s138 + $0x150] sm:$0xff]
        %v211 = vld [vmem:[%s138 + $0x158] sm:$0xff]
        %v212 = vld [vmem:[%s138 + $0x160] sm:$0xff]
        %v213 = vld [vmem:[%s138 + $0x168] sm:$0xff]
        %v214 = vld [vmem:[%s138 + $0x170] sm:$0xff]
        %v215 = vld [vmem:[%s138 + $0x178] sm:$0xff]
        %v216 = vld [vmem:[%s138 + $0x180] sm:$0xff]
        %v217 = vld [vmem:[%s138 + $0x188] sm:$0xff]
        %v218 = vld [vmem:[%s138 + $0x190] sm:$0xff]
        %v219 = vld [vmem:[%s138 + $0x198] sm:$0xff]
        %v220 = vld [vmem:[%s138 + $0x1a0] sm:$0xff]
        %v221 = vld [vmem:[%s138 + $0x1a8] sm:$0xff]
        %v222 = vld [vmem:[%s138 + $0x1b0] sm:$0xff]
        %v223 = vld [vmem:[%s138 + $0x1b8] sm:$0xff]
        %v224 = vld [vmem:[%s138 + $0x1c0] sm:$0xff]
        %v225 = vld [vmem:[%s138 + $0x1c8] sm:$0xff]
        %v226 = vld [vmem:[%s138 + $0x1d0] sm:$0xff]
        %v227 = vld [vmem:[%s138 + $0x1d8] sm:$0xff]
        %v228 = vld [vmem:[%s138 + $0x1e0] sm:$0xff]
        %v229 = vld [vmem:[%s138 + $0x1e8] sm:$0xff]
        %v230 = vld [vmem:[%s138 + $0x1f0] sm:$0xff]
        %v231 = vld [vmem:[%s138 + $0x1f8] sm:$0xff]
        %v232 = vld [vmem:[%s138 + $0x200] sm:$0xff]
        %v233 = vld [vmem:[%s138 + $0x208] sm:$0xff]
        %v234 = vld [vmem:[%s138 + $0x210] sm:$0xff]
        %v235 = vld [vmem:[%s138 + $0x218] sm:$0xff]
        %v236 = vld [vmem:[%s138 + $0x220] sm:$0xff]
        %v237 = vld [vmem:[%s138 + $0x228] sm:$0xff]
        %v238 = vld [vmem:[%s138 + $0x230] sm:$0xff]
        %v239 = vld [vmem:[%s138 + $0x238] sm:$0xff]
        %v240 = vld [vmem:[%s138 + $0x240] sm:$0xff]
        %v241 = vld [vmem:[%s138 + $0x248] sm:$0xff]
        %v242 = vld [vmem:[%s138 + $0x250] sm:$0xff]
        %v243 = vld [vmem:[%s138 + $0x258] sm:$0xff]
        %v244 = vld [vmem:[%s138 + $0x260] sm:$0xff]
        %v245 = vld [vmem:[%s138 + $0x268] sm:$0xff]
        %v246 = vld [vmem:[%s138 + $0x270] sm:$0xff]
        %v247 = vld [vmem:[%s138 + $0x278] sm:$0xff]
        %v248 = vld [vmem:[%s138 + $0x280] sm:$0xff]
        %v249 = vld [vmem:[%s138 + $0x288] sm:$0xff]
        %v250 = vld [vmem:[%s138 + $0x290] sm:$0xff]
        %v251 = vld [vmem:[%s138 + $0x298] sm:$0xff]
        %v252 = vld [vmem:[%s138 + $0x2a0] sm:$0xff]
        %v253 = vld [vmem:[%s138 + $0x2a8] sm:$0xff]
        %v254 = vld [vmem:[%s138 + $0x2b0] sm:$0xff]
        %v255 = vld [vmem:[%s138 + $0x2b8] sm:$0xff]
        %v256 = vld [vmem:[%s138 + $0x2c0] sm:$0xff]
        %v257 = vld [vmem:[%s138 + $0x2c8] sm:$0xff]
        %v258 = vld [vmem:[%s138 + $0x2d0] sm:$0xff]
        %v259 = vld [vmem:[%s138 + $0x2d8] sm:$0xff]
        %v260 = vld [vmem:[%s138 + $0x2e0] sm:$0xff]
        %v261 = vld [vmem:[%s138 + $0x2e8] sm:$0xff]
        %v262 = vld [vmem:[%s138 + $0x2f0] sm:$0xff]
        %v263 = vld [vmem:[%s138 + $0x2f8] sm:$0xff]
        %v264 = vld [vmem:[%s138 + $0x300] sm:$0xff]
        %v265 = vld [vmem:[%s138 + $0x308] sm:$0xff]
        %v266 = vld [vmem:[%s138 + $0x310] sm:$0xff]
        %v267 = vld [vmem:[%s138 + $0x318] sm:$0xff]
        %v268 = vld [vmem:[%s138 + $0x320] sm:$0xff]
        %v269 = vld [vmem:[%s138 + $0x328] sm:$0xff]
        %v270 = vld [vmem:[%s138 + $0x330] sm:$0xff]
        %v271 = vld [vmem:[%s138 + $0x338] sm:$0xff]
        %v272 = vld [vmem:[%s138 + $0x340] sm:$0xff]
        %v273 = vld [vmem:[%s138 + $0x348] sm:$0xff]
        %v274 = vld [vmem:[%s138 + $0x350] sm:$0xff]
        %v275 = vld [vmem:[%s138 + $0x358] sm:$0xff]
        %v276 = vld [vmem:[%s138 + $0x360] sm:$0xff]
        %v277 = vld [vmem:[%s138 + $0x368] sm:$0xff]
        %v278 = vld [vmem:[%s138 + $0x370] sm:$0xff]
        %v279 = vld [vmem:[%s138 + $0x378] sm:$0xff]
        %v280 = vld [vmem:[%s138 + $0x380] sm:$0xff]
        %v281 = vld [vmem:[%s138 + $0x388] sm:$0xff]
        %v282 = vld [vmem:[%s138 + $0x390] sm:$0xff]
        %v283 = vld [vmem:[%s138 + $0x398] sm:$0xff]
        %v284 = vld [vmem:[%s138 + $0x3a0] sm:$0xff]
        %v285 = vld [vmem:[%s138 + $0x3a8] sm:$0xff]
        %v286 = vld [vmem:[%s138 + $0x3b0] sm:$0xff]
        %v287 = vld [vmem:[%s138 + $0x3b8] sm:$0xff]
        %v288 = vld [vmem:[%s138 + $0x3c0] sm:$0xff]
        %v289 = vld [vmem:[%s138 + $0x3c8] sm:$0xff]
        %v290 = vld [vmem:[%s138 + $0x3d0] sm:$0xff]
        %v291 = vld [vmem:[%s138 + $0x3d8] sm:$0xff]
        %v292 = vld [vmem:[%s138 + $0x3e0] sm:$0xff]
        %v293 = vld [vmem:[%s138 + $0x3e8] sm:$0xff]
        %v294 = vld [vmem:[%s138 + $0x3f0] sm:$0xff]
        %v295 = vld [vmem:[%s138 + $0x3f8] sm:$0xff]
        %v296 = vld [vmem:[%s138 + $0x400] sm:$0xff]
        %v297 = vld [vmem:[%s138 + $0x408] sm:$0xff]
        %v298 = vld [vmem:[%s138 + $0x410] sm:$0xff]
        %v299 = vld [vmem:[%s138 + $0x418] sm:$0xff]
        %v300 = vld [vmem:[%s138 + $0x420] sm:$0xff]
        %v301 = vld [vmem:[%s138 + $0x428] sm:$0xff]
        %v302 = vld [vmem:[%s138 + $0x430] sm:$0xff]
        %v303 = vld [vmem:[%s138 + $0x438] sm:$0xff]
        %v304 = vld [vmem:[%s138 + $0x440] sm:$0xff]
        %v305 = vld [vmem:[%s138 + $0x448] sm:$0xff]
        %v306 = vld [vmem:[%s138 + $0x450] sm:$0xff]
        %v307 = vld [vmem:[%s138 + $0x458] sm:$0xff]
        %v308 = vld [vmem:[%s138 + $0x460] sm:$0xff]
        %v309 = vld [vmem:[%s138 + $0x468] sm:$0xff]
        %v310 = vld [vmem:[%s138 + $0x470] sm:$0xff]
        %v311 = vld [vmem:[%s138 + $0x478] sm:$0xff]
        %v312 = vld [vmem:[%s138 + $0x480] sm:$0xff]
        %v313 = vld [vmem:[%s138 + $0x488] sm:$0xff]
        %v314 = vld [vmem:[%s138 + $0x490] sm:$0xff]
        %v315 = vld [vmem:[%s138 + $0x498] sm:$0xff]
        %v316 = vld [vmem:[%s138 + $0x4a0] sm:$0xff]
        %v317 = vld [vmem:[%s138 + $0x4a8] sm:$0xff]
        %v318 = vld [vmem:[%s138 + $0x4b0] sm:$0xff]
        %v319 = vld [vmem:[%s138 + $0x4b8] sm:$0xff]
        %v320 = vld [vmem:[%s138 + $0x4c0] sm:$0xff]
        %v321 = vld [vmem:[%s138 + $0x4c8] sm:$0xff]
        %v322 = vld [vmem:[%s138 + $0x4d0] sm:$0xff]
        %v323 = vld [vmem:[%s138 + $0x4d8] sm:$0xff]
        %v324 = vld [vmem:[%s138 + $0x4e0] sm:$0xff]
        %v325 = vld [vmem:[%s138 + $0x4e8] sm:$0xff]
        %v326 = vld [vmem:[%s138 + $0x4f0] sm:$0xff]
        %v327 = vld [vmem:[%s138 + $0x4f8] sm:$0xff]
        %v328 = vld [vmem:[%s138 + $0x500] sm:$0xff]
        %v329 = vld [vmem:[%s138 + $0x508] sm:$0xff]
        %v330 = vld [vmem:[%s138 + $0x510] sm:$0xff]
        %v331 = vld [vmem:[%s138 + $0x518] sm:$0xff]
        %v332 = vld [vmem:[%s138 + $0x520] sm:$0xff]
        %v333 = vld [vmem:[%s138 + $0x528] sm:$0xff]
        %v334 = vld [vmem:[%s138 + $0x530] sm:$0xff]
        %v335 = vld [vmem:[%s138 + $0x538] sm:$0xff]
        %v336 = vld [vmem:[%s138 + $0x540] sm:$0xff]
        %v337 = vld [vmem:[%s138 + $0x548] sm:$0xff]
        %v338 = vld [vmem:[%s138 + $0x550] sm:$0xff]
        %v339 = vld [vmem:[%s138 + $0x558] sm:$0xff]
        %v340 = vld [vmem:[%s138 + $0x560] sm:$0xff]
        %v341 = vld [vmem:[%s138 + $0x568] sm:$0xff]
        %v342 = vld [vmem:[%s138 + $0x570] sm:$0xff]
        %v343 = vld [vmem:[%s138 + $0x578] sm:$0xff]
        %v344 = vld [vmem:[%s138 + $0x580] sm:$0xff]
        %v345 = vld [vmem:[%s138 + $0x588] sm:$0xff]
        %v346 = vld [vmem:[%s138 + $0x590] sm:$0xff]
        %v347 = vld [vmem:[%s138 + $0x598] sm:$0xff]
        %v348 = vld [vmem:[%s138 + $0x5a0] sm:$0xff]
        %v349 = vld [vmem:[%s138 + $0x5a8] sm:$0xff]
        %v350 = vld [vmem:[%s138 + $0x5b0] sm:$0xff]
        %v351 = vld [vmem:[%s138 + $0x5b8] sm:$0xff]
        %v352 = vld [vmem:[%s138 + $0x5c0] sm:$0xff]
        %v353 = vld [vmem:[%s138 + $0x5c8] sm:$0xff]
        %v354 = vld [vmem:[%s138 + $0x5d0] sm:$0xff]
        %v355 = vld [vmem:[%s138 + $0x5d8] sm:$0xff]
        %v356 = vld [vmem:[%s138 + $0x5e0] sm:$0xff]
        %v357 = vld [vmem:[%s138 + $0x5e8] sm:$0xff]
        %v358 = vld [vmem:[%s138 + $0x5f0] sm:$0xff]
        %v359 = vld [vmem:[%s138 + $0x5f8] sm:$0xff]
        %v360 = vld [vmem:[%s138 + $0x600] sm:$0xff]
        %v361 = vld [vmem:[%s138 + $0x608] sm:$0xff]
        %v362 = vld [vmem:[%s138 + $0x610] sm:$0xff]
        %v363 = vld [vmem:[%s138 + $0x618] sm:$0xff]
        %v364 = vld [vmem:[%s138 + $0x620] sm:$0xff]
        %v365 = vld [vmem:[%s138 + $0x628] sm:$0xff]
        %v366 = vld [vmem:[%s138 + $0x630] sm:$0xff]
        %v367 = vld [vmem:[%s138 + $0x638] sm:$0xff]
        %v368 = vld [vmem:[%s138 + $0x640] sm:$0xff]
        %v369 = vld [vmem:[%s138 + $0x648] sm:$0xff]
        %v370 = vld [vmem:[%s138 + $0x650] sm:$0xff]
        %v371 = vld [vmem:[%s138 + $0x658] sm:$0xff]
        %v372 = vld [vmem:[%s138 + $0x660] sm:$0xff]
        %v373 = vld [vmem:[%s138 + $0x668] sm:$0xff]
        %v374 = vld [vmem:[%s138 + $0x670] sm:$0xff]
        %v375 = vld [vmem:[%s138 + $0x678] sm:$0xff]
        %v376 = vld [vmem:[%s138 + $0x680] sm:$0xff]
        %v377 = vld [vmem:[%s138 + $0x688] sm:$0xff]
        %v378 = vld [vmem:[%s138 + $0x690] sm:$0xff]
        %v379 = vld [vmem:[%s138 + $0x698] sm:$0xff]
        %v380 = vld [vmem:[%s138 + $0x6a0] sm:$0xff]
        %v381 = vld [vmem:[%s138 + $0x6a8] sm:$0xff]
        %v382 = vld [vmem:[%s138 + $0x6b0] sm:$0xff]
        %v383 = vld [vmem:[%s138 + $0x6b8] sm:$0xff]
        %v384 = vld [vmem:[%s138 + $0x6c0] sm:$0xff]
        %v385 = vld [vmem:[%s138 + $0x6c8] sm:$0xff]
        %v386 = vld [vmem:[%s138 + $0x6d0] sm:$0xff]
        %v387 = vld [vmem:[%s138 + $0x6d8] sm:$0xff]
        %v388 = vld [vmem:[%s138 + $0x6e0] sm:$0xff]
        %v389 = vld [vmem:[%s138 + $0x6e8] sm:$0xff]
        %v390 = vld [vmem:[%s138 + $0x6f0] sm:$0xff]
        %v391 = vld [vmem:[%s138 + $0x6f8] sm:$0xff]
        %v392 = vld [vmem:[%s138 + $0x700] sm:$0xff]
        %v393 = vld [vmem:[%s138 + $0x708] sm:$0xff]
        %v394 = vld [vmem:[%s138 + $0x710] sm:$0xff]
        %v395 = vld [vmem:[%s138 + $0x718] sm:$0xff]
        %v396 = vld [vmem:[%s138 + $0x720] sm:$0xff]
        %v397 = vld [vmem:[%s138 + $0x728] sm:$0xff]
        %v398 = vld [vmem:[%s138 + $0x730] sm:$0xff]
        %v399 = vld [vmem:[%s138 + $0x738] sm:$0xff]
        %v400 = vld [vmem:[%s138 + $0x740] sm:$0xff]
        %v401 = vld [vmem:[%s138 + $0x748] sm:$0xff]
        %v402 = vld [vmem:[%s138 + $0x750] sm:$0xff]
        %v403 = vld [vmem:[%s138 + $0x758] sm:$0xff]
        %v404 = vld [vmem:[%s138 + $0x760] sm:$0xff]
        %v405 = vld [vmem:[%s138 + $0x768] sm:$0xff]
        %v406 = vld [vmem:[%s138 + $0x770] sm:$0xff]
        %v407 = vld [vmem:[%s138 + $0x778] sm:$0xff]
        %v408 = vld [vmem:[%s138 + $0x780] sm:$0xff]
        %v409 = vld [vmem:[%s138 + $0x788] sm:$0xff]
        %v410 = vld [vmem:[%s138 + $0x790] sm:$0xff]
        %v411 = vld [vmem:[%s138 + $0x798] sm:$0xff]
        %v412 = vld [vmem:[%s138 + $0x7a0] sm:$0xff]
        %v413 = vld [vmem:[%s138 + $0x7a8] sm:$0xff]
        %v414 = vld [vmem:[%s138 + $0x7b0] sm:$0xff]
        %v415 = vld [vmem:[%s138 + $0x7b8] sm:$0xff]
        %v416 = vld [vmem:[%s138 + $0x7c0] sm:$0xff]
        %v417 = vld [vmem:[%s138 + $0x7c8] sm:$0xff]
        %v418 = vld [vmem:[%s138 + $0x7d0] sm:$0xff]
        %v419 = vld [vmem:[%s138 + $0x7d8] sm:$0xff]
        %v420 = vld [vmem:[%s138 + $0x7e0] sm:$0xff]
        %v421 = vld [vmem:[%s138 + $0x7e8] sm:$0xff]
        %v422 = vld [vmem:[%s138 + $0x7f0] sm:$0xff]
        %v423 = vld [vmem:[%s138 + $0x7f8] sm:$0xff]
        %v680 = vunpack.c.l.b16 %v168
        %v681 = vunpack.c.h.b16 %v168
        %v682 = vunpack.c.l.b16 %v169
        %v683 = vunpack.c.h.b16 %v169
        %v684 = vunpack.c.l.b16 %v170
        %v685 = vunpack.c.h.b16 %v170
        %v686 = vunpack.c.l.b16 %v171
        %v687 = vunpack.c.h.b16 %v171
        %v688 = vunpack.c.l.b16 %v172
        %v689 = vunpack.c.h.b16 %v172
        %v690 = vunpack.c.l.b16 %v173
        %v691 = vunpack.c.h.b16 %v173
        %v692 = vunpack.c.l.b16 %v174
        %v693 = vunpack.c.h.b16 %v174
        %v694 = vunpack.c.l.b16 %v175
        %v695 = vunpack.c.h.b16 %v175
        %v696 = vunpack.c.l.b16 %v176
        %v697 = vunpack.c.h.b16 %v176
        %v698 = vunpack.c.l.b16 %v177
        %v699 = vunpack.c.h.b16 %v177
        %v700 = vunpack.c.l.b16 %v178
        %v701 = vunpack.c.h.b16 %v178
        %v702 = vunpack.c.l.b16 %v179
        %v703 = vunpack.c.h.b16 %v179
        %v704 = vunpack.c.l.b16 %v180
        %v705 = vunpack.c.h.b16 %v180
        %v706 = vunpack.c.l.b16 %v181
        %v707 = vunpack.c.h.b16 %v181
        %v708 = vunpack.c.l.b16 %v182
        %v709 = vunpack.c.h.b16 %v182
        %v710 = vunpack.c.l.b16 %v183
        %v711 = vunpack.c.h.b16 %v183
        %v712 = vunpack.c.l.b16 %v184
        %v713 = vunpack.c.h.b16 %v184
        %v714 = vunpack.c.l.b16 %v185
        %v715 = vunpack.c.h.b16 %v185
        %v716 = vunpack.c.l.b16 %v186
        %v717 = vunpack.c.h.b16 %v186
        %v718 = vunpack.c.l.b16 %v187
        %v719 = vunpack.c.h.b16 %v187
        %v720 = vunpack.c.l.b16 %v188
        %v721 = vunpack.c.h.b16 %v188
        %v722 = vunpack.c.l.b16 %v189
        %v723 = vunpack.c.h.b16 %v189
        %v724 = vunpack.c.l.b16 %v190
        %v725 = vunpack.c.h.b16 %v190
        %v726 = vunpack.c.l.b16 %v191
        %v727 = vunpack.c.h.b16 %v191
        %v728 = vunpack.c.l.b16 %v192
        %v729 = vunpack.c.h.b16 %v192
        %v730 = vunpack.c.l.b16 %v193
        %v731 = vunpack.c.h.b16 %v193
        %v732 = vunpack.c.l.b16 %v194
        %v733 = vunpack.c.h.b16 %v194
        %v734 = vunpack.c.l.b16 %v195
        %v735 = vunpack.c.h.b16 %v195
        %v736 = vunpack.c.l.b16 %v196
        %v737 = vunpack.c.h.b16 %v196
        %v738 = vunpack.c.l.b16 %v197
        %v739 = vunpack.c.h.b16 %v197
        %v740 = vunpack.c.l.b16 %v198
        %v741 = vunpack.c.h.b16 %v198
        %v742 = vunpack.c.l.b16 %v199
        %v743 = vunpack.c.h.b16 %v199
        %v744 = vunpack.c.l.b16 %v200
        %v745 = vunpack.c.h.b16 %v200
        %v746 = vunpack.c.l.b16 %v201
        %v747 = vunpack.c.h.b16 %v201
        %v748 = vunpack.c.l.b16 %v202
        %v749 = vunpack.c.h.b16 %v202
        %v750 = vunpack.c.l.b16 %v203
        %v751 = vunpack.c.h.b16 %v203
        %v752 = vunpack.c.l.b16 %v204
        %v753 = vunpack.c.h.b16 %v204
        %v754 = vunpack.c.l.b16 %v205
        %v755 = vunpack.c.h.b16 %v205
        %v756 = vunpack.c.l.b16 %v206
        %v757 = vunpack.c.h.b16 %v206
        %v758 = vunpack.c.l.b16 %v207
        %v759 = vunpack.c.h.b16 %v207
        %v760 = vunpack.c.l.b16 %v208
        %v761 = vunpack.c.h.b16 %v208
        %v762 = vunpack.c.l.b16 %v209
        %v763 = vunpack.c.h.b16 %v209
        %v764 = vunpack.c.l.b16 %v210
        %v765 = vunpack.c.h.b16 %v210
        %v766 = vunpack.c.l.b16 %v211
        %v767 = vunpack.c.h.b16 %v211
        %v768 = vunpack.c.l.b16 %v212
        %v769 = vunpack.c.h.b16 %v212
        %v770 = vunpack.c.l.b16 %v213
        %v771 = vunpack.c.h.b16 %v213
        %v772 = vunpack.c.l.b16 %v214
        %v773 = vunpack.c.h.b16 %v214
        %v774 = vunpack.c.l.b16 %v215
        %v775 = vunpack.c.h.b16 %v215
        %v776 = vunpack.c.l.b16 %v216
        %v777 = vunpack.c.h.b16 %v216
        %v778 = vunpack.c.l.b16 %v217
        %v779 = vunpack.c.h.b16 %v217
        %v780 = vunpack.c.l.b16 %v218
        %v781 = vunpack.c.h.b16 %v218
        %v782 = vunpack.c.l.b16 %v219
        %v783 = vunpack.c.h.b16 %v219
        %v784 = vunpack.c.l.b16 %v220
        %v785 = vunpack.c.h.b16 %v220
        %v786 = vunpack.c.l.b16 %v221
        %v787 = vunpack.c.h.b16 %v221
        %v788 = vunpack.c.l.b16 %v222
        %v789 = vunpack.c.h.b16 %v222
        %v790 = vunpack.c.l.b16 %v223
        %v791 = vunpack.c.h.b16 %v223
        %v792 = vunpack.c.l.b16 %v224
        %v793 = vunpack.c.h.b16 %v224
        %v794 = vunpack.c.l.b16 %v225
        %v795 = vunpack.c.h.b16 %v225
        %v796 = vunpack.c.l.b16 %v226
        %v797 = vunpack.c.h.b16 %v226
        %v798 = vunpack.c.l.b16 %v227
        %v799 = vunpack.c.h.b16 %v227
        %v800 = vunpack.c.l.b16 %v228
        %v801 = vunpack.c.h.b16 %v228
        %v802 = vunpack.c.l.b16 %v229
        %v803 = vunpack.c.h.b16 %v229
        %v804 = vunpack.c.l.b16 %v230
        %v805 = vunpack.c.h.b16 %v230
        %v806 = vunpack.c.l.b16 %v231
        %v807 = vunpack.c.h.b16 %v231
        %v808 = vunpack.c.l.b16 %v232
        %v809 = vunpack.c.h.b16 %v232
        %v810 = vunpack.c.l.b16 %v233
        %v811 = vunpack.c.h.b16 %v233
        %v812 = vunpack.c.l.b16 %v234
        %v813 = vunpack.c.h.b16 %v234
        %v814 = vunpack.c.l.b16 %v235
        %v815 = vunpack.c.h.b16 %v235
        %v816 = vunpack.c.l.b16 %v236
        %v817 = vunpack.c.h.b16 %v236
        %v818 = vunpack.c.l.b16 %v237
        %v819 = vunpack.c.h.b16 %v237
        %v820 = vunpack.c.l.b16 %v238
        %v821 = vunpack.c.h.b16 %v238
        %v822 = vunpack.c.l.b16 %v239
        %v823 = vunpack.c.h.b16 %v239
        %v824 = vunpack.c.l.b16 %v240
        %v825 = vunpack.c.h.b16 %v240
        %v826 = vunpack.c.l.b16 %v241
        %v827 = vunpack.c.h.b16 %v241
        %v828 = vunpack.c.l.b16 %v242
        %v829 = vunpack.c.h.b16 %v242
        %v830 = vunpack.c.l.b16 %v243
        %v831 = vunpack.c.h.b16 %v243
        %v832 = vunpack.c.l.b16 %v244
        %v833 = vunpack.c.h.b16 %v244
        %v834 = vunpack.c.l.b16 %v245
        %v835 = vunpack.c.h.b16 %v245
        %v836 = vunpack.c.l.b16 %v246
        %v837 = vunpack.c.h.b16 %v246
        %v838 = vunpack.c.l.b16 %v247
        %v839 = vunpack.c.h.b16 %v247
        %v840 = vunpack.c.l.b16 %v248
        %v841 = vunpack.c.h.b16 %v248
        %v842 = vunpack.c.l.b16 %v249
        %v843 = vunpack.c.h.b16 %v249
        %v844 = vunpack.c.l.b16 %v250
        %v845 = vunpack.c.h.b16 %v250
        %v846 = vunpack.c.l.b16 %v251
        %v847 = vunpack.c.h.b16 %v251
        %v848 = vunpack.c.l.b16 %v252
        %v849 = vunpack.c.h.b16 %v252
        %v850 = vunpack.c.l.b16 %v253
        %v851 = vunpack.c.h.b16 %v253
        %v852 = vunpack.c.l.b16 %v254
        %v853 = vunpack.c.h.b16 %v254
        %v854 = vunpack.c.l.b16 %v255
        %v855 = vunpack.c.h.b16 %v255
        %v856 = vunpack.c.l.b16 %v256
        %v857 = vunpack.c.h.b16 %v256
        %v858 = vunpack.c.l.b16 %v257
        %v859 = vunpack.c.h.b16 %v257
        %v860 = vunpack.c.l.b16 %v258
        %v861 = vunpack.c.h.b16 %v258
        %v862 = vunpack.c.l.b16 %v259
        %v863 = vunpack.c.h.b16 %v259
        %v864 = vunpack.c.l.b16 %v260
        %v865 = vunpack.c.h.b16 %v260
        %v866 = vunpack.c.l.b16 %v261
        %v867 = vunpack.c.h.b16 %v261
        %v868 = vunpack.c.l.b16 %v262
        %v869 = vunpack.c.h.b16 %v262
        %v870 = vunpack.c.l.b16 %v263
        %v871 = vunpack.c.h.b16 %v263
        %v872 = vunpack.c.l.b16 %v264
        %v873 = vunpack.c.h.b16 %v264
        %v874 = vunpack.c.l.b16 %v265
        %v875 = vunpack.c.h.b16 %v265
        %v876 = vunpack.c.l.b16 %v266
        %v877 = vunpack.c.h.b16 %v266
        %v878 = vunpack.c.l.b16 %v267
        %v879 = vunpack.c.h.b16 %v267
        %v880 = vunpack.c.l.b16 %v268
        %v881 = vunpack.c.h.b16 %v268
        %v882 = vunpack.c.l.b16 %v269
        %v883 = vunpack.c.h.b16 %v269
        %v884 = vunpack.c.l.b16 %v270
        %v885 = vunpack.c.h.b16 %v270
        %v886 = vunpack.c.l.b16 %v271
        %v887 = vunpack.c.h.b16 %v271
        %v888 = vunpack.c.l.b16 %v272
        %v889 = vunpack.c.h.b16 %v272
        %v890 = vunpack.c.l.b16 %v273
        %v891 = vunpack.c.h.b16 %v273
        %v892 = vunpack.c.l.b16 %v274
        %v893 = vunpack.c.h.b16 %v274
        %v894 = vunpack.c.l.b16 %v275
        %v895 = vunpack.c.h.b16 %v275
        %v896 = vunpack.c.l.b16 %v276
        %v897 = vunpack.c.h.b16 %v276
        %v898 = vunpack.c.l.b16 %v277
        %v899 = vunpack.c.h.b16 %v277
        %v900 = vunpack.c.l.b16 %v278
        %v901 = vunpack.c.h.b16 %v278
        %v902 = vunpack.c.l.b16 %v279
        %v903 = vunpack.c.h.b16 %v279
        %v904 = vunpack.c.l.b16 %v280
        %v905 = vunpack.c.h.b16 %v280
        %v906 = vunpack.c.l.b16 %v281
        %v907 = vunpack.c.h.b16 %v281
        %v908 = vunpack.c.l.b16 %v282
        %v909 = vunpack.c.h.b16 %v282
        %v910 = vunpack.c.l.b16 %v283
        %v911 = vunpack.c.h.b16 %v283
        %v912 = vunpack.c.l.b16 %v284
        %v913 = vunpack.c.h.b16 %v284
        %v914 = vunpack.c.l.b16 %v285
        %v915 = vunpack.c.h.b16 %v285
        %v916 = vunpack.c.l.b16 %v286
        %v917 = vunpack.c.h.b16 %v286
        %v918 = vunpack.c.l.b16 %v287
        %v919 = vunpack.c.h.b16 %v287
        %v920 = vunpack.c.l.b16 %v288
        %v921 = vunpack.c.h.b16 %v288
        %v922 = vunpack.c.l.b16 %v289
        %v923 = vunpack.c.h.b16 %v289
        %v924 = vunpack.c.l.b16 %v290
        %v925 = vunpack.c.h.b16 %v290
        %v926 = vunpack.c.l.b16 %v291
        %v927 = vunpack.c.h.b16 %v291
        %v928 = vunpack.c.l.b16 %v292
        %v929 = vunpack.c.h.b16 %v292
        %v930 = vunpack.c.l.b16 %v293
        %v931 = vunpack.c.h.b16 %v293
        %v932 = vunpack.c.l.b16 %v294
        %v933 = vunpack.c.h.b16 %v294
        %v934 = vunpack.c.l.b16 %v295
        %v935 = vunpack.c.h.b16 %v295
        %v936 = vunpack.c.l.b16 %v296
        %v937 = vunpack.c.h.b16 %v296
        %v938 = vunpack.c.l.b16 %v297
        %v939 = vunpack.c.h.b16 %v297
        %v940 = vunpack.c.l.b16 %v298
        %v941 = vunpack.c.h.b16 %v298
        %v942 = vunpack.c.l.b16 %v299
        %v943 = vunpack.c.h.b16 %v299
        %v944 = vunpack.c.l.b16 %v300
        %v945 = vunpack.c.h.b16 %v300
        %v946 = vunpack.c.l.b16 %v301
        %v947 = vunpack.c.h.b16 %v301
        %v948 = vunpack.c.l.b16 %v302
        %v949 = vunpack.c.h.b16 %v302
        %v950 = vunpack.c.l.b16 %v303
        %v951 = vunpack.c.h.b16 %v303
        %v952 = vunpack.c.l.b16 %v304
        %v953 = vunpack.c.h.b16 %v304
        %v954 = vunpack.c.l.b16 %v305
        %v955 = vunpack.c.h.b16 %v305
        %v956 = vunpack.c.l.b16 %v306
        %v957 = vunpack.c.h.b16 %v306
        %v958 = vunpack.c.l.b16 %v307
        %v959 = vunpack.c.h.b16 %v307
        %v960 = vunpack.c.l.b16 %v308
        %v961 = vunpack.c.h.b16 %v308
        %v962 = vunpack.c.l.b16 %v309
        %v963 = vunpack.c.h.b16 %v309
        %v964 = vunpack.c.l.b16 %v310
        %v965 = vunpack.c.h.b16 %v310
        %v966 = vunpack.c.l.b16 %v311
        %v967 = vunpack.c.h.b16 %v311
        %v968 = vunpack.c.l.b16 %v312
        %v969 = vunpack.c.h.b16 %v312
        %v970 = vunpack.c.l.b16 %v313
        %v971 = vunpack.c.h.b16 %v313
        %v972 = vunpack.c.l.b16 %v314
        %v973 = vunpack.c.h.b16 %v314
        %v974 = vunpack.c.l.b16 %v315
        %v975 = vunpack.c.h.b16 %v315
        %v976 = vunpack.c.l.b16 %v316
        %v977 = vunpack.c.h.b16 %v316
        %v978 = vunpack.c.l.b16 %v317
        %v979 = vunpack.c.h.b16 %v317
        %v980 = vunpack.c.l.b16 %v318
        %v981 = vunpack.c.h.b16 %v318
        %v982 = vunpack.c.l.b16 %v319
        %v983 = vunpack.c.h.b16 %v319
        %v984 = vunpack.c.l.b16 %v320
        %v985 = vunpack.c.h.b16 %v320
        %v986 = vunpack.c.l.b16 %v321
        %v987 = vunpack.c.h.b16 %v321
        %v988 = vunpack.c.l.b16 %v322
        %v989 = vunpack.c.h.b16 %v322
        %v990 = vunpack.c.l.b16 %v323
        %v991 = vunpack.c.h.b16 %v323
        %v992 = vunpack.c.l.b16 %v324
        %v993 = vunpack.c.h.b16 %v324
        %v994 = vunpack.c.l.b16 %v325
        %v995 = vunpack.c.h.b16 %v325
        %v996 = vunpack.c.l.b16 %v326
        %v997 = vunpack.c.h.b16 %v326
        %v998 = vunpack.c.l.b16 %v327
        %v999 = vunpack.c.h.b16 %v327
        %v1000 = vunpack.c.l.b16 %v328
        %v1001 = vunpack.c.h.b16 %v328
        %v1002 = vunpack.c.l.b16 %v329
        %v1003 = vunpack.c.h.b16 %v329
        %v1004 = vunpack.c.l.b16 %v330
        %v1005 = vunpack.c.h.b16 %v330
        %v1006 = vunpack.c.l.b16 %v331
        %v1007 = vunpack.c.h.b16 %v331
        %v1008 = vunpack.c.l.b16 %v332
        %v1009 = vunpack.c.h.b16 %v332
        %v1010 = vunpack.c.l.b16 %v333
        %v1011 = vunpack.c.h.b16 %v333
        %v1012 = vunpack.c.l.b16 %v334
        %v1013 = vunpack.c.h.b16 %v334
        %v1014 = vunpack.c.l.b16 %v335
        %v1015 = vunpack.c.h.b16 %v335
        %v1016 = vunpack.c.l.b16 %v336
        %v1017 = vunpack.c.h.b16 %v336
        %v1018 = vunpack.c.l.b16 %v337
        %v1019 = vunpack.c.h.b16 %v337
        %v1020 = vunpack.c.l.b16 %v338
        %v1021 = vunpack.c.h.b16 %v338
        %v1022 = vunpack.c.l.b16 %v339
        %v1023 = vunpack.c.h.b16 %v339
        %v1024 = vunpack.c.l.b16 %v340
        %v1025 = vunpack.c.h.b16 %v340
        %v1026 = vunpack.c.l.b16 %v341
        %v1027 = vunpack.c.h.b16 %v341
        %v1028 = vunpack.c.l.b16 %v342
        %v1029 = vunpack.c.h.b16 %v342
        %v1030 = vunpack.c.l.b16 %v343
        %v1031 = vunpack.c.h.b16 %v343
        %v1032 = vunpack.c.l.b16 %v344
        %v1033 = vunpack.c.h.b16 %v344
        %v1034 = vunpack.c.l.b16 %v345
        %v1035 = vunpack.c.h.b16 %v345
        %v1036 = vunpack.c.l.b16 %v346
        %v1037 = vunpack.c.h.b16 %v346
        %v1038 = vunpack.c.l.b16 %v347
        %v1039 = vunpack.c.h.b16 %v347
        %v1040 = vunpack.c.l.b16 %v348
        %v1041 = vunpack.c.h.b16 %v348
        %v1042 = vunpack.c.l.b16 %v349
        %v1043 = vunpack.c.h.b16 %v349
        %v1044 = vunpack.c.l.b16 %v350
        %v1045 = vunpack.c.h.b16 %v350
        %v1046 = vunpack.c.l.b16 %v351
        %v1047 = vunpack.c.h.b16 %v351
        %v1048 = vunpack.c.l.b16 %v352
        %v1049 = vunpack.c.h.b16 %v352
        %v1050 = vunpack.c.l.b16 %v353
        %v1051 = vunpack.c.h.b16 %v353
        %v1052 = vunpack.c.l.b16 %v354
        %v1053 = vunpack.c.h.b16 %v354
        %v1054 = vunpack.c.l.b16 %v355
        %v1055 = vunpack.c.h.b16 %v355
        %v1056 = vunpack.c.l.b16 %v356
        %v1057 = vunpack.c.h.b16 %v356
        %v1058 = vunpack.c.l.b16 %v357
        %v1059 = vunpack.c.h.b16 %v357
        %v1060 = vunpack.c.l.b16 %v358
        %v1061 = vunpack.c.h.b16 %v358
        %v1062 = vunpack.c.l.b16 %v359
        %v1063 = vunpack.c.h.b16 %v359
        %v1064 = vunpack.c.l.b16 %v360
        %v1065 = vunpack.c.h.b16 %v360
        %v1066 = vunpack.c.l.b16 %v361
        %v1067 = vunpack.c.h.b16 %v361
        %v1068 = vunpack.c.l.b16 %v362
        %v1069 = vunpack.c.h.b16 %v362
        %v1070 = vunpack.c.l.b16 %v363
        %v1071 = vunpack.c.h.b16 %v363
        %v1072 = vunpack.c.l.b16 %v364
        %v1073 = vunpack.c.h.b16 %v364
        %v1074 = vunpack.c.l.b16 %v365
        %v1075 = vunpack.c.h.b16 %v365
        %v1076 = vunpack.c.l.b16 %v366
        %v1077 = vunpack.c.h.b16 %v366
        %v1078 = vunpack.c.l.b16 %v367
        %v1079 = vunpack.c.h.b16 %v367
        %v1080 = vunpack.c.l.b16 %v368
        %v1081 = vunpack.c.h.b16 %v368
        %v1082 = vunpack.c.l.b16 %v369
        %v1083 = vunpack.c.h.b16 %v369
        %v1084 = vunpack.c.l.b16 %v370
        %v1085 = vunpack.c.h.b16 %v370
        %v1086 = vunpack.c.l.b16 %v371
        %v1087 = vunpack.c.h.b16 %v371
        %v1088 = vunpack.c.l.b16 %v372
        %v1089 = vunpack.c.h.b16 %v372
        %v1090 = vunpack.c.l.b16 %v373
        %v1091 = vunpack.c.h.b16 %v373
        %v1092 = vunpack.c.l.b16 %v374
        %v1093 = vunpack.c.h.b16 %v374
        %v1094 = vunpack.c.l.b16 %v375
        %v1095 = vunpack.c.h.b16 %v375
        %v1096 = vunpack.c.l.b16 %v376
        %v1097 = vunpack.c.h.b16 %v376
        %v1098 = vunpack.c.l.b16 %v377
        %v1099 = vunpack.c.h.b16 %v377
        %v1100 = vunpack.c.l.b16 %v378
        %v1101 = vunpack.c.h.b16 %v378
        %v1102 = vunpack.c.l.b16 %v379
        %v1103 = vunpack.c.h.b16 %v379
        %v1104 = vunpack.c.l.b16 %v380
        %v1105 = vunpack.c.h.b16 %v380
        %v1106 = vunpack.c.l.b16 %v381
        %v1107 = vunpack.c.h.b16 %v381
        %v1108 = vunpack.c.l.b16 %v382
        %v1109 = vunpack.c.h.b16 %v382
        %v1110 = vunpack.c.l.b16 %v383
        %v1111 = vunpack.c.h.b16 %v383
        %v1112 = vunpack.c.l.b16 %v384
        %v1113 = vunpack.c.h.b16 %v384
        %v1114 = vunpack.c.l.b16 %v385
        %v1115 = vunpack.c.h.b16 %v385
        %v1116 = vunpack.c.l.b16 %v386
        %v1117 = vunpack.c.h.b16 %v386
        %v1118 = vunpack.c.l.b16 %v387
        %v1119 = vunpack.c.h.b16 %v387
        %v1120 = vunpack.c.l.b16 %v388
        %v1121 = vunpack.c.h.b16 %v388
        %v1122 = vunpack.c.l.b16 %v389
        %v1123 = vunpack.c.h.b16 %v389
        %v1124 = vunpack.c.l.b16 %v390
        %v1125 = vunpack.c.h.b16 %v390
        %v1126 = vunpack.c.l.b16 %v391
        %v1127 = vunpack.c.h.b16 %v391
        %v1128 = vunpack.c.l.b16 %v392
        %v1129 = vunpack.c.h.b16 %v392
        %v1130 = vunpack.c.l.b16 %v393
        %v1131 = vunpack.c.h.b16 %v393
        %v1132 = vunpack.c.l.b16 %v394
        %v1133 = vunpack.c.h.b16 %v394
        %v1134 = vunpack.c.l.b16 %v395
        %v1135 = vunpack.c.h.b16 %v395
        %v1136 = vunpack.c.l.b16 %v396
        %v1137 = vunpack.c.h.b16 %v396
        %v1138 = vunpack.c.l.b16 %v397
        %v1139 = vunpack.c.h.b16 %v397
        %v1140 = vunpack.c.l.b16 %v398
        %v1141 = vunpack.c.h.b16 %v398
        %v1142 = vunpack.c.l.b16 %v399
        %v1143 = vunpack.c.h.b16 %v399
        %v1144 = vunpack.c.l.b16 %v400
        %v1145 = vunpack.c.h.b16 %v400
        %v1146 = vunpack.c.l.b16 %v401
        %v1147 = vunpack.c.h.b16 %v401
        %v1148 = vunpack.c.l.b16 %v402
        %v1149 = vunpack.c.h.b16 %v402
        %v1150 = vunpack.c.l.b16 %v403
        %v1151 = vunpack.c.h.b16 %v403
        %v1152 = vunpack.c.l.b16 %v404
        %v1153 = vunpack.c.h.b16 %v404
        %v1154 = vunpack.c.l.b16 %v405
        %v1155 = vunpack.c.h.b16 %v405
        %v1156 = vunpack.c.l.b16 %v406
        %v1157 = vunpack.c.h.b16 %v406
        %v1158 = vunpack.c.l.b16 %v407
        %v1159 = vunpack.c.h.b16 %v407
        %v1160 = vunpack.c.l.b16 %v408
        %v1161 = vunpack.c.h.b16 %v408
        %v1162 = vunpack.c.l.b16 %v409
        %v1163 = vunpack.c.h.b16 %v409
        %v1164 = vunpack.c.l.b16 %v410
        %v1165 = vunpack.c.h.b16 %v410
        %v1166 = vunpack.c.l.b16 %v411
        %v1167 = vunpack.c.h.b16 %v411
        %v1168 = vunpack.c.l.b16 %v412
        %v1169 = vunpack.c.h.b16 %v412
        %v1170 = vunpack.c.l.b16 %v413
        %v1171 = vunpack.c.h.b16 %v413
        %v1172 = vunpack.c.l.b16 %v414
        %v1173 = vunpack.c.h.b16 %v414
        %v1174 = vunpack.c.l.b16 %v415
        %v1175 = vunpack.c.h.b16 %v415
        %v1176 = vunpack.c.l.b16 %v416
        %v1177 = vunpack.c.h.b16 %v416
        %v1178 = vunpack.c.l.b16 %v417
        %v1179 = vunpack.c.h.b16 %v417
        %v1180 = vunpack.c.l.b16 %v418
        %v1181 = vunpack.c.h.b16 %v418
        %v1182 = vunpack.c.l.b16 %v419
        %v1183 = vunpack.c.h.b16 %v419
        %v1184 = vunpack.c.l.b16 %v420
        %v1185 = vunpack.c.h.b16 %v420
        %v1186 = vunpack.c.l.b16 %v421
        %v1187 = vunpack.c.h.b16 %v421
        %v1188 = vunpack.c.l.b16 %v422
        %v1189 = vunpack.c.h.b16 %v422
        %v1190 = vunpack.c.l.b16 %v423
        %v1191 = vunpack.c.h.b16 %v423
        %v1192 = vpack.c.b16 %v712, %v680
        %v1193 = vpack.c.b16 %v713, %v681
        %v1194 = vpack.c.b16 %v714, %v682
        %v1195 = vpack.c.b16 %v715, %v683
        %v1196 = vpack.c.b16 %v716, %v684
        %v1197 = vpack.c.b16 %v717, %v685
        %v1198 = vpack.c.b16 %v718, %v686
        %v1199 = vpack.c.b16 %v719, %v687
        %v1200 = vpack.c.b16 %v720, %v688
        %v1201 = vpack.c.b16 %v721, %v689
        %v1202 = vpack.c.b16 %v722, %v690
        %v1203 = vpack.c.b16 %v723, %v691
        %v1204 = vpack.c.b16 %v724, %v692
        %v1205 = vpack.c.b16 %v725, %v693
        %v1206 = vpack.c.b16 %v726, %v694
        %v1207 = vpack.c.b16 %v727, %v695
        %v1208 = vpack.c.b16 %v728, %v696
        %v1209 = vpack.c.b16 %v729, %v697
        %v1210 = vpack.c.b16 %v730, %v698
        %v1211 = vpack.c.b16 %v731, %v699
        %v1212 = vpack.c.b16 %v732, %v700
        %v1213 = vpack.c.b16 %v733, %v701
        %v1214 = vpack.c.b16 %v734, %v702
        %v1215 = vpack.c.b16 %v735, %v703
        %v1216 = vpack.c.b16 %v736, %v704
        %v1217 = vpack.c.b16 %v737, %v705
        %v1218 = vpack.c.b16 %v738, %v706
        %v1219 = vpack.c.b16 %v739, %v707
        %v1220 = vpack.c.b16 %v740, %v708
        %v1221 = vpack.c.b16 %v741, %v709
        %v1222 = vpack.c.b16 %v742, %v710
        %v1223 = vpack.c.b16 %v743, %v711
        %v1224 = vpack.c.b16 %v776, %v744
        %v1225 = vpack.c.b16 %v777, %v745
        %v1226 = vpack.c.b16 %v778, %v746
        %v1227 = vpack.c.b16 %v779, %v747
        %v1228 = vpack.c.b16 %v780, %v748
        %v1229 = vpack.c.b16 %v781, %v749
        %v1230 = vpack.c.b16 %v782, %v750
        %v1231 = vpack.c.b16 %v783, %v751
        %v1232 = vpack.c.b16 %v784, %v752
        %v1233 = vpack.c.b16 %v785, %v753
        %v1234 = vpack.c.b16 %v786, %v754
        %v1235 = vpack.c.b16 %v787, %v755
        %v1236 = vpack.c.b16 %v788, %v756
        %v1237 = vpack.c.b16 %v789, %v757
        %v1238 = vpack.c.b16 %v790, %v758
        %v1239 = vpack.c.b16 %v791, %v759
        %v1240 = vpack.c.b16 %v792, %v760
        %v1241 = vpack.c.b16 %v793, %v761
        %v1242 = vpack.c.b16 %v794, %v762
        %v1243 = vpack.c.b16 %v795, %v763
        %v1244 = vpack.c.b16 %v796, %v764
        %v1245 = vpack.c.b16 %v797, %v765
        %v1246 = vpack.c.b16 %v798, %v766
        %v1247 = vpack.c.b16 %v799, %v767
        %v1248 = vpack.c.b16 %v800, %v768
        %v1249 = vpack.c.b16 %v801, %v769
        %v1250 = vpack.c.b16 %v802, %v770
        %v1251 = vpack.c.b16 %v803, %v771
        %v1252 = vpack.c.b16 %v804, %v772
        %v1253 = vpack.c.b16 %v805, %v773
        %v1254 = vpack.c.b16 %v806, %v774
        %v1255 = vpack.c.b16 %v807, %v775
        %v1256 = vpack.c.b16 %v840, %v808
        %v1257 = vpack.c.b16 %v841, %v809
        %v1258 = vpack.c.b16 %v842, %v810
        %v1259 = vpack.c.b16 %v843, %v811
        %v1260 = vpack.c.b16 %v844, %v812
        %v1261 = vpack.c.b16 %v845, %v813
        %v1262 = vpack.c.b16 %v846, %v814
        %v1263 = vpack.c.b16 %v847, %v815
        %v1264 = vpack.c.b16 %v848, %v816
        %v1265 = vpack.c.b16 %v849, %v817
        %v1266 = vpack.c.b16 %v850, %v818
        %v1267 = vpack.c.b16 %v851, %v819
        %v1268 = vpack.c.b16 %v852, %v820
        %v1269 = vpack.c.b16 %v853, %v821
        %v1270 = vpack.c.b16 %v854, %v822
        %v1271 = vpack.c.b16 %v855, %v823
        %v1272 = vpack.c.b16 %v856, %v824
        %v1273 = vpack.c.b16 %v857, %v825
        %v1274 = vpack.c.b16 %v858, %v826
        %v1275 = vpack.c.b16 %v859, %v827
        %v1276 = vpack.c.b16 %v860, %v828
        %v1277 = vpack.c.b16 %v861, %v829
        %v1278 = vpack.c.b16 %v862, %v830
        %v1279 = vpack.c.b16 %v863, %v831
        %v1280 = vpack.c.b16 %v864, %v832
        %v1281 = vpack.c.b16 %v865, %v833
        %v1282 = vpack.c.b16 %v866, %v834
        %v1283 = vpack.c.b16 %v867, %v835
        %v1284 = vpack.c.b16 %v868, %v836
        %v1285 = vpack.c.b16 %v869, %v837
        %v1286 = vpack.c.b16 %v870, %v838
        %v1287 = vpack.c.b16 %v871, %v839
        %v1288 = vpack.c.b16 %v904, %v872
        %v1289 = vpack.c.b16 %v905, %v873
        %v1290 = vpack.c.b16 %v906, %v874
        %v1291 = vpack.c.b16 %v907, %v875
        %v1292 = vpack.c.b16 %v908, %v876
        %v1293 = vpack.c.b16 %v909, %v877
        %v1294 = vpack.c.b16 %v910, %v878
        %v1295 = vpack.c.b16 %v911, %v879
        %v1296 = vpack.c.b16 %v912, %v880
        %v1297 = vpack.c.b16 %v913, %v881
        %v1298 = vpack.c.b16 %v914, %v882
        %v1299 = vpack.c.b16 %v915, %v883
        %v1300 = vpack.c.b16 %v916, %v884
        %v1301 = vpack.c.b16 %v917, %v885
        %v1302 = vpack.c.b16 %v918, %v886
        %v1303 = vpack.c.b16 %v919, %v887
        %v1304 = vpack.c.b16 %v920, %v888
        %v1305 = vpack.c.b16 %v921, %v889
        %v1306 = vpack.c.b16 %v922, %v890
        %v1307 = vpack.c.b16 %v923, %v891
        %v1308 = vpack.c.b16 %v924, %v892
        %v1309 = vpack.c.b16 %v925, %v893
        %v1310 = vpack.c.b16 %v926, %v894
        %v1311 = vpack.c.b16 %v927, %v895
        %v1312 = vpack.c.b16 %v928, %v896
        %v1313 = vpack.c.b16 %v929, %v897
        %v1314 = vpack.c.b16 %v930, %v898
        %v1315 = vpack.c.b16 %v931, %v899
        %v1316 = vpack.c.b16 %v932, %v900
        %v1317 = vpack.c.b16 %v933, %v901
        %v1318 = vpack.c.b16 %v934, %v902
        %v1319 = vpack.c.b16 %v935, %v903
        %v1320 = vpack.c.b16 %v968, %v936
        %v1321 = vpack.c.b16 %v969, %v937
        %v1322 = vpack.c.b16 %v970, %v938
        %v1323 = vpack.c.b16 %v971, %v939
        %v1324 = vpack.c.b16 %v972, %v940
        %v1325 = vpack.c.b16 %v973, %v941
        %v1326 = vpack.c.b16 %v974, %v942
        %v1327 = vpack.c.b16 %v975, %v943
        %v1328 = vpack.c.b16 %v976, %v944
        %v1329 = vpack.c.b16 %v977, %v945
        %v1330 = vpack.c.b16 %v978, %v946
        %v1331 = vpack.c.b16 %v979, %v947
        %v1332 = vpack.c.b16 %v980, %v948
        %v1333 = vpack.c.b16 %v981, %v949
        %v1334 = vpack.c.b16 %v982, %v950
        %v1335 = vpack.c.b16 %v983, %v951
        %v1336 = vpack.c.b16 %v984, %v952
        %v1337 = vpack.c.b16 %v985, %v953
        %v1338 = vpack.c.b16 %v986, %v954
        %v1339 = vpack.c.b16 %v987, %v955
        %v1340 = vpack.c.b16 %v988, %v956
        %v1341 = vpack.c.b16 %v989, %v957
        %v1342 = vpack.c.b16 %v990, %v958
        %v1343 = vpack.c.b16 %v991, %v959
        %v1344 = vpack.c.b16 %v992, %v960
        %v1345 = vpack.c.b16 %v993, %v961
        %v1346 = vpack.c.b16 %v994, %v962
        %v1347 = vpack.c.b16 %v995, %v963
        %v1348 = vpack.c.b16 %v996, %v964
        %v1349 = vpack.c.b16 %v997, %v965
        %v1350 = vpack.c.b16 %v998, %v966
        %v1351 = vpack.c.b16 %v999, %v967
        %v1352 = vpack.c.b16 %v1032, %v1000
        %v1353 = vpack.c.b16 %v1033, %v1001
        %v1354 = vpack.c.b16 %v1034, %v1002
        %v1355 = vpack.c.b16 %v1035, %v1003
        %v1356 = vpack.c.b16 %v1036, %v1004
        %v1357 = vpack.c.b16 %v1037, %v1005
        %v1358 = vpack.c.b16 %v1038, %v1006
        %v1359 = vpack.c.b16 %v1039, %v1007
        %v1360 = vpack.c.b16 %v1040, %v1008
        %v1361 = vpack.c.b16 %v1041, %v1009
        %v1362 = vpack.c.b16 %v1042, %v1010
        %v1363 = vpack.c.b16 %v1043, %v1011
        %v1364 = vpack.c.b16 %v1044, %v1012
        %v1365 = vpack.c.b16 %v1045, %v1013
        %v1366 = vpack.c.b16 %v1046, %v1014
        %v1367 = vpack.c.b16 %v1047, %v1015
        %v1368 = vpack.c.b16 %v1048, %v1016
        %v1369 = vpack.c.b16 %v1049, %v1017
        %v1370 = vpack.c.b16 %v1050, %v1018
        %v1371 = vpack.c.b16 %v1051, %v1019
        %v1372 = vpack.c.b16 %v1052, %v1020
        %v1373 = vpack.c.b16 %v1053, %v1021
        %v1374 = vpack.c.b16 %v1054, %v1022
        %v1375 = vpack.c.b16 %v1055, %v1023
        %v1376 = vpack.c.b16 %v1056, %v1024
        %v1377 = vpack.c.b16 %v1057, %v1025
        %v1378 = vpack.c.b16 %v1058, %v1026
        %v1379 = vpack.c.b16 %v1059, %v1027
        %v1380 = vpack.c.b16 %v1060, %v1028
        %v1381 = vpack.c.b16 %v1061, %v1029
        %v1382 = vpack.c.b16 %v1062, %v1030
        %v1383 = vpack.c.b16 %v1063, %v1031
        %v1384 = vpack.c.b16 %v1096, %v1064
        %v1385 = vpack.c.b16 %v1097, %v1065
        %v1386 = vpack.c.b16 %v1098, %v1066
        %v1387 = vpack.c.b16 %v1099, %v1067
        %v1388 = vpack.c.b16 %v1100, %v1068
        %v1389 = vpack.c.b16 %v1101, %v1069
        %v1390 = vpack.c.b16 %v1102, %v1070
        %v1391 = vpack.c.b16 %v1103, %v1071
        %v1392 = vpack.c.b16 %v1104, %v1072
        %v1393 = vpack.c.b16 %v1105, %v1073
        %v1394 = vpack.c.b16 %v1106, %v1074
        %v1395 = vpack.c.b16 %v1107, %v1075
        %v1396 = vpack.c.b16 %v1108, %v1076
        %v1397 = vpack.c.b16 %v1109, %v1077
        %v1398 = vpack.c.b16 %v1110, %v1078
        %v1399 = vpack.c.b16 %v1111, %v1079
        %v1400 = vpack.c.b16 %v1112, %v1080
        %v1401 = vpack.c.b16 %v1113, %v1081
        %v1402 = vpack.c.b16 %v1114, %v1082
        %v1403 = vpack.c.b16 %v1115, %v1083
        %v1404 = vpack.c.b16 %v1116, %v1084
        %v1405 = vpack.c.b16 %v1117, %v1085
        %v1406 = vpack.c.b16 %v1118, %v1086
        %v1407 = vpack.c.b16 %v1119, %v1087
        %v1408 = vpack.c.b16 %v1120, %v1088
        %v1409 = vpack.c.b16 %v1121, %v1089
        %v1410 = vpack.c.b16 %v1122, %v1090
        %v1411 = vpack.c.b16 %v1123, %v1091
        %v1412 = vpack.c.b16 %v1124, %v1092
        %v1413 = vpack.c.b16 %v1125, %v1093
        %v1414 = vpack.c.b16 %v1126, %v1094
        %v1415 = vpack.c.b16 %v1127, %v1095
        %v1416 = vpack.c.b16 %v1160, %v1128
        %v1417 = vpack.c.b16 %v1161, %v1129
        %v1418 = vpack.c.b16 %v1162, %v1130
        %v1419 = vpack.c.b16 %v1163, %v1131
        %v1420 = vpack.c.b16 %v1164, %v1132
        %v1421 = vpack.c.b16 %v1165, %v1133
        %v1422 = vpack.c.b16 %v1166, %v1134
        %v1423 = vpack.c.b16 %v1167, %v1135
        %v1424 = vpack.c.b16 %v1168, %v1136
        %v1425 = vpack.c.b16 %v1169, %v1137
        %v1426 = vpack.c.b16 %v1170, %v1138
        %v1427 = vpack.c.b16 %v1171, %v1139
        %v1428 = vpack.c.b16 %v1172, %v1140
        %v1429 = vpack.c.b16 %v1173, %v1141
        %v1430 = vpack.c.b16 %v1174, %v1142
        %v1431 = vpack.c.b16 %v1175, %v1143
        %v1432 = vpack.c.b16 %v1176, %v1144
        %v1433 = vpack.c.b16 %v1177, %v1145
        %v1434 = vpack.c.b16 %v1178, %v1146
        %v1435 = vpack.c.b16 %v1179, %v1147
        %v1436 = vpack.c.b16 %v1180, %v1148
        %v1437 = vpack.c.b16 %v1181, %v1149
        %v1438 = vpack.c.b16 %v1182, %v1150
        %v1439 = vpack.c.b16 %v1183, %v1151
        %v1440 = vpack.c.b16 %v1184, %v1152
        %v1441 = vpack.c.b16 %v1185, %v1153
        %v1442 = vpack.c.b16 %v1186, %v1154
        %v1443 = vpack.c.b16 %v1187, %v1155
        %v1444 = vpack.c.b16 %v1188, %v1156
        %v1445 = vpack.c.b16 %v1189, %v1157
        %v1446 = vpack.c.b16 %v1190, %v1158
        %v1447 = vpack.c.b16 %v1191, %v1159
        %1704 = vmatprep.subr.bf16.mxu0 %v1417
        %1705 = vmatpush1.bf16.msra.mxu0 %v1416
        %1706 = vmatprep.subr.bf16.mxu0 %v1385
        %1707 = vmatpush1.bf16.msra.mxu0 %v1384
        %1708 = vmatprep.subr.bf16.mxu0 %v1353
        %1709 = vmatpush1.bf16.msra.mxu0 %v1352
        %1710 = vmatprep.subr.bf16.mxu0 %v1321
        %1711 = vmatpush1.bf16.msra.mxu0 %v1320
        %1712 = vmatprep.subr.bf16.mxu0 %v1289
        %1713 = vmatpush1.bf16.msra.mxu0 %v1288
        %1714 = vmatprep.subr.bf16.mxu0 %v1257
        %1715 = vmatpush1.bf16.msra.mxu0 %v1256
        %1716 = vmatprep.subr.bf16.mxu0 %v1225
        %1717 = vmatpush1.bf16.msra.mxu0 %v1224
        %1718 = vmatprep.subr.bf16.mxu0 %v1193
        %1719 = vmatpush1.bf16.msra.mxu0 %v1192
        %1720 = vmatprep.subr.bf16.mxu0 0
        %1721 = vmatpush2.bf16.msra.mxu0 0
        %1722 = vmatprep.subr.bf16.mxu0 0
        %1723 = vmatpush2.bf16.msra.mxu0 0
        %1724 = vmatprep.subr.bf16.mxu0 0
        %1725 = vmatpush2.bf16.msra.mxu0 0
        %1726 = vmatprep.subr.bf16.mxu0 0
        %1727 = vmatpush2.bf16.msra.mxu0 0
        %1728 = vmatprep.subr.bf16.mxu0 0
        %1729 = vmatpush2.bf16.msra.mxu0 0
        %1730 = vmatprep.subr.bf16.mxu0 0
        %1731 = vmatpush2.bf16.msra.mxu0 0
        %1732 = vmatprep.subr.bf16.mxu0 0
        %1733 = vmatpush2.bf16.msra.mxu0 0
        %1734 = vmatprep.subr.bf16.mxu0 0
        %1735 = vmatpush2.bf16.msra.mxu0 0
        %1736 = vmatprep.mubr.bf16.mxu0 0
        %1737 = vmatmul.mubr.bf16.gmra.mxu0 %v167
        %v1738 = vpop.f32.mrf.mxu0
        %v1739 = vadd.f32 0.0, %v1738
        %v1740 = vpop.f32.mrf.mxu0
        %v1741 = vadd.f32 0.0, %v1740
        %v1742 = vpop.f32.mrf.mxu0
        %v1743 = vpop.f32.mrf.mxu0
        %1744 = vdwg.mxu0
        %1745 = vmatprep.subr.bf16.mxu0 %v1419
        %1746 = vmatpush1.bf16.msra.mxu0 %v1418
        %1747 = vmatprep.subr.bf16.mxu0 %v1387
        %1748 = vmatpush1.bf16.msra.mxu0 %v1386
        %1749 = vmatprep.subr.bf16.mxu0 %v1355
        %1750 = vmatpush1.bf16.msra.mxu0 %v1354
        %1751 = vmatprep.subr.bf16.mxu0 %v1323
        %1752 = vmatpush1.bf16.msra.mxu0 %v1322
        %1753 = vmatprep.subr.bf16.mxu0 %v1291
        %1754 = vmatpush1.bf16.msra.mxu0 %v1290
        %1755 = vmatprep.subr.bf16.mxu0 %v1259
        %1756 = vmatpush1.bf16.msra.mxu0 %v1258
        %1757 = vmatprep.subr.bf16.mxu0 %v1227
        %1758 = vmatpush1.bf16.msra.mxu0 %v1226
        %1759 = vmatprep.subr.bf16.mxu0 %v1195
        %1760 = vmatpush1.bf16.msra.mxu0 %v1194
        %1761 = vmatprep.subr.bf16.mxu0 0
        %1762 = vmatpush2.bf16.msra.mxu0 0
        %1763 = vmatprep.subr.bf16.mxu0 0
        %1764 = vmatpush2.bf16.msra.mxu0 0
        %1765 = vmatprep.subr.bf16.mxu0 0
        %1766 = vmatpush2.bf16.msra.mxu0 0
        %1767 = vmatprep.subr.bf16.mxu0 0
        %1768 = vmatpush2.bf16.msra.mxu0 0
        %1769 = vmatprep.subr.bf16.mxu0 0
        %1770 = vmatpush2.bf16.msra.mxu0 0
        %1771 = vmatprep.subr.bf16.mxu0 0
        %1772 = vmatpush2.bf16.msra.mxu0 0
        %1773 = vmatprep.subr.bf16.mxu0 0
        %1774 = vmatpush2.bf16.msra.mxu0 0
        %1775 = vmatprep.subr.bf16.mxu0 0
        %1776 = vmatpush2.bf16.msra.mxu0 0
        %1777 = vmatprep.mubr.bf16.mxu0 0
        %1778 = vmatmul.mubr.bf16.gmra.mxu0 %v167
        %v1779 = vpop.f32.mrf.mxu0
        %v1780 = vadd.f32 0.0, %v1779
        %v1781 = vpop.f32.mrf.mxu0
        %v1782 = vadd.f32 0.0, %v1781
        %v1783 = vpop.f32.mrf.mxu0
        %v1784 = vpop.f32.mrf.mxu0
        %1785 = vdwg.mxu0
        %1786 = vmatprep.subr.bf16.mxu0 %v1421
        %1787 = vmatpush1.bf16.msra.mxu0 %v1420
        %1788 = vmatprep.subr.bf16.mxu0 %v1389
        %1789 = vmatpush1.bf16.msra.mxu0 %v1388
        %1790 = vmatprep.subr.bf16.mxu0 %v1357
        %1791 = vmatpush1.bf16.msra.mxu0 %v1356
        %1792 = vmatprep.subr.bf16.mxu0 %v1325
        %1793 = vmatpush1.bf16.msra.mxu0 %v1324
        %1794 = vmatprep.subr.bf16.mxu0 %v1293
        %1795 = vmatpush1.bf16.msra.mxu0 %v1292
        %1796 = vmatprep.subr.bf16.mxu0 %v1261
        %1797 = vmatpush1.bf16.msra.mxu0 %v1260
        %1798 = vmatprep.subr.bf16.mxu0 %v1229
        %1799 = vmatpush1.bf16.msra.mxu0 %v1228
        %1800 = vmatprep.subr.bf16.mxu0 %v1197
        %1801 = vmatpush1.bf16.msra.mxu0 %v1196
        %1802 = vmatprep.subr.bf16.mxu0 0
        %1803 = vmatpush2.bf16.msra.mxu0 0
        %1804 = vmatprep.subr.bf16.mxu0 0
        %1805 = vmatpush2.bf16.msra.mxu0 0
        %1806 = vmatprep.subr.bf16.mxu0 0
        %1807 = vmatpush2.bf16.msra.mxu0 0
        %1808 = vmatprep.subr.bf16.mxu0 0
        %1809 = vmatpush2.bf16.msra.mxu0 0
        %1810 = vmatprep.subr.bf16.mxu0 0
        %1811 = vmatpush2.bf16.msra.mxu0 0
        %1812 = vmatprep.subr.bf16.mxu0 0
        %1813 = vmatpush2.bf16.msra.mxu0 0
        %1814 = vmatprep.subr.bf16.mxu0 0
        %1815 = vmatpush2.bf16.msra.mxu0 0
        %1816 = vmatprep.subr.bf16.mxu0 0
        %1817 = vmatpush2.bf16.msra.mxu0 0
        %1818 = vmatprep.mubr.bf16.mxu0 0
        %1819 = vmatmul.mubr.bf16.gmra.mxu0 %v167
        %v1820 = vpop.f32.mrf.mxu0
        %v1821 = vadd.f32 0.0, %v1820
        %v1822 = vpop.f32.mrf.mxu0
        %v1823 = vadd.f32 0.0, %v1822
        %v1824 = vpop.f32.mrf.mxu0
        %v1825 = vpop.f32.mrf.mxu0
        %1826 = vdwg.mxu0
        %1827 = vmatprep.subr.bf16.mxu0 %v1423
        %1828 = vmatpush1.bf16.msra.mxu0 %v1422
        %1829 = vmatprep.subr.bf16.mxu0 %v1391
        %1830 = vmatpush1.bf16.msra.mxu0 %v1390
        %1831 = vmatprep.subr.bf16.mxu0 %v1359
        %1832 = vmatpush1.bf16.msra.mxu0 %v1358
        %1833 = vmatprep.subr.bf16.mxu0 %v1327
        %1834 = vmatpush1.bf16.msra.mxu0 %v1326
        %1835 = vmatprep.subr.bf16.mxu0 %v1295
        %1836 = vmatpush1.bf16.msra.mxu0 %v1294
        %1837 = vmatprep.subr.bf16.mxu0 %v1263
        %1838 = vmatpush1.bf16.msra.mxu0 %v1262
        %1839 = vmatprep.subr.bf16.mxu0 %v1231
        %1840 = vmatpush1.bf16.msra.mxu0 %v1230
        %1841 = vmatprep.subr.bf16.mxu0 %v1199
        %1842 = vmatpush1.bf16.msra.mxu0 %v1198
        %1843 = vmatprep.subr.bf16.mxu0 0
        %1844 = vmatpush2.bf16.msra.mxu0 0
        %1845 = vmatprep.subr.bf16.mxu0 0
        %1846 = vmatpush2.bf16.msra.mxu0 0
        %1847 = vmatprep.subr.bf16.mxu0 0
        %1848 = vmatpush2.bf16.msra.mxu0 0
        %1849 = vmatprep.subr.bf16.mxu0 0
        %1850 = vmatpush2.bf16.msra.mxu0 0
        %1851 = vmatprep.subr.bf16.mxu0 0
        %1852 = vmatpush2.bf16.msra.mxu0 0
        %1853 = vmatprep.subr.bf16.mxu0 0
        %1854 = vmatpush2.bf16.msra.mxu0 0
        %1855 = vmatprep.subr.bf16.mxu0 0
        %1856 = vmatpush2.bf16.msra.mxu0 0
        %1857 = vmatprep.subr.bf16.mxu0 0
        %1858 = vmatpush2.bf16.msra.mxu0 0
        %1859 = vmatprep.mubr.bf16.mxu0 0
        %1860 = vmatmul.mubr.bf16.gmra.mxu0 %v167
        %v1861 = vpop.f32.mrf.mxu0
        %v1862 = vadd.f32 0.0, %v1861
        %v1863 = vpop.f32.mrf.mxu0
        %v1864 = vadd.f32 0.0, %v1863
        %v1865 = vpop.f32.mrf.mxu0
        %v1866 = vpop.f32.mrf.mxu0
        %1867 = vdwg.mxu0
        %1868 = vmatprep.subr.bf16.mxu0 %v1425
        %1869 = vmatpush1.bf16.msra.mxu0 %v1424
        %1870 = vmatprep.subr.bf16.mxu0 %v1393
        %1871 = vmatpush1.bf16.msra.mxu0 %v1392
        %1872 = vmatprep.subr.bf16.mxu0 %v1361
        %1873 = vmatpush1.bf16.msra.mxu0 %v1360
        %1874 = vmatprep.subr.bf16.mxu0 %v1329
        %1875 = vmatpush1.bf16.msra.mxu0 %v1328
        %1876 = vmatprep.subr.bf16.mxu0 %v1297
        %1877 = vmatpush1.bf16.msra.mxu0 %v1296
        %1878 = vmatprep.subr.bf16.mxu0 %v1265
        %1879 = vmatpush1.bf16.msra.mxu0 %v1264
        %1880 = vmatprep.subr.bf16.mxu0 %v1233
        %1881 = vmatpush1.bf16.msra.mxu0 %v1232
        %1882 = vmatprep.subr.bf16.mxu0 %v1201
        %1883 = vmatpush1.bf16.msra.mxu0 %v1200
        %1884 = vmatprep.subr.bf16.mxu0 0
        %1885 = vmatpush2.bf16.msra.mxu0 0
        %1886 = vmatprep.subr.bf16.mxu0 0
        %1887 = vmatpush2.bf16.msra.mxu0 0
        %1888 = vmatprep.subr.bf16.mxu0 0
        %1889 = vmatpush2.bf16.msra.mxu0 0
        %1890 = vmatprep.subr.bf16.mxu0 0
        %1891 = vmatpush2.bf16.msra.mxu0 0
        %1892 = vmatprep.subr.bf16.mxu0 0
        %1893 = vmatpush2.bf16.msra.mxu0 0
        %1894 = vmatprep.subr.bf16.mxu0 0
        %1895 = vmatpush2.bf16.msra.mxu0 0
        %1896 = vmatprep.subr.bf16.mxu0 0
        %1897 = vmatpush2.bf16.msra.mxu0 0
        %1898 = vmatprep.subr.bf16.mxu0 0
        %1899 = vmatpush2.bf16.msra.mxu0 0
        %1900 = vmatprep.mubr.bf16.mxu0 0
        %1901 = vmatmul.mubr.bf16.gmra.mxu0 %v167
        %v1902 = vpop.f32.mrf.mxu0
        %v1903 = vadd.f32 0.0, %v1902
        %v1904 = vpop.f32.mrf.mxu0
        %v1905 = vadd.f32 0.0, %v1904
        %v1906 = vpop.f32.mrf.mxu0
        %v1907 = vpop.f32.mrf.mxu0
        %1908 = vdwg.mxu0
        %1909 = vmatprep.subr.bf16.mxu0 %v1427
        %1910 = vmatpush1.bf16.msra.mxu0 %v1426
        %1911 = vmatprep.subr.bf16.mxu0 %v1395
        %1912 = vmatpush1.bf16.msra.mxu0 %v1394
        %1913 = vmatprep.subr.bf16.mxu0 %v1363
        %1914 = vmatpush1.bf16.msra.mxu0 %v1362
        %1915 = vmatprep.subr.bf16.mxu0 %v1331
        %1916 = vmatpush1.bf16.msra.mxu0 %v1330
        %1917 = vmatprep.subr.bf16.mxu0 %v1299
        %1918 = vmatpush1.bf16.msra.mxu0 %v1298
        %1919 = vmatprep.subr.bf16.mxu0 %v1267
        %1920 = vmatpush1.bf16.msra.mxu0 %v1266
        %1921 = vmatprep.subr.bf16.mxu0 %v1235
        %1922 = vmatpush1.bf16.msra.mxu0 %v1234
        %1923 = vmatprep.subr.bf16.mxu0 %v1203
        %1924 = vmatpush1.bf16.msra.mxu0 %v1202
        %1925 = vmatprep.subr.bf16.mxu0 0
        %1926 = vmatpush2.bf16.msra.mxu0 0
        %1927 = vmatprep.subr.bf16.mxu0 0
        %1928 = vmatpush2.bf16.msra.mxu0 0
        %1929 = vmatprep.subr.bf16.mxu0 0
        %1930 = vmatpush2.bf16.msra.mxu0 0
        %1931 = vmatprep.subr.bf16.mxu0 0
        %1932 = vmatpush2.bf16.msra.mxu0 0
        %1933 = vmatprep.subr.bf16.mxu0 0
        %1934 = vmatpush2.bf16.msra.mxu0 0
        %1935 = vmatprep.subr.bf16.mxu0 0
        %1936 = vmatpush2.bf16.msra.mxu0 0
        %1937 = vmatprep.subr.bf16.mxu0 0
        %1938 = vmatpush2.bf16.msra.mxu0 0
        %1939 = vmatprep.subr.bf16.mxu0 0
        %1940 = vmatpush2.bf16.msra.mxu0 0
        %1941 = vmatprep.mubr.bf16.mxu0 0
        %1942 = vmatmul.mubr.bf16.gmra.mxu0 %v167
        %v1943 = vpop.f32.mrf.mxu0
        %v1944 = vadd.f32 0.0, %v1943
        %v1945 = vpop.f32.mrf.mxu0
        %v1946 = vadd.f32 0.0, %v1945
        %v1947 = vpop.f32.mrf.mxu0
        %v1948 = vpop.f32.mrf.mxu0
        %1949 = vdwg.mxu0
        %1950 = vmatprep.subr.bf16.mxu0 %v1429
        %1951 = vmatpush1.bf16.msra.mxu0 %v1428
        %1952 = vmatprep.subr.bf16.mxu0 %v1397
        %1953 = vmatpush1.bf16.msra.mxu0 %v1396
        %1954 = vmatprep.subr.bf16.mxu0 %v1365
        %1955 = vmatpush1.bf16.msra.mxu0 %v1364
        %1956 = vmatprep.subr.bf16.mxu0 %v1333
        %1957 = vmatpush1.bf16.msra.mxu0 %v1332
        %1958 = vmatprep.subr.bf16.mxu0 %v1301
        %1959 = vmatpush1.bf16.msra.mxu0 %v1300
        %1960 = vmatprep.subr.bf16.mxu0 %v1269
        %1961 = vmatpush1.bf16.msra.mxu0 %v1268
        %1962 = vmatprep.subr.bf16.mxu0 %v1237
        %1963 = vmatpush1.bf16.msra.mxu0 %v1236
        %1964 = vmatprep.subr.bf16.mxu0 %v1205
        %1965 = vmatpush1.bf16.msra.mxu0 %v1204
        %1966 = vmatprep.subr.bf16.mxu0 0
        %1967 = vmatpush2.bf16.msra.mxu0 0
        %1968 = vmatprep.subr.bf16.mxu0 0
        %1969 = vmatpush2.bf16.msra.mxu0 0
        %1970 = vmatprep.subr.bf16.mxu0 0
        %1971 = vmatpush2.bf16.msra.mxu0 0
        %1972 = vmatprep.subr.bf16.mxu0 0
        %1973 = vmatpush2.bf16.msra.mxu0 0
        %1974 = vmatprep.subr.bf16.mxu0 0
        %1975 = vmatpush2.bf16.msra.mxu0 0
        %1976 = vmatprep.subr.bf16.mxu0 0
        %1977 = vmatpush2.bf16.msra.mxu0 0
        %1978 = vmatprep.subr.bf16.mxu0 0
        %1979 = vmatpush2.bf16.msra.mxu0 0
        %1980 = vmatprep.subr.bf16.mxu0 0
        %1981 = vmatpush2.bf16.msra.mxu0 0
        %1982 = vmatprep.mubr.bf16.mxu0 0
        %1983 = vmatmul.mubr.bf16.gmra.mxu0 %v167
        %v1984 = vpop.f32.mrf.mxu0
        %v1985 = vadd.f32 0.0, %v1984
        %v1986 = vpop.f32.mrf.mxu0
        %v1987 = vadd.f32 0.0, %v1986
        %v1988 = vpop.f32.mrf.mxu0
        %v1989 = vpop.f32.mrf.mxu0
        %1990 = vdwg.mxu0
        %1991 = vmatprep.subr.bf16.mxu0 %v1431
        %1992 = vmatpush1.bf16.msra.mxu0 %v1430
        %1993 = vmatprep.subr.bf16.mxu0 %v1399
        %1994 = vmatpush1.bf16.msra.mxu0 %v1398
        %1995 = vmatprep.subr.bf16.mxu0 %v1367
        %1996 = vmatpush1.bf16.msra.mxu0 %v1366
        %1997 = vmatprep.subr.bf16.mxu0 %v1335
        %1998 = vmatpush1.bf16.msra.mxu0 %v1334
        %1999 = vmatprep.subr.bf16.mxu0 %v1303
        %2000 = vmatpush1.bf16.msra.mxu0 %v1302
        %2001 = vmatprep.subr.bf16.mxu0 %v1271
        %2002 = vmatpush1.bf16.msra.mxu0 %v1270
        %2003 = vmatprep.subr.bf16.mxu0 %v1239
        %2004 = vmatpush1.bf16.msra.mxu0 %v1238
        %2005 = vmatprep.subr.bf16.mxu0 %v1207
        %2006 = vmatpush1.bf16.msra.mxu0 %v1206
        %2007 = vmatprep.subr.bf16.mxu0 0
        %2008 = vmatpush2.bf16.msra.mxu0 0
        %2009 = vmatprep.subr.bf16.mxu0 0
        %2010 = vmatpush2.bf16.msra.mxu0 0
        %2011 = vmatprep.subr.bf16.mxu0 0
        %2012 = vmatpush2.bf16.msra.mxu0 0
        %2013 = vmatprep.subr.bf16.mxu0 0
        %2014 = vmatpush2.bf16.msra.mxu0 0
        %2015 = vmatprep.subr.bf16.mxu0 0
        %2016 = vmatpush2.bf16.msra.mxu0 0
        %2017 = vmatprep.subr.bf16.mxu0 0
        %2018 = vmatpush2.bf16.msra.mxu0 0
        %2019 = vmatprep.subr.bf16.mxu0 0
        %2020 = vmatpush2.bf16.msra.mxu0 0
        %2021 = vmatprep.subr.bf16.mxu0 0
        %2022 = vmatpush2.bf16.msra.mxu0 0
        %2023 = vmatprep.mubr.bf16.mxu0 0
        %2024 = vmatmul.mubr.bf16.gmra.mxu0 %v167
        %v2025 = vpop.f32.mrf.mxu0
        %v2026 = vadd.f32 0.0, %v2025
        %v2027 = vpop.f32.mrf.mxu0
        %v2028 = vadd.f32 0.0, %v2027
        %v2029 = vpop.f32.mrf.mxu0
        %v2030 = vpop.f32.mrf.mxu0
        %2031 = vdwg.mxu0
        %2032 = vmatprep.subr.bf16.mxu0 %v1433
        %2033 = vmatpush1.bf16.msra.mxu0 %v1432
        %2034 = vmatprep.subr.bf16.mxu0 %v1401
        %2035 = vmatpush1.bf16.msra.mxu0 %v1400
        %2036 = vmatprep.subr.bf16.mxu0 %v1369
        %2037 = vmatpush1.bf16.msra.mxu0 %v1368
        %2038 = vmatprep.subr.bf16.mxu0 %v1337
        %2039 = vmatpush1.bf16.msra.mxu0 %v1336
        %2040 = vmatprep.subr.bf16.mxu0 %v1305
        %2041 = vmatpush1.bf16.msra.mxu0 %v1304
        %2042 = vmatprep.subr.bf16.mxu0 %v1273
        %2043 = vmatpush1.bf16.msra.mxu0 %v1272
        %2044 = vmatprep.subr.bf16.mxu0 %v1241
        %2045 = vmatpush1.bf16.msra.mxu0 %v1240
        %2046 = vmatprep.subr.bf16.mxu0 %v1209
        %2047 = vmatpush1.bf16.msra.mxu0 %v1208
        %2048 = vmatprep.subr.bf16.mxu0 0
        %2049 = vmatpush2.bf16.msra.mxu0 0
        %2050 = vmatprep.subr.bf16.mxu0 0
        %2051 = vmatpush2.bf16.msra.mxu0 0
        %2052 = vmatprep.subr.bf16.mxu0 0
        %2053 = vmatpush2.bf16.msra.mxu0 0
        %2054 = vmatprep.subr.bf16.mxu0 0
        %2055 = vmatpush2.bf16.msra.mxu0 0
        %2056 = vmatprep.subr.bf16.mxu0 0
        %2057 = vmatpush2.bf16.msra.mxu0 0
        %2058 = vmatprep.subr.bf16.mxu0 0
        %2059 = vmatpush2.bf16.msra.mxu0 0
        %2060 = vmatprep.subr.bf16.mxu0 0
        %2061 = vmatpush2.bf16.msra.mxu0 0
        %2062 = vmatprep.subr.bf16.mxu0 0
        %2063 = vmatpush2.bf16.msra.mxu0 0
        %2064 = vmatprep.mubr.bf16.mxu0 0
        %2065 = vmatmul.mubr.bf16.gmra.mxu0 %v167
        %v2066 = vpop.f32.mrf.mxu0
        %v2067 = vadd.f32 0.0, %v2066
        %v2068 = vpop.f32.mrf.mxu0
        %v2069 = vadd.f32 0.0, %v2068
        %v2070 = vpop.f32.mrf.mxu0
        %v2071 = vpop.f32.mrf.mxu0
        %2072 = vdwg.mxu0
        %2073 = vmatprep.subr.bf16.mxu0 %v1435
        %2074 = vmatpush1.bf16.msra.mxu0 %v1434
        %2075 = vmatprep.subr.bf16.mxu0 %v1403
        %2076 = vmatpush1.bf16.msra.mxu0 %v1402
        %2077 = vmatprep.subr.bf16.mxu0 %v1371
        %2078 = vmatpush1.bf16.msra.mxu0 %v1370
        %2079 = vmatprep.subr.bf16.mxu0 %v1339
        %2080 = vmatpush1.bf16.msra.mxu0 %v1338
        %2081 = vmatprep.subr.bf16.mxu0 %v1307
        %2082 = vmatpush1.bf16.msra.mxu0 %v1306
        %2083 = vmatprep.subr.bf16.mxu0 %v1275
        %2084 = vmatpush1.bf16.msra.mxu0 %v1274
        %2085 = vmatprep.subr.bf16.mxu0 %v1243
        %2086 = vmatpush1.bf16.msra.mxu0 %v1242
        %2087 = vmatprep.subr.bf16.mxu0 %v1211
        %2088 = vmatpush1.bf16.msra.mxu0 %v1210
        %2089 = vmatprep.subr.bf16.mxu0 0
        %2090 = vmatpush2.bf16.msra.mxu0 0
        %2091 = vmatprep.subr.bf16.mxu0 0
        %2092 = vmatpush2.bf16.msra.mxu0 0
        %2093 = vmatprep.subr.bf16.mxu0 0
        %2094 = vmatpush2.bf16.msra.mxu0 0
        %2095 = vmatprep.subr.bf16.mxu0 0
        %2096 = vmatpush2.bf16.msra.mxu0 0
        %2097 = vmatprep.subr.bf16.mxu0 0
        %2098 = vmatpush2.bf16.msra.mxu0 0
        %2099 = vmatprep.subr.bf16.mxu0 0
        %2100 = vmatpush2.bf16.msra.mxu0 0
        %2101 = vmatprep.subr.bf16.mxu0 0
        %2102 = vmatpush2.bf16.msra.mxu0 0
        %2103 = vmatprep.subr.bf16.mxu0 0
        %2104 = vmatpush2.bf16.msra.mxu0 0
        %2105 = vmatprep.mubr.bf16.mxu0 0
        %2106 = vmatmul.mubr.bf16.gmra.mxu0 %v167
        %v2107 = vpop.f32.mrf.mxu0
        %v2108 = vadd.f32 0.0, %v2107
        %v2109 = vpop.f32.mrf.mxu0
        %v2110 = vadd.f32 0.0, %v2109
        %v2111 = vpop.f32.mrf.mxu0
        %v2112 = vpop.f32.mrf.mxu0
        %2113 = vdwg.mxu0
        %2114 = vmatprep.subr.bf16.mxu0 %v1437
        %2115 = vmatpush1.bf16.msra.mxu0 %v1436
        %2116 = vmatprep.subr.bf16.mxu0 %v1405
        %2117 = vmatpush1.bf16.msra.mxu0 %v1404
        %2118 = vmatprep.subr.bf16.mxu0 %v1373
        %2119 = vmatpush1.bf16.msra.mxu0 %v1372
        %2120 = vmatprep.subr.bf16.mxu0 %v1341
        %2121 = vmatpush1.bf16.msra.mxu0 %v1340
        %2122 = vmatprep.subr.bf16.mxu0 %v1309
        %2123 = vmatpush1.bf16.msra.mxu0 %v1308
        %2124 = vmatprep.subr.bf16.mxu0 %v1277
        %2125 = vmatpush1.bf16.msra.mxu0 %v1276
        %2126 = vmatprep.subr.bf16.mxu0 %v1245
        %2127 = vmatpush1.bf16.msra.mxu0 %v1244
        %2128 = vmatprep.subr.bf16.mxu0 %v1213
        %2129 = vmatpush1.bf16.msra.mxu0 %v1212
        %2130 = vmatprep.subr.bf16.mxu0 0
        %2131 = vmatpush2.bf16.msra.mxu0 0
        %2132 = vmatprep.subr.bf16.mxu0 0
        %2133 = vmatpush2.bf16.msra.mxu0 0
        %2134 = vmatprep.subr.bf16.mxu0 0
        %2135 = vmatpush2.bf16.msra.mxu0 0
        %2136 = vmatprep.subr.bf16.mxu0 0
        %2137 = vmatpush2.bf16.msra.mxu0 0
        %2138 = vmatprep.subr.bf16.mxu0 0
        %2139 = vmatpush2.bf16.msra.mxu0 0
        %2140 = vmatprep.subr.bf16.mxu0 0
        %2141 = vmatpush2.bf16.msra.mxu0 0
        %2142 = vmatprep.subr.bf16.mxu0 0
        %2143 = vmatpush2.bf16.msra.mxu0 0
        %2144 = vmatprep.subr.bf16.mxu0 0
        %2145 = vmatpush2.bf16.msra.mxu0 0
        %2146 = vmatprep.mubr.bf16.mxu0 0
        %2147 = vmatmul.mubr.bf16.gmra.mxu0 %v167
        %v2148 = vpop.f32.mrf.mxu0
        %v2149 = vadd.f32 0.0, %v2148
        %v2150 = vpop.f32.mrf.mxu0
        %v2151 = vadd.f32 0.0, %v2150
        %v2152 = vpop.f32.mrf.mxu0
        %v2153 = vpop.f32.mrf.mxu0
        %2154 = vdwg.mxu0
        %2155 = vmatprep.subr.bf16.mxu0 %v1439
        %2156 = vmatpush1.bf16.msra.mxu0 %v1438
        %2157 = vmatprep.subr.bf16.mxu0 %v1407
        %2158 = vmatpush1.bf16.msra.mxu0 %v1406
        %2159 = vmatprep.subr.bf16.mxu0 %v1375
        %2160 = vmatpush1.bf16.msra.mxu0 %v1374
        %2161 = vmatprep.subr.bf16.mxu0 %v1343
        %2162 = vmatpush1.bf16.msra.mxu0 %v1342
        %2163 = vmatprep.subr.bf16.mxu0 %v1311
        %2164 = vmatpush1.bf16.msra.mxu0 %v1310
        %2165 = vmatprep.subr.bf16.mxu0 %v1279
        %2166 = vmatpush1.bf16.msra.mxu0 %v1278
        %2167 = vmatprep.subr.bf16.mxu0 %v1247
        %2168 = vmatpush1.bf16.msra.mxu0 %v1246
        %2169 = vmatprep.subr.bf16.mxu0 %v1215
        %2170 = vmatpush1.bf16.msra.mxu0 %v1214
        %2171 = vmatprep.subr.bf16.mxu0 0
        %2172 = vmatpush2.bf16.msra.mxu0 0
        %2173 = vmatprep.subr.bf16.mxu0 0
        %2174 = vmatpush2.bf16.msra.mxu0 0
        %2175 = vmatprep.subr.bf16.mxu0 0
        %2176 = vmatpush2.bf16.msra.mxu0 0
        %2177 = vmatprep.subr.bf16.mxu0 0
        %2178 = vmatpush2.bf16.msra.mxu0 0
        %2179 = vmatprep.subr.bf16.mxu0 0
        %2180 = vmatpush2.bf16.msra.mxu0 0
        %2181 = vmatprep.subr.bf16.mxu0 0
        %2182 = vmatpush2.bf16.msra.mxu0 0
        %2183 = vmatprep.subr.bf16.mxu0 0
        %2184 = vmatpush2.bf16.msra.mxu0 0
        %2185 = vmatprep.subr.bf16.mxu0 0
        %2186 = vmatpush2.bf16.msra.mxu0 0
        %2187 = vmatprep.mubr.bf16.mxu0 0
        %2188 = vmatmul.mubr.bf16.gmra.mxu0 %v167
        %v2189 = vpop.f32.mrf.mxu0
        %v2190 = vadd.f32 0.0, %v2189
        %v2191 = vpop.f32.mrf.mxu0
        %v2192 = vadd.f32 0.0, %v2191
        %v2193 = vpop.f32.mrf.mxu0
        %v2194 = vpop.f32.mrf.mxu0
        %2195 = vdwg.mxu0
        %2196 = vmatprep.subr.bf16.mxu0 %v1441
        %2197 = vmatpush1.bf16.msra.mxu0 %v1440
        %2198 = vmatprep.subr.bf16.mxu0 %v1409
        %2199 = vmatpush1.bf16.msra.mxu0 %v1408
        %2200 = vmatprep.subr.bf16.mxu0 %v1377
        %2201 = vmatpush1.bf16.msra.mxu0 %v1376
        %2202 = vmatprep.subr.bf16.mxu0 %v1345
        %2203 = vmatpush1.bf16.msra.mxu0 %v1344
        %2204 = vmatprep.subr.bf16.mxu0 %v1313
        %2205 = vmatpush1.bf16.msra.mxu0 %v1312
        %2206 = vmatprep.subr.bf16.mxu0 %v1281
        %2207 = vmatpush1.bf16.msra.mxu0 %v1280
        %2208 = vmatprep.subr.bf16.mxu0 %v1249
        %2209 = vmatpush1.bf16.msra.mxu0 %v1248
        %2210 = vmatprep.subr.bf16.mxu0 %v1217
        %2211 = vmatpush1.bf16.msra.mxu0 %v1216
        %2212 = vmatprep.subr.bf16.mxu0 0
        %2213 = vmatpush2.bf16.msra.mxu0 0
        %2214 = vmatprep.subr.bf16.mxu0 0
        %2215 = vmatpush2.bf16.msra.mxu0 0
        %2216 = vmatprep.subr.bf16.mxu0 0
        %2217 = vmatpush2.bf16.msra.mxu0 0
        %2218 = vmatprep.subr.bf16.mxu0 0
        %2219 = vmatpush2.bf16.msra.mxu0 0
        %2220 = vmatprep.subr.bf16.mxu0 0
        %2221 = vmatpush2.bf16.msra.mxu0 0
        %2222 = vmatprep.subr.bf16.mxu0 0
        %2223 = vmatpush2.bf16.msra.mxu0 0
        %2224 = vmatprep.subr.bf16.mxu0 0
        %2225 = vmatpush2.bf16.msra.mxu0 0
        %2226 = vmatprep.subr.bf16.mxu0 0
        %2227 = vmatpush2.bf16.msra.mxu0 0
        %2228 = vmatprep.mubr.bf16.mxu0 0
        %2229 = vmatmul.mubr.bf16.gmra.mxu0 %v167
        %v2230 = vpop.f32.mrf.mxu0
        %v2231 = vadd.f32 0.0, %v2230
        %v2232 = vpop.f32.mrf.mxu0
        %v2233 = vadd.f32 0.0, %v2232
        %v2234 = vpop.f32.mrf.mxu0
        %v2235 = vpop.f32.mrf.mxu0
        %2236 = vdwg.mxu0
        %2237 = vmatprep.subr.bf16.mxu0 %v1443
        %2238 = vmatpush1.bf16.msra.mxu0 %v1442
        %2239 = vmatprep.subr.bf16.mxu0 %v1411
        %2240 = vmatpush1.bf16.msra.mxu0 %v1410
        %2241 = vmatprep.subr.bf16.mxu0 %v1379
        %2242 = vmatpush1.bf16.msra.mxu0 %v1378
        %2243 = vmatprep.subr.bf16.mxu0 %v1347
        %2244 = vmatpush1.bf16.msra.mxu0 %v1346
        %2245 = vmatprep.subr.bf16.mxu0 %v1315
        %2246 = vmatpush1.bf16.msra.mxu0 %v1314
        %2247 = vmatprep.subr.bf16.mxu0 %v1283
        %2248 = vmatpush1.bf16.msra.mxu0 %v1282
        %2249 = vmatprep.subr.bf16.mxu0 %v1251
        %2250 = vmatpush1.bf16.msra.mxu0 %v1250
        %2251 = vmatprep.subr.bf16.mxu0 %v1219
        %2252 = vmatpush1.bf16.msra.mxu0 %v1218
        %2253 = vmatprep.subr.bf16.mxu0 0
        %2254 = vmatpush2.bf16.msra.mxu0 0
        %2255 = vmatprep.subr.bf16.mxu0 0
        %2256 = vmatpush2.bf16.msra.mxu0 0
        %2257 = vmatprep.subr.bf16.mxu0 0
        %2258 = vmatpush2.bf16.msra.mxu0 0
        %2259 = vmatprep.subr.bf16.mxu0 0
        %2260 = vmatpush2.bf16.msra.mxu0 0
        %2261 = vmatprep.subr.bf16.mxu0 0
        %2262 = vmatpush2.bf16.msra.mxu0 0
        %2263 = vmatprep.subr.bf16.mxu0 0
        %2264 = vmatpush2.bf16.msra.mxu0 0
        %2265 = vmatprep.subr.bf16.mxu0 0
        %2266 = vmatpush2.bf16.msra.mxu0 0
        %2267 = vmatprep.subr.bf16.mxu0 0
        %2268 = vmatpush2.bf16.msra.mxu0 0
        %2269 = vmatprep.mubr.bf16.mxu0 0
        %2270 = vmatmul.mubr.bf16.gmra.mxu0 %v167
        %v2271 = vpop.f32.mrf.mxu0
        %v2272 = vadd.f32 0.0, %v2271
        %v2273 = vpop.f32.mrf.mxu0
        %v2274 = vadd.f32 0.0, %v2273
        %v2275 = vpop.f32.mrf.mxu0
        %v2276 = vpop.f32.mrf.mxu0
        %2277 = vdwg.mxu0
        %2278 = vmatprep.subr.bf16.mxu0 %v1445
        %2279 = vmatpush1.bf16.msra.mxu0 %v1444
        %2280 = vmatprep.subr.bf16.mxu0 %v1413
        %2281 = vmatpush1.bf16.msra.mxu0 %v1412
        %2282 = vmatprep.subr.bf16.mxu0 %v1381
        %2283 = vmatpush1.bf16.msra.mxu0 %v1380
        %2284 = vmatprep.subr.bf16.mxu0 %v1349
        %2285 = vmatpush1.bf16.msra.mxu0 %v1348
        %2286 = vmatprep.subr.bf16.mxu0 %v1317
        %2287 = vmatpush1.bf16.msra.mxu0 %v1316
        %2288 = vmatprep.subr.bf16.mxu0 %v1285
        %2289 = vmatpush1.bf16.msra.mxu0 %v1284
        %2290 = vmatprep.subr.bf16.mxu0 %v1253
        %2291 = vmatpush1.bf16.msra.mxu0 %v1252
        %2292 = vmatprep.subr.bf16.mxu0 %v1221
        %2293 = vmatpush1.bf16.msra.mxu0 %v1220
        %2294 = vmatprep.subr.bf16.mxu0 0
        %2295 = vmatpush2.bf16.msra.mxu0 0
        %2296 = vmatprep.subr.bf16.mxu0 0
        %2297 = vmatpush2.bf16.msra.mxu0 0
        %2298 = vmatprep.subr.bf16.mxu0 0
        %2299 = vmatpush2.bf16.msra.mxu0 0
        %2300 = vmatprep.subr.bf16.mxu0 0
        %2301 = vmatpush2.bf16.msra.mxu0 0
        %2302 = vmatprep.subr.bf16.mxu0 0
        %2303 = vmatpush2.bf16.msra.mxu0 0
        %2304 = vmatprep.subr.bf16.mxu0 0
        %2305 = vmatpush2.bf16.msra.mxu0 0
        %2306 = vmatprep.subr.bf16.mxu0 0
        %2307 = vmatpush2.bf16.msra.mxu0 0
        %2308 = vmatprep.subr.bf16.mxu0 0
        %2309 = vmatpush2.bf16.msra.mxu0 0
        %2310 = vmatprep.mubr.bf16.mxu0 0
        %2311 = vmatmul.mubr.bf16.gmra.mxu0 %v167
        %v2312 = vpop.f32.mrf.mxu0
        %v2313 = vadd.f32 0.0, %v2312
        %v2314 = vpop.f32.mrf.mxu0
        %v2315 = vadd.f32 0.0, %v2314
        %v2316 = vpop.f32.mrf.mxu0
        %v2317 = vpop.f32.mrf.mxu0
        %2318 = vdwg.mxu0
        %2319 = vmatprep.subr.bf16.mxu0 %v1447
        %2320 = vmatpush1.bf16.msra.mxu0 %v1446
        %2321 = vmatprep.subr.bf16.mxu0 %v1415
        %2322 = vmatpush1.bf16.msra.mxu0 %v1414
        %2323 = vmatprep.subr.bf16.mxu0 %v1383
        %2324 = vmatpush1.bf16.msra.mxu0 %v1382
        %2325 = vmatprep.subr.bf16.mxu0 %v1351
        %2326 = vmatpush1.bf16.msra.mxu0 %v1350
        %2327 = vmatprep.subr.bf16.mxu0 %v1319
        %2328 = vmatpush1.bf16.msra.mxu0 %v1318
        %2329 = vmatprep.subr.bf16.mxu0 %v1287
        %2330 = vmatpush1.bf16.msra.mxu0 %v1286
        %2331 = vmatprep.subr.bf16.mxu0 %v1255
        %2332 = vmatpush1.bf16.msra.mxu0 %v1254
        %2333 = vmatprep.subr.bf16.mxu0 %v1223
        %2334 = vmatpush1.bf16.msra.mxu0 %v1222
        %2335 = vmatprep.subr.bf16.mxu0 0
        %2336 = vmatpush2.bf16.msra.mxu0 0
        %2337 = vmatprep.subr.bf16.mxu0 0
        %2338 = vmatpush2.bf16.msra.mxu0 0
        %2339 = vmatprep.subr.bf16.mxu0 0
        %2340 = vmatpush2.bf16.msra.mxu0 0
        %2341 = vmatprep.subr.bf16.mxu0 0
        %2342 = vmatpush2.bf16.msra.mxu0 0
        %2343 = vmatprep.subr.bf16.mxu0 0
        %2344 = vmatpush2.bf16.msra.mxu0 0
        %2345 = vmatprep.subr.bf16.mxu0 0
        %2346 = vmatpush2.bf16.msra.mxu0 0
        %2347 = vmatprep.subr.bf16.mxu0 0
        %2348 = vmatpush2.bf16.msra.mxu0 0
        %2349 = vmatprep.subr.bf16.mxu0 0
        %2350 = vmatpush2.bf16.msra.mxu0 0
        %2351 = vmatprep.mubr.bf16.mxu0 0
        %2352 = vmatmul.mubr.bf16.gmra.mxu0 %v167
        %v2353 = vpop.f32.mrf.mxu0
        %v2354 = vadd.f32 0.0, %v2353
        %v2355 = vpop.f32.mrf.mxu0
        %v2356 = vadd.f32 0.0, %v2355
        %v2357 = vpop.f32.mrf.mxu0
        %v2358 = vpop.f32.mrf.mxu0
        %2359 = vdwg.mxu0
        %v2392 = vcombine.low %v1739, %v1741
        %v2393 = vcombine.low %v1780, %v1782
        %v2395 = vunpack.c.l.s4 1983009808
        %v2396 = vunpack.c.0.s8 %v2395
        %v2397 = vlaneseq
        %v2398 = vshrl.u32 %v2397, 7
        %v2399 = vsub.s32 %v2396, %v2398
        %v2400 = vrot.slane %v2392, %v2399
        %v2402 = vunpack.c.l.s4 1983009808
        %v2403 = vunpack.c.0.s8 %v2402
        %v2404 = vlaneseq
        %v2405 = vshrl.u32 %v2404, 7
        %v2406 = vsub.s32 %v2403, %v2405
        %v2407 = vrot.slane %v2393, %v2406
        %v2408 = vcombine.low %v2400, %v2407
        %v2409 = vcombine.low %v1821, %v1823
        %v2410 = vcombine.low %v1862, %v1864
        %v2412 = vunpack.c.l.s4 1983009808
        %v2413 = vunpack.c.0.s8 %v2412
        %v2414 = vlaneseq
        %v2415 = vshrl.u32 %v2414, 7
        %v2416 = vsub.s32 %v2413, %v2415
        %v2417 = vrot.slane %v2409, %v2416
        %v2419 = vunpack.c.l.s4 1983009808
        %v2420 = vunpack.c.0.s8 %v2419
        %v2421 = vlaneseq
        %v2422 = vshrl.u32 %v2421, 7
        %v2423 = vsub.s32 %v2420, %v2422
        %v2424 = vrot.slane %v2410, %v2423
        %v2425 = vcombine.low %v2417, %v2424
        %v2426 = vcombine.low %v1903, %v1905
        %v2427 = vcombine.low %v1944, %v1946
        %v2429 = vunpack.c.l.s4 1983009808
        %v2430 = vunpack.c.0.s8 %v2429
        %v2431 = vlaneseq
        %v2432 = vshrl.u32 %v2431, 7
        %v2433 = vsub.s32 %v2430, %v2432
        %v2434 = vrot.slane %v2426, %v2433
        %v2436 = vunpack.c.l.s4 1983009808
        %v2437 = vunpack.c.0.s8 %v2436
        %v2438 = vlaneseq
        %v2439 = vshrl.u32 %v2438, 7
        %v2440 = vsub.s32 %v2437, %v2439
        %v2441 = vrot.slane %v2427, %v2440
        %v2442 = vcombine.low %v2434, %v2441
        %v2443 = vcombine.low %v1985, %v1987
        %v2444 = vcombine.low %v2026, %v2028
        %v2446 = vunpack.c.l.s4 1983009808
        %v2447 = vunpack.c.0.s8 %v2446
        %v2448 = vlaneseq
        %v2449 = vshrl.u32 %v2448, 7
        %v2450 = vsub.s32 %v2447, %v2449
        %v2451 = vrot.slane %v2443, %v2450
        %v2453 = vunpack.c.l.s4 1983009808
        %v2454 = vunpack.c.0.s8 %v2453
        %v2455 = vlaneseq
        %v2456 = vshrl.u32 %v2455, 7
        %v2457 = vsub.s32 %v2454, %v2456
        %v2458 = vrot.slane %v2444, %v2457
        %v2459 = vcombine.low %v2451, %v2458
        %v2460 = vcombine.low %v2067, %v2069
        %v2461 = vcombine.low %v2108, %v2110
        %v2463 = vunpack.c.l.s4 1983009808
        %v2464 = vunpack.c.0.s8 %v2463
        %v2465 = vlaneseq
        %v2466 = vshrl.u32 %v2465, 7
        %v2467 = vsub.s32 %v2464, %v2466
        %v2468 = vrot.slane %v2460, %v2467
        %v2470 = vunpack.c.l.s4 1983009808
        %v2471 = vunpack.c.0.s8 %v2470
        %v2472 = vlaneseq
        %v2473 = vshrl.u32 %v2472, 7
        %v2474 = vsub.s32 %v2471, %v2473
        %v2475 = vrot.slane %v2461, %v2474
        %v2476 = vcombine.low %v2468, %v2475
        %v2477 = vcombine.low %v2149, %v2151
        %v2478 = vcombine.low %v2190, %v2192
        %v2480 = vunpack.c.l.s4 1983009808
        %v2481 = vunpack.c.0.s8 %v2480
        %v2482 = vlaneseq
        %v2483 = vshrl.u32 %v2482, 7
        %v2484 = vsub.s32 %v2481, %v2483
        %v2485 = vrot.slane %v2477, %v2484
        %v2487 = vunpack.c.l.s4 1983009808
        %v2488 = vunpack.c.0.s8 %v2487
        %v2489 = vlaneseq
        %v2490 = vshrl.u32 %v2489, 7
        %v2491 = vsub.s32 %v2488, %v2490
        %v2492 = vrot.slane %v2478, %v2491
        %v2493 = vcombine.low %v2485, %v2492
        %v2494 = vcombine.low %v2231, %v2233
        %v2495 = vcombine.low %v2272, %v2274
        %v2497 = vunpack.c.l.s4 1983009808
        %v2498 = vunpack.c.0.s8 %v2497
        %v2499 = vlaneseq
        %v2500 = vshrl.u32 %v2499, 7
        %v2501 = vsub.s32 %v2498, %v2500
        %v2502 = vrot.slane %v2494, %v2501
        %v2504 = vunpack.c.l.s4 1983009808
        %v2505 = vunpack.c.0.s8 %v2504
        %v2506 = vlaneseq
        %v2507 = vshrl.u32 %v2506, 7
        %v2508 = vsub.s32 %v2505, %v2507
        %v2509 = vrot.slane %v2495, %v2508
        %v2510 = vcombine.low %v2502, %v2509
        %v2511 = vcombine.low %v2313, %v2315
        %v2512 = vcombine.low %v2354, %v2356
        %v2514 = vunpack.c.l.s4 1983009808
        %v2515 = vunpack.c.0.s8 %v2514
        %v2516 = vlaneseq
        %v2517 = vshrl.u32 %v2516, 7
        %v2518 = vsub.s32 %v2515, %v2517
        %v2519 = vrot.slane %v2511, %v2518
        %v2521 = vunpack.c.l.s4 1983009808
        %v2522 = vunpack.c.0.s8 %v2521
        %v2523 = vlaneseq
        %v2524 = vshrl.u32 %v2523, 7
        %v2525 = vsub.s32 %v2522, %v2524
        %v2526 = vrot.slane %v2512, %v2525
        %v2527 = vcombine.low %v2519, %v2526
        %2536 = vst [vmem:[%s164] sm:$0xff] %v2408
        %2537 = vst [vmem:[%s164 + $0x8] sm:$0xff] %v2425
        %2538 = vst [vmem:[%s164 + $0x10] sm:$0xff] %v2442
        %2539 = vst [vmem:[%s164 + $0x18] sm:$0xff] %v2459
        %2540 = vst [vmem:[%s164 + $0x20] sm:$0xff] %v2476
        %2541 = vst [vmem:[%s164 + $0x28] sm:$0xff] %v2493
        %2542 = vst [vmem:[%s164 + $0x30] sm:$0xff] %v2510
        %2543 = vst [vmem:[%s164 + $0x38] sm:$0xff] %v2527
        %s2544 = smul.u32 32, %s16
        %p2545 = scmp.lt.s32.totalorder %s2544, 63
        %s2546 = scalar_select %p2545, %s2544, 63
        %s2547 = smul.addr %s2546, 2
        %s2548 = scalar_lea.vmem %s2, %s2547
        // Predicated region
        $region33: #{seed_generator_forward.2} parent=27 // pred_check
          %p2549 = pneg %p81
        $region34: #{seed_generator_forward.2} parent=27 // pred_check_branch
          %2551 = sbr.rel (%p2549) target = $region36
        $region35: #{seed_generator_forward.2} parent=27 // pred_region
          %s2552 = smul.u32 32, %s16
        $region36: #{seed_generator_forward.2} parent=27 // pred_fallthru
          _
      $region28: #{seed_generator_forward.2} parent=5 // pred_fallthru
        _
      %p2553 = scmp.le.s32.totalorder 2, %s11
      // Predicated region
      $region37: #{seed_generator_forward.2} parent=5 // pred_check
        %p2554 = pneg %p2553
      $region38: #{seed_generator_forward.2} parent=5 // pred_check_branch
        %2556 = sbr.rel (%p2554) target = $region40
      $region39: #{seed_generator_forward.2} parent=5 // pred_region
        %s2557 = ssub.s32 %s11, 2
        // Predicated region
        $region41: #{seed_generator_forward.2} parent=39 // pred_check
          %p2558 = pneg %p87
        $region42: #{seed_generator_forward.2} parent=39 // pred_check_branch
          %2560 = sbr.rel (%p2558) target = $region44
        $region43: #{seed_generator_forward.2} parent=39 // pred_region
          %s2561 = smul.u32 32, %s17
          %p2562 = scmp.lt.s32.totalorder %s2561, 63
          %s2563 = scalar_select %p2562, %s2561, 63
          %s2564 = smul.addr %s2563, 2
          %s2565 = scalar_lea.vmem %s2, %s2564
        $region44: #{seed_generator_forward.2} parent=39 // pred_fallthru
          _
      $region40: #{seed_generator_forward.2} parent=5 // pred_fallthru
        _
    $region6: #{seed_generator_forward.2} parent=1 // loop_footer
      %s15 = sadd.s32 1, %s11
    $region7: #{seed_generator_forward.2} parent=1 // loop_footer_branch
      %10 = sbr.rel target = $region3
    $region8: #{seed_generator_forward.2} parent=1 // loop_exit
      _
    %2566 = vsyncpa [#allocation3], 1
    %s2567 = scalar_lea.sflag [#allocation3], 1
    %2568 = vsyncpa %s2567, 1

</llo_original>
